<compile_context>
chip_gen: v6e
topology: v6e:2x2x1
jax: 0.10.0
libtpu: 0.0.40
codegen_flags: <defaults>
</compile_context>

<pallas_src>
import functools

import jax
import jax.numpy as jnp
from jax import lax
from jax.experimental import pallas as pl
from jax.experimental.pallas import tpu as pltpu

KSIZE = 7
PAD = (KSIZE - 1) // 2


def cbam_kernel(x_ref, w1_ref, b1_ref, w2t_ref, b2t_ref, cw_ref, bn_ref, o_ref,
                *, width):
    """One grid step: `batch_tile` images, each laid out as (C, H*W) lane-major."""
    bt, C, hw = x_ref.shape
    Cr = w1_ref.shape[1]
    inv_hw = 1.0 / float(hw)
    inv_c = 1.0 / float(C)

    # ---- hoisted, grid-step-invariant values --------------------------------
    w1 = w1_ref[...].astype(jnp.float32)        # (C, Cr)  torch Linear1 (in, out)
    b1 = b1_ref[...].astype(jnp.float32)        # (1, Cr)
    w2t = w2t_ref[...].astype(jnp.float32)      # (C, Cr)  torch Linear2 transposed
    b2t = b2t_ref[...].astype(jnp.float32)      # (C, 1)

    # 7x7 conv taps (SMEM scalars) hoisted ahead of the unrolled loops.
    w_max = [[cw_ref[ky * KSIZE + kx] for kx in range(KSIZE)]
             for ky in range(KSIZE)]
    w_mean = [[cw_ref[KSIZE * KSIZE + ky * KSIZE + kx] for kx in range(KSIZE)]
              for ky in range(KSIZE)]
    bn_scale = bn_ref[0]
    bn_bias = bn_ref[1]

    # Column-validity masks (in output coordinates).  Vertical out-of-range
    # taps are handled for free by the flat zero padding below.
    pos = lax.broadcasted_iota(jnp.int32, (1, hw), 1)
    if width & (width - 1) == 0:
        col = jnp.bitwise_and(pos, width - 1)
    else:
        col = pos % width
    col_ok = [(col >= PAD - kx) & (col <= (width - 1) + PAD - kx)
              for kx in range(KSIZE)]

    # Flat lane padding: covers the largest |dy*W + dx| shift and keeps the
    # concat boundaries 128-lane aligned.
    pad_lanes = max(128, ((PAD * (width + 1) + 127) // 128) * 128)
    zrow = jnp.zeros((1, pad_lanes), jnp.float32)

    sel_avg = lax.broadcasted_iota(jnp.int32, (C, 2), 1) == 0

    for i in range(bt):
        xf = x_ref[i].astype(jnp.float32)                       # (C, hw)

        # ---------------- ChannelGate ----------------
        avg_p = jnp.sum(xf, axis=1, keepdims=True) * inv_hw     # (C, 1)
        max_p = jnp.max(xf, axis=1, keepdims=True)              # (C, 1)
        pools = jnp.where(sel_avg, avg_p, max_p)                # (C, 2) = [avg | max]

        # Fused 2-layer MLP over both pooled vectors at once (exact f32).
        # TODO(synk): at production channel counts swap this unrolled form for
        # jnp.dot on the stacked pools so layers 1/2 run on the MXU.
        att = b2t + b2t                                         # (C, 1): +b2 per branch
        for r in range(Cr):
            t = jnp.sum(w1[:, r:r + 1] * pools, axis=0, keepdims=True)   # (1, 2)
            t = jnp.maximum(t + b1[:, r:r + 1], 0.0)
            hsum = t[:, 0:1] + t[:, 1:2]                        # (1, 1)
            att = att + w2t[:, r:r + 1] * hsum                  # (C, 1)
        ch_scale = jax.nn.sigmoid(att)                          # (C, 1)
        xc = xf * ch_scale                                      # (C, hw)

        # ---------------- SpatialGate ----------------
        cmax = jnp.max(xc, axis=0, keepdims=True)               # (1, hw)  torch max
        cmean = jnp.sum(xc, axis=0, keepdims=True) * inv_c      # (1, hw)  torch mean
        pmax = jnp.concatenate([zrow, cmax, zrow], axis=1)      # (1, hw + 2*pad)
        pmean = jnp.concatenate([zrow, cmean, zrow], axis=1)

        conv = jnp.zeros((1, hw), jnp.float32)
        for kx in range(KSIZE):                                 # unrolled 7x7, 2 in-ch
            acc = jnp.zeros((1, hw), jnp.float32)
            for ky in range(KSIZE):
                s0 = pad_lanes + (ky - PAD) * width + (kx - PAD)
                acc = (acc
                       + w_max[ky][kx] * pmax[:, s0:s0 + hw]
                       + w_mean[ky][kx] * pmean[:, s0:s0 + hw])
            conv = conv + jnp.where(col_ok[kx], acc, 0.0)

        # eval-mode BatchNorm2d folded to scale/bias (single output channel)
        sp_scale = jax.nn.sigmoid(conv * bn_scale + bn_bias)    # (1, hw)

        o_ref[i] = (xc * sp_scale).astype(o_ref.dtype)


def cbam_forward(x, params, *, batch_tile=1):
    """CBAM forward.  x: (B, C, H, W) f32 or bf16."""
    w1, b1, w2, b2, cw, bn = params
    B, C, H, W = x.shape
    HW = H * W
    Cr = w1.shape[1]
    if B % batch_tile != 0:
        raise ValueError("batch_tile must divide B")
    nb = B // batch_tile

    # Lane-dense layout: flatten spatial dims outside the kernel so the minor
    # dim is a multiple of 128 (unmasked vector stores).
    xf = x.reshape(B, C, HW)
    # Pre-transpose layer-2 weight / bias so the kernel needs no transposes.
    w2t = w2.T                      # (C, Cr)
    b2t = b2.reshape(C, 1)          # (C, 1)

    cost = pl.CostEstimate(
        flops=int(B * HW * (6 * C + 4 * KSIZE * KSIZE + 8)),
        transcendentals=int(B * (C + 2 * HW)),
        bytes_accessed=int(2 * B * C * HW * x.dtype.itemsize),
    )

    # TODO(synk): for production feature-map sizes (large C*H*W) re-budget VMEM
    # for v7x's 64 MiB (vmem_limit_bytes / two-pass tiling over H); the toy
    # shapes here fit comfortably with double buffering.
    out = pl.pallas_call(
        functools.partial(cbam_kernel, width=W),
        out_shape=jax.ShapeDtypeStruct((B, C, HW), x.dtype),
        grid_spec=pltpu.PrefetchScalarGridSpec(
            num_scalar_prefetch=0,
            grid=(nb,),
            in_specs=[
                pl.BlockSpec((batch_tile, C, HW), lambda b: (b, 0, 0)),
                pl.BlockSpec((C, Cr), lambda b: (0, 0)),
                pl.BlockSpec((1, Cr), lambda b: (0, 0)),
                pl.BlockSpec((C, Cr), lambda b: (0, 0)),
                pl.BlockSpec((C, 1), lambda b: (0, 0)),
                pl.BlockSpec(memory_space=pltpu.MemorySpace.SMEM),  # conv taps
                pl.BlockSpec(memory_space=pltpu.MemorySpace.SMEM),  # BN scale/bias
            ],
            out_specs=pl.BlockSpec((batch_tile, C, HW), lambda b: (b, 0, 0)),
        ),
        compiler_params=pltpu.CompilerParams(
            dimension_semantics=("parallel",),
        ),
        cost_estimate=cost,
    )(xf, w1, b1, w2t, b2t, cw, bn)
    return out.reshape(B, C, H, W)


def cbam_ref(x, params):
    """Pure-JAX reference (mirrors the PyTorch forward, BN in eval mode)."""
    w1, b1, w2, b2, cw, bn = params
    avg = x.mean(axis=(2, 3))
    mx = x.max(axis=(2, 3))

    def mlp(p):
        return jnp.maximum(p @ w1 + b1, 0.0) @ w2 + b2

    att = mlp(avg) + mlp(mx)
    xc = x * jax.nn.sigmoid(att)[:, :, None, None]
    cp = jnp.stack([xc.max(axis=1), xc.mean(axis=1)], axis=1)     # (B,2,H,W)
    conv = lax.conv_general_dilated(
        cp, cw.reshape(1, 2, KSIZE, KSIZE), (1, 1), ((PAD, PAD), (PAD, PAD)),
        dimension_numbers=("NCHW", "OIHW", "NCHW"))
    conv = conv * bn[0] + bn[1]
    return xc * jax.nn.sigmoid(conv)


if __name__ == "__main__":
    B, C, H, W = 2, 32, 16, 16
    reduction_ratio = 16
    Cr = C // reduction_ratio

    key = jax.random.PRNGKey(0)
    k1, k2, k3, k4, k5, kx = jax.random.split(key, 6)
    w1 = jax.random.normal(k1, (C, Cr), jnp.float32) * 0.1    # Linear1 (in, out)
    b1 = jax.random.normal(k2, (1, Cr), jnp.float32) * 0.1
    w2 = jax.random.normal(k3, (Cr, C), jnp.float32) * 0.1    # Linear2 (in, out)
    b2 = jax.random.normal(k4, (1, C), jnp.float32) * 0.1
    cw = jax.random.normal(k5, (2 * KSIZE * KSIZE,), jnp.float32) * 0.1  # (1,2,7,7) flat

    # BatchNorm2d(1), eval mode, PyTorch-default running stats, folded to scale/bias.
    # TODO(synk): training-mode batch statistics are not reproduced here.
    eps = 1e-5
    gamma, beta, rmean, rvar = 1.0, 0.0, 0.0, 1.0
    bn_s = gamma / (rvar + eps) ** 0.5
    bn = jnp.array([bn_s, beta - rmean * bn_s], jnp.float32)

    params = (w1, b1, w2, b2, cw, bn)
    x = jax.random.normal(kx, (B, C, H, W), jnp.float32)

    ref = jax.block_until_ready(cbam_ref(x, params))

    # 1) one image per grid step: 2 parallel steps (feeds both v7x TensorCores).
    out = jax.block_until_ready(cbam_forward(x, params, batch_tile=1))
    assert out.shape == (B, C, H, W) and out.dtype == jnp.float32
    assert jnp.allclose(out, ref, rtol=1e-4, atol=1e-4), "mismatch (batch_tile=1)"

    # 2) whole batch per grid step: amortizes per-step overhead on v5e/v6e.
    out2 = jax.block_until_ready(cbam_forward(x, params, batch_tile=B))
    assert jnp.allclose(out2, ref, rtol=1e-4, atol=1e-4), "mismatch (batch_tile=B)"

    # 3) bf16 I/O (kernel is HBM-bandwidth bound; accumulation stays f32 inside).
    out_bf = jax.block_until_ready(
        cbam_forward(x.astype(jnp.bfloat16), params, batch_tile=1))
    assert out_bf.shape == (B, C, H, W) and out_bf.dtype == jnp.bfloat16
    assert jnp.allclose(out_bf.astype(jnp.float32), ref, rtol=0.1, atol=0.1), \
        "mismatch (bf16 I/O)"

    print("KERNEL_OK")
</pallas_src>

<mosaic_0001>
module attributes {stable_mosaic.version = 11 : i64} {
  func.func @cbam_kernel(%arg0: i32, %arg1: memref<1x32x256xf32, #tpu.memory_space<vmem>>, %arg2: memref<32x2xf32, #tpu.memory_space<vmem>>, %arg3: memref<1x2xf32, #tpu.memory_space<vmem>>, %arg4: memref<32x2xf32, #tpu.memory_space<vmem>>, %arg5: memref<32x1xf32, #tpu.memory_space<vmem>>, %arg6: memref<98xf32, #tpu.memory_space<smem>>, %arg7: memref<2xf32, #tpu.memory_space<smem>>, %arg8: memref<1x32x256xf32, #tpu.memory_space<vmem>>) attributes {dimension_semantics = [#tpu.dimension_semantics<parallel>], iteration_bounds = array<i64: 2>, scalar_prefetch = 0 : i64, scratch_operands = 0 : i64, tpu.core_type = #tpu.core_type<tc>, window_params = [{transform_indices = @transform_0, window_bounds = array<i64: 1, 32, 256>}, {pipeline_mode = #tpu.pipeline_mode<synchronous>, transform_indices = @transform_1, window_bounds = array<i64: 32, 2>}, {pipeline_mode = #tpu.pipeline_mode<synchronous>, transform_indices = @transform_2, window_bounds = array<i64: 1, 2>}, {pipeline_mode = #tpu.pipeline_mode<synchronous>, transform_indices = @transform_3, window_bounds = array<i64: 32, 2>}, {pipeline_mode = #tpu.pipeline_mode<synchronous>, transform_indices = @transform_4, window_bounds = array<i64: 32, 1>}, {transform_indices = @transform_5, window_bounds = array<i64: 98>}, {transform_indices = @transform_6, window_bounds = array<i64: 2>}, {transform_indices = @transform_7, window_bounds = array<i64: 1, 32, 256>}]} {
    %c0 = arith.constant 0 : index
    %c0_0 = arith.constant 0 : index
    %0 = vector.load %arg2[%c0, %c0_0] : memref<32x2xf32, #tpu.memory_space<vmem>>, vector<32x2xf32>
    %c0_1 = arith.constant 0 : index
    %c0_2 = arith.constant 0 : index
    %1 = vector.load %arg3[%c0_1, %c0_2] : memref<1x2xf32, #tpu.memory_space<vmem>>, vector<1x2xf32>
    %c0_3 = arith.constant 0 : index
    %c0_4 = arith.constant 0 : index
    %2 = vector.load %arg4[%c0_3, %c0_4] : memref<32x2xf32, #tpu.memory_space<vmem>>, vector<32x2xf32>
    %c0_5 = arith.constant 0 : index
    %c0_6 = arith.constant 0 : index
    %3 = vector.load %arg5[%c0_5, %c0_6] : memref<32x1xf32, #tpu.memory_space<vmem>>, vector<32x1xf32>
    %c0_7 = arith.constant 0 : index
    %4 = memref.load %arg6[%c0_7] : memref<98xf32, #tpu.memory_space<smem>>
    %c1 = arith.constant 1 : index
    %5 = memref.load %arg6[%c1] : memref<98xf32, #tpu.memory_space<smem>>
    %c2 = arith.constant 2 : index
    %6 = memref.load %arg6[%c2] : memref<98xf32, #tpu.memory_space<smem>>
    %c3 = arith.constant 3 : index
    %7 = memref.load %arg6[%c3] : memref<98xf32, #tpu.memory_space<smem>>
    %c4 = arith.constant 4 : index
    %8 = memref.load %arg6[%c4] : memref<98xf32, #tpu.memory_space<smem>>
    %c5 = arith.constant 5 : index
    %9 = memref.load %arg6[%c5] : memref<98xf32, #tpu.memory_space<smem>>
    %c6 = arith.constant 6 : index
    %10 = memref.load %arg6[%c6] : memref<98xf32, #tpu.memory_space<smem>>
    %c7 = arith.constant 7 : index
    %11 = memref.load %arg6[%c7] : memref<98xf32, #tpu.memory_space<smem>>
    %c8 = arith.constant 8 : index
    %12 = memref.load %arg6[%c8] : memref<98xf32, #tpu.memory_space<smem>>
    %c9 = arith.constant 9 : index
    %13 = memref.load %arg6[%c9] : memref<98xf32, #tpu.memory_space<smem>>
    %c10 = arith.constant 10 : index
    %14 = memref.load %arg6[%c10] : memref<98xf32, #tpu.memory_space<smem>>
    %c11 = arith.constant 11 : index
    %15 = memref.load %arg6[%c11] : memref<98xf32, #tpu.memory_space<smem>>
    %c12 = arith.constant 12 : index
    %16 = memref.load %arg6[%c12] : memref<98xf32, #tpu.memory_space<smem>>
    %c13 = arith.constant 13 : index
    %17 = memref.load %arg6[%c13] : memref<98xf32, #tpu.memory_space<smem>>
    %c14 = arith.constant 14 : index
    %18 = memref.load %arg6[%c14] : memref<98xf32, #tpu.memory_space<smem>>
    %c15 = arith.constant 15 : index
    %19 = memref.load %arg6[%c15] : memref<98xf32, #tpu.memory_space<smem>>
    %c16 = arith.constant 16 : index
    %20 = memref.load %arg6[%c16] : memref<98xf32, #tpu.memory_space<smem>>
    %c17 = arith.constant 17 : index
    %21 = memref.load %arg6[%c17] : memref<98xf32, #tpu.memory_space<smem>>
    %c18 = arith.constant 18 : index
    %22 = memref.load %arg6[%c18] : memref<98xf32, #tpu.memory_space<smem>>
    %c19 = arith.constant 19 : index
    %23 = memref.load %arg6[%c19] : memref<98xf32, #tpu.memory_space<smem>>
    %c20 = arith.constant 20 : index
    %24 = memref.load %arg6[%c20] : memref<98xf32, #tpu.memory_space<smem>>
    %c21 = arith.constant 21 : index
    %25 = memref.load %arg6[%c21] : memref<98xf32, #tpu.memory_space<smem>>
    %c22 = arith.constant 22 : index
    %26 = memref.load %arg6[%c22] : memref<98xf32, #tpu.memory_space<smem>>
    %c23 = arith.constant 23 : index
    %27 = memref.load %arg6[%c23] : memref<98xf32, #tpu.memory_space<smem>>
    %c24 = arith.constant 24 : index
    %28 = memref.load %arg6[%c24] : memref<98xf32, #tpu.memory_space<smem>>
    %c25 = arith.constant 25 : index
    %29 = memref.load %arg6[%c25] : memref<98xf32, #tpu.memory_space<smem>>
    %c26 = arith.constant 26 : index
    %30 = memref.load %arg6[%c26] : memref<98xf32, #tpu.memory_space<smem>>
    %c27 = arith.constant 27 : index
    %31 = memref.load %arg6[%c27] : memref<98xf32, #tpu.memory_space<smem>>
    %c28 = arith.constant 28 : index
    %32 = memref.load %arg6[%c28] : memref<98xf32, #tpu.memory_space<smem>>
    %c29 = arith.constant 29 : index
    %33 = memref.load %arg6[%c29] : memref<98xf32, #tpu.memory_space<smem>>
    %c30 = arith.constant 30 : index
    %34 = memref.load %arg6[%c30] : memref<98xf32, #tpu.memory_space<smem>>
    %c31 = arith.constant 31 : index
    %35 = memref.load %arg6[%c31] : memref<98xf32, #tpu.memory_space<smem>>
    %c32 = arith.constant 32 : index
    %36 = memref.load %arg6[%c32] : memref<98xf32, #tpu.memory_space<smem>>
    %c33 = arith.constant 33 : index
    %37 = memref.load %arg6[%c33] : memref<98xf32, #tpu.memory_space<smem>>
    %c34 = arith.constant 34 : index
    %38 = memref.load %arg6[%c34] : memref<98xf32, #tpu.memory_space<smem>>
    %c35 = arith.constant 35 : index
    %39 = memref.load %arg6[%c35] : memref<98xf32, #tpu.memory_space<smem>>
    %c36 = arith.constant 36 : index
    %40 = memref.load %arg6[%c36] : memref<98xf32, #tpu.memory_space<smem>>
    %c37 = arith.constant 37 : index
    %41 = memref.load %arg6[%c37] : memref<98xf32, #tpu.memory_space<smem>>
    %c38 = arith.constant 38 : index
    %42 = memref.load %arg6[%c38] : memref<98xf32, #tpu.memory_space<smem>>
    %c39 = arith.constant 39 : index
    %43 = memref.load %arg6[%c39] : memref<98xf32, #tpu.memory_space<smem>>
    %c40 = arith.constant 40 : index
    %44 = memref.load %arg6[%c40] : memref<98xf32, #tpu.memory_space<smem>>
    %c41 = arith.constant 41 : index
    %45 = memref.load %arg6[%c41] : memref<98xf32, #tpu.memory_space<smem>>
    %c42 = arith.constant 42 : index
    %46 = memref.load %arg6[%c42] : memref<98xf32, #tpu.memory_space<smem>>
    %c43 = arith.constant 43 : index
    %47 = memref.load %arg6[%c43] : memref<98xf32, #tpu.memory_space<smem>>
    %c44 = arith.constant 44 : index
    %48 = memref.load %arg6[%c44] : memref<98xf32, #tpu.memory_space<smem>>
    %c45 = arith.constant 45 : index
    %49 = memref.load %arg6[%c45] : memref<98xf32, #tpu.memory_space<smem>>
    %c46 = arith.constant 46 : index
    %50 = memref.load %arg6[%c46] : memref<98xf32, #tpu.memory_space<smem>>
    %c47 = arith.constant 47 : index
    %51 = memref.load %arg6[%c47] : memref<98xf32, #tpu.memory_space<smem>>
    %c48 = arith.constant 48 : index
    %52 = memref.load %arg6[%c48] : memref<98xf32, #tpu.memory_space<smem>>
    %c49 = arith.constant 49 : index
    %53 = memref.load %arg6[%c49] : memref<98xf32, #tpu.memory_space<smem>>
    %c50 = arith.constant 50 : index
    %54 = memref.load %arg6[%c50] : memref<98xf32, #tpu.memory_space<smem>>
    %c51 = arith.constant 51 : index
    %55 = memref.load %arg6[%c51] : memref<98xf32, #tpu.memory_space<smem>>
    %c52 = arith.constant 52 : index
    %56 = memref.load %arg6[%c52] : memref<98xf32, #tpu.memory_space<smem>>
    %c53 = arith.constant 53 : index
    %57 = memref.load %arg6[%c53] : memref<98xf32, #tpu.memory_space<smem>>
    %c54 = arith.constant 54 : index
    %58 = memref.load %arg6[%c54] : memref<98xf32, #tpu.memory_space<smem>>
    %c55 = arith.constant 55 : index
    %59 = memref.load %arg6[%c55] : memref<98xf32, #tpu.memory_space<smem>>
    %c56 = arith.constant 56 : index
    %60 = memref.load %arg6[%c56] : memref<98xf32, #tpu.memory_space<smem>>
    %c57 = arith.constant 57 : index
    %61 = memref.load %arg6[%c57] : memref<98xf32, #tpu.memory_space<smem>>
    %c58 = arith.constant 58 : index
    %62 = memref.load %arg6[%c58] : memref<98xf32, #tpu.memory_space<smem>>
    %c59 = arith.constant 59 : index
    %63 = memref.load %arg6[%c59] : memref<98xf32, #tpu.memory_space<smem>>
    %c60 = arith.constant 60 : index
    %64 = memref.load %arg6[%c60] : memref<98xf32, #tpu.memory_space<smem>>
    %c61 = arith.constant 61 : index
    %65 = memref.load %arg6[%c61] : memref<98xf32, #tpu.memory_space<smem>>
    %c62 = arith.constant 62 : index
    %66 = memref.load %arg6[%c62] : memref<98xf32, #tpu.memory_space<smem>>
    %c63 = arith.constant 63 : index
    %67 = memref.load %arg6[%c63] : memref<98xf32, #tpu.memory_space<smem>>
    %c64 = arith.constant 64 : index
    %68 = memref.load %arg6[%c64] : memref<98xf32, #tpu.memory_space<smem>>
    %c65 = arith.constant 65 : index
    %69 = memref.load %arg6[%c65] : memref<98xf32, #tpu.memory_space<smem>>
    %c66 = arith.constant 66 : index
    %70 = memref.load %arg6[%c66] : memref<98xf32, #tpu.memory_space<smem>>
    %c67 = arith.constant 67 : index
    %71 = memref.load %arg6[%c67] : memref<98xf32, #tpu.memory_space<smem>>
    %c68 = arith.constant 68 : index
    %72 = memref.load %arg6[%c68] : memref<98xf32, #tpu.memory_space<smem>>
    %c69 = arith.constant 69 : index
    %73 = memref.load %arg6[%c69] : memref<98xf32, #tpu.memory_space<smem>>
    %c70 = arith.constant 70 : index
    %74 = memref.load %arg6[%c70] : memref<98xf32, #tpu.memory_space<smem>>
    %c71 = arith.constant 71 : index
    %75 = memref.load %arg6[%c71] : memref<98xf32, #tpu.memory_space<smem>>
    %c72 = arith.constant 72 : index
    %76 = memref.load %arg6[%c72] : memref<98xf32, #tpu.memory_space<smem>>
    %c73 = arith.constant 73 : index
    %77 = memref.load %arg6[%c73] : memref<98xf32, #tpu.memory_space<smem>>
    %c74 = arith.constant 74 : index
    %78 = memref.load %arg6[%c74] : memref<98xf32, #tpu.memory_space<smem>>
    %c75 = arith.constant 75 : index
    %79 = memref.load %arg6[%c75] : memref<98xf32, #tpu.memory_space<smem>>
    %c76 = arith.constant 76 : index
    %80 = memref.load %arg6[%c76] : memref<98xf32, #tpu.memory_space<smem>>
    %c77 = arith.constant 77 : index
    %81 = memref.load %arg6[%c77] : memref<98xf32, #tpu.memory_space<smem>>
    %c78 = arith.constant 78 : index
    %82 = memref.load %arg6[%c78] : memref<98xf32, #tpu.memory_space<smem>>
    %c79 = arith.constant 79 : index
    %83 = memref.load %arg6[%c79] : memref<98xf32, #tpu.memory_space<smem>>
    %c80 = arith.constant 80 : index
    %84 = memref.load %arg6[%c80] : memref<98xf32, #tpu.memory_space<smem>>
    %c81 = arith.constant 81 : index
    %85 = memref.load %arg6[%c81] : memref<98xf32, #tpu.memory_space<smem>>
    %c82 = arith.constant 82 : index
    %86 = memref.load %arg6[%c82] : memref<98xf32, #tpu.memory_space<smem>>
    %c83 = arith.constant 83 : index
    %87 = memref.load %arg6[%c83] : memref<98xf32, #tpu.memory_space<smem>>
    %c84 = arith.constant 84 : index
    %88 = memref.load %arg6[%c84] : memref<98xf32, #tpu.memory_space<smem>>
    %c85 = arith.constant 85 : index
    %89 = memref.load %arg6[%c85] : memref<98xf32, #tpu.memory_space<smem>>
    %c86 = arith.constant 86 : index
    %90 = memref.load %arg6[%c86] : memref<98xf32, #tpu.memory_space<smem>>
    %c87 = arith.constant 87 : index
    %91 = memref.load %arg6[%c87] : memref<98xf32, #tpu.memory_space<smem>>
    %c88 = arith.constant 88 : index
    %92 = memref.load %arg6[%c88] : memref<98xf32, #tpu.memory_space<smem>>
    %c89 = arith.constant 89 : index
    %93 = memref.load %arg6[%c89] : memref<98xf32, #tpu.memory_space<smem>>
    %c90 = arith.constant 90 : index
    %94 = memref.load %arg6[%c90] : memref<98xf32, #tpu.memory_space<smem>>
    %c91 = arith.constant 91 : index
    %95 = memref.load %arg6[%c91] : memref<98xf32, #tpu.memory_space<smem>>
    %c92 = arith.constant 92 : index
    %96 = memref.load %arg6[%c92] : memref<98xf32, #tpu.memory_space<smem>>
    %c93 = arith.constant 93 : index
    %97 = memref.load %arg6[%c93] : memref<98xf32, #tpu.memory_space<smem>>
    %c94 = arith.constant 94 : index
    %98 = memref.load %arg6[%c94] : memref<98xf32, #tpu.memory_space<smem>>
    %c95 = arith.constant 95 : index
    %99 = memref.load %arg6[%c95] : memref<98xf32, #tpu.memory_space<smem>>
    %c96 = arith.constant 96 : index
    %100 = memref.load %arg6[%c96] : memref<98xf32, #tpu.memory_space<smem>>
    %c97 = arith.constant 97 : index
    %101 = memref.load %arg6[%c97] : memref<98xf32, #tpu.memory_space<smem>>
    %c0_8 = arith.constant 0 : index
    %102 = memref.load %arg7[%c0_8] : memref<2xf32, #tpu.memory_space<smem>>
    %c1_9 = arith.constant 1 : index
    %103 = memref.load %arg7[%c1_9] : memref<2xf32, #tpu.memory_space<smem>>
    %104 = tpu.iota {dimensions = array<i32: 1>} : vector<1x256xi32>
    %c15_i32 = arith.constant 15 : i32
    %105 = vector.broadcast %c15_i32 : i32 to vector<1x256xi32>
    %106 = arith.andi %104, %105 : vector<1x256xi32>
    %c3_i32 = arith.constant 3 : i32
    %107 = vector.broadcast %c3_i32 : i32 to vector<1x256xi32>
    %108 = arith.cmpi sge, %106, %107 : vector<1x256xi32>
    %c18_i32 = arith.constant 18 : i32
    %109 = vector.broadcast %c18_i32 : i32 to vector<1x256xi32>
    %110 = arith.cmpi sle, %106, %109 : vector<1x256xi32>
    %111 = arith.andi %108, %110 : vector<1x256xi1>
    %c2_i32 = arith.constant 2 : i32
    %112 = vector.broadcast %c2_i32 : i32 to vector<1x256xi32>
    %113 = arith.cmpi sge, %106, %112 : vector<1x256xi32>
    %c17_i32 = arith.constant 17 : i32
    %114 = vector.broadcast %c17_i32 : i32 to vector<1x256xi32>
    %115 = arith.cmpi sle, %106, %114 : vector<1x256xi32>
    %116 = arith.andi %113, %115 : vector<1x256xi1>
    %c1_i32 = arith.constant 1 : i32
    %117 = vector.broadcast %c1_i32 : i32 to vector<1x256xi32>
    %118 = arith.cmpi sge, %106, %117 : vector<1x256xi32>
    %c16_i32 = arith.constant 16 : i32
    %119 = vector.broadcast %c16_i32 : i32 to vector<1x256xi32>
    %120 = arith.cmpi sle, %106, %119 : vector<1x256xi32>
    %121 = arith.andi %118, %120 : vector<1x256xi1>
    %c0_i32 = arith.constant 0 : i32
    %122 = vector.broadcast %c0_i32 : i32 to vector<1x256xi32>
    %123 = arith.cmpi sge, %106, %122 : vector<1x256xi32>
    %c15_i32_10 = arith.constant 15 : i32
    %124 = vector.broadcast %c15_i32_10 : i32 to vector<1x256xi32>
    %125 = arith.cmpi sle, %106, %124 : vector<1x256xi32>
    %126 = arith.andi %123, %125 : vector<1x256xi1>
    %c-1_i32 = arith.constant -1 : i32
    %127 = vector.broadcast %c-1_i32 : i32 to vector<1x256xi32>
    %128 = arith.cmpi sge, %106, %127 : vector<1x256xi32>
    %c14_i32 = arith.constant 14 : i32
    %129 = vector.broadcast %c14_i32 : i32 to vector<1x256xi32>
    %130 = arith.cmpi sle, %106, %129 : vector<1x256xi32>
    %131 = arith.andi %128, %130 : vector<1x256xi1>
    %c-2_i32 = arith.constant -2 : i32
    %132 = vector.broadcast %c-2_i32 : i32 to vector<1x256xi32>
    %133 = arith.cmpi sge, %106, %132 : vector<1x256xi32>
    %c13_i32 = arith.constant 13 : i32
    %134 = vector.broadcast %c13_i32 : i32 to vector<1x256xi32>
    %135 = arith.cmpi sle, %106, %134 : vector<1x256xi32>
    %136 = arith.andi %133, %135 : vector<1x256xi1>
    %c-3_i32 = arith.constant -3 : i32
    %137 = vector.broadcast %c-3_i32 : i32 to vector<1x256xi32>
    %138 = arith.cmpi sge, %106, %137 : vector<1x256xi32>
    %c12_i32 = arith.constant 12 : i32
    %139 = vector.broadcast %c12_i32 : i32 to vector<1x256xi32>
    %140 = arith.cmpi sle, %106, %139 : vector<1x256xi32>
    %141 = arith.andi %138, %140 : vector<1x256xi1>
    %cst = arith.constant 0.000000e+00 : f32
    %142 = vector.broadcast %cst : f32 to vector<1x128xf32>
    %143 = tpu.iota {dimensions = array<i32: 1>} : vector<32x2xi32>
    %c0_i32_11 = arith.constant 0 : i32
    %144 = vector.broadcast %c0_i32_11 : i32 to vector<32x2xi32>
    %145 = arith.cmpi eq, %143, %144 : vector<32x2xi32>
    %c0_12 = arith.constant 0 : index
    %c0_13 = arith.constant 0 : index
    %c0_14 = arith.constant 0 : index
    %146 = vector.load %arg1[%c0_12, %c0_13, %c0_14] : memref<1x32x256xf32, #tpu.memory_space<vmem>>, vector<1x32x256xf32>
    %147 = vector.shape_cast %146 : vector<1x32x256xf32> to vector<32x256xf32>
    %cst_15 = arith.constant dense<0.000000e+00> : vector<32xf32>
    %148 = vector.multi_reduction <add>, %147, %cst_15 [1] : vector<32x256xf32> to vector<32xf32>
    %149 = vector.shape_cast %148 : vector<32xf32> to vector<32x1xf32>
    %cst_16 = arith.constant 3.906250e-03 : f32
    %150 = vector.broadcast %cst_16 : f32 to vector<32x1xf32>
    %151 = arith.mulf %149, %150 : vector<32x1xf32>
    %cst_17 = arith.constant dense<0xFF800000> : vector<32xf32>
    %152 = vector.multi_reduction <maximumf>, %147, %cst_17 [1] : vector<32x256xf32> to vector<32xf32>
    %153 = vector.shape_cast %152 : vector<32xf32> to vector<32x1xf32>
    %154 = vector.shape_cast %151 : vector<32x1xf32> to vector<32x1xf32>
    %155 = vector.broadcast %154 : vector<32x1xf32> to vector<32x2xf32>
    %156 = vector.shape_cast %153 : vector<32x1xf32> to vector<32x1xf32>
    %157 = vector.broadcast %156 : vector<32x1xf32> to vector<32x2xf32>
    %158 = arith.select %145, %155, %157 : vector<32x2xi1>, vector<32x2xf32>
    %159 = arith.addf %3, %3 : vector<32x1xf32>
    %160 = vector.extract_strided_slice %0 {offsets = [0, 0], sizes = [32, 1], strides = [1, 1]} : vector<32x2xf32> to vector<32x1xf32>
    %161 = vector.broadcast %160 : vector<32x1xf32> to vector<32x2xf32>
    %162 = arith.mulf %161, %158 : vector<32x2xf32>
    %cst_18 = arith.constant dense<0.000000e+00> : vector<2xf32>
    %163 = vector.multi_reduction <add>, %162, %cst_18 [0] : vector<32x2xf32> to vector<2xf32>
    %164 = vector.shape_cast %163 : vector<2xf32> to vector<1x2xf32>
    %165 = vector.extract_strided_slice %1 {offsets = [0, 0], sizes = [1, 1], strides = [1, 1]} : vector<1x2xf32> to vector<1x1xf32>
    %166 = vector.broadcast %165 : vector<1x1xf32> to vector<1x2xf32>
    %167 = arith.addf %164, %166 : vector<1x2xf32>
    %cst_19 = arith.constant 0.000000e+00 : f32
    %168 = vector.broadcast %cst_19 : f32 to vector<1x2xf32>
    %169 = arith.maximumf %167, %168 : vector<1x2xf32>
    %170 = vector.extract_strided_slice %169 {offsets = [0, 0], sizes = [1, 1], strides = [1, 1]} : vector<1x2xf32> to vector<1x1xf32>
    %171 = vector.extract_strided_slice %169 {offsets = [0, 1], sizes = [1, 1], strides = [1, 1]} : vector<1x2xf32> to vector<1x1xf32>
    %172 = arith.addf %170, %171 : vector<1x1xf32>
    %173 = vector.extract_strided_slice %2 {offsets = [0, 0], sizes = [32, 1], strides = [1, 1]} : vector<32x2xf32> to vector<32x1xf32>
    %174 = vector.broadcast %172 : vector<1x1xf32> to vector<32x1xf32>
    %175 = arith.mulf %173, %174 : vector<32x1xf32>
    %176 = arith.addf %159, %175 : vector<32x1xf32>
    %177 = vector.extract_strided_slice %0 {offsets = [0, 1], sizes = [32, 1], strides = [1, 1]} : vector<32x2xf32> to vector<32x1xf32>
    %178 = vector.broadcast %177 : vector<32x1xf32> to vector<32x2xf32>
    %179 = arith.mulf %178, %158 : vector<32x2xf32>
    %cst_20 = arith.constant dense<0.000000e+00> : vector<2xf32>
    %180 = vector.multi_reduction <add>, %179, %cst_20 [0] : vector<32x2xf32> to vector<2xf32>
    %181 = vector.shape_cast %180 : vector<2xf32> to vector<1x2xf32>
    %182 = vector.extract_strided_slice %1 {offsets = [0, 1], sizes = [1, 1], strides = [1, 1]} : vector<1x2xf32> to vector<1x1xf32>
    %183 = vector.broadcast %182 : vector<1x1xf32> to vector<1x2xf32>
    %184 = arith.addf %181, %183 : vector<1x2xf32>
    %cst_21 = arith.constant 0.000000e+00 : f32
    %185 = vector.broadcast %cst_21 : f32 to vector<1x2xf32>
    %186 = arith.maximumf %184, %185 : vector<1x2xf32>
    %187 = vector.extract_strided_slice %186 {offsets = [0, 0], sizes = [1, 1], strides = [1, 1]} : vector<1x2xf32> to vector<1x1xf32>
    %188 = vector.extract_strided_slice %186 {offsets = [0, 1], sizes = [1, 1], strides = [1, 1]} : vector<1x2xf32> to vector<1x1xf32>
    %189 = arith.addf %187, %188 : vector<1x1xf32>
    %190 = vector.extract_strided_slice %2 {offsets = [0, 1], sizes = [32, 1], strides = [1, 1]} : vector<32x2xf32> to vector<32x1xf32>
    %191 = vector.broadcast %189 : vector<1x1xf32> to vector<32x1xf32>
    %192 = arith.mulf %190, %191 : vector<32x1xf32>
    %193 = arith.addf %176, %192 : vector<32x1xf32>
    %194 = arith.negf %193 : vector<32x1xf32>
    %195 = math.exp %194 : vector<32x1xf32>
    %cst_22 = arith.constant 1.000000e+00 : f32
    %196 = vector.broadcast %cst_22 : f32 to vector<32x1xf32>
    %197 = arith.addf %196, %195 : vector<32x1xf32>
    %198 = arith.divf %196, %197 : vector<32x1xf32>
    %199 = vector.broadcast %198 : vector<32x1xf32> to vector<32x256xf32>
    %200 = arith.mulf %147, %199 : vector<32x256xf32>
    %cst_23 = arith.constant dense<0xFF800000> : vector<256xf32>
    %201 = vector.multi_reduction <maximumf>, %200, %cst_23 [0] : vector<32x256xf32> to vector<256xf32>
    %202 = vector.shape_cast %201 : vector<256xf32> to vector<1x256xf32>
    %cst_24 = arith.constant dense<0.000000e+00> : vector<256xf32>
    %203 = vector.multi_reduction <add>, %200, %cst_24 [0] : vector<32x256xf32> to vector<256xf32>
    %204 = vector.shape_cast %203 : vector<256xf32> to vector<1x256xf32>
    %cst_25 = arith.constant 3.125000e-02 : f32
    %205 = vector.broadcast %cst_25 : f32 to vector<1x256xf32>
    %206 = arith.mulf %204, %205 : vector<1x256xf32>
    %207 = tpu.concatenate %142, %202, %142 in 1 : vector<1x128xf32>, vector<1x256xf32>, vector<1x128xf32> -> vector<1x512xf32>
    %208 = tpu.concatenate %142, %206, %142 in 1 : vector<1x128xf32>, vector<1x256xf32>, vector<1x128xf32> -> vector<1x512xf32>
    %cst_26 = arith.constant 0.000000e+00 : f32
    %209 = vector.broadcast %cst_26 : f32 to vector<1x256xf32>
    %cst_27 = arith.constant 0.000000e+00 : f32
    %210 = vector.broadcast %cst_27 : f32 to vector<1x256xf32>
    %211 = vector.extract_strided_slice %207 {offsets = [0, 77], sizes = [1, 256], strides = [1, 1]} : vector<1x512xf32> to vector<1x256xf32>
    %212 = vector.broadcast %4 : f32 to vector<1x256xf32>
    %213 = arith.mulf %212, %211 : vector<1x256xf32>
    %214 = arith.addf %210, %213 : vector<1x256xf32>
    %215 = vector.extract_strided_slice %208 {offsets = [0, 77], sizes = [1, 256], strides = [1, 1]} : vector<1x512xf32> to vector<1x256xf32>
    %216 = vector.broadcast %53 : f32 to vector<1x256xf32>
    %217 = arith.mulf %216, %215 : vector<1x256xf32>
    %218 = arith.addf %214, %217 : vector<1x256xf32>
    %219 = vector.extract_strided_slice %207 {offsets = [0, 93], sizes = [1, 256], strides = [1, 1]} : vector<1x512xf32> to vector<1x256xf32>
    %220 = vector.broadcast %11 : f32 to vector<1x256xf32>
    %221 = arith.mulf %220, %219 : vector<1x256xf32>
    %222 = arith.addf %218, %221 : vector<1x256xf32>
    %223 = vector.extract_strided_slice %208 {offsets = [0, 93], sizes = [1, 256], strides = [1, 1]} : vector<1x512xf32> to vector<1x256xf32>
    %224 = vector.broadcast %60 : f32 to vector<1x256xf32>
    %225 = arith.mulf %224, %223 : vector<1x256xf32>
    %226 = arith.addf %222, %225 : vector<1x256xf32>
    %227 = vector.extract_strided_slice %207 {offsets = [0, 109], sizes = [1, 256], strides = [1, 1]} : vector<1x512xf32> to vector<1x256xf32>
    %228 = vector.broadcast %18 : f32 to vector<1x256xf32>
    %229 = arith.mulf %228, %227 : vector<1x256xf32>
    %230 = arith.addf %226, %229 : vector<1x256xf32>
    %231 = vector.extract_strided_slice %208 {offsets = [0, 109], sizes = [1, 256], strides = [1, 1]} : vector<1x512xf32> to vector<1x256xf32>
    %232 = vector.broadcast %67 : f32 to vector<1x256xf32>
    %233 = arith.mulf %232, %231 : vector<1x256xf32>
    %234 = arith.addf %230, %233 : vector<1x256xf32>
    %235 = vector.extract_strided_slice %207 {offsets = [0, 125], sizes = [1, 256], strides = [1, 1]} : vector<1x512xf32> to vector<1x256xf32>
    %236 = vector.broadcast %25 : f32 to vector<1x256xf32>
    %237 = arith.mulf %236, %235 : vector<1x256xf32>
    %238 = arith.addf %234, %237 : vector<1x256xf32>
    %239 = vector.extract_strided_slice %208 {offsets = [0, 125], sizes = [1, 256], strides = [1, 1]} : vector<1x512xf32> to vector<1x256xf32>
    %240 = vector.broadcast %74 : f32 to vector<1x256xf32>
    %241 = arith.mulf %240, %239 : vector<1x256xf32>
    %242 = arith.addf %238, %241 : vector<1x256xf32>
    %243 = vector.extract_strided_slice %207 {offsets = [0, 141], sizes = [1, 256], strides = [1, 1]} : vector<1x512xf32> to vector<1x256xf32>
    %244 = vector.broadcast %32 : f32 to vector<1x256xf32>
    %245 = arith.mulf %244, %243 : vector<1x256xf32>
    %246 = arith.addf %242, %245 : vector<1x256xf32>
    %247 = vector.extract_strided_slice %208 {offsets = [0, 141], sizes = [1, 256], strides = [1, 1]} : vector<1x512xf32> to vector<1x256xf32>
    %248 = vector.broadcast %81 : f32 to vector<1x256xf32>
    %249 = arith.mulf %248, %247 : vector<1x256xf32>
    %250 = arith.addf %246, %249 : vector<1x256xf32>
    %251 = vector.extract_strided_slice %207 {offsets = [0, 157], sizes = [1, 256], strides = [1, 1]} : vector<1x512xf32> to vector<1x256xf32>
    %252 = vector.broadcast %39 : f32 to vector<1x256xf32>
    %253 = arith.mulf %252, %251 : vector<1x256xf32>
    %254 = arith.addf %250, %253 : vector<1x256xf32>
    %255 = vector.extract_strided_slice %208 {offsets = [0, 157], sizes = [1, 256], strides = [1, 1]} : vector<1x512xf32> to vector<1x256xf32>
    %256 = vector.broadcast %88 : f32 to vector<1x256xf32>
    %257 = arith.mulf %256, %255 : vector<1x256xf32>
    %258 = arith.addf %254, %257 : vector<1x256xf32>
    %259 = vector.extract_strided_slice %207 {offsets = [0, 173], sizes = [1, 256], strides = [1, 1]} : vector<1x512xf32> to vector<1x256xf32>
    %260 = vector.broadcast %46 : f32 to vector<1x256xf32>
    %261 = arith.mulf %260, %259 : vector<1x256xf32>
    %262 = arith.addf %258, %261 : vector<1x256xf32>
    %263 = vector.extract_strided_slice %208 {offsets = [0, 173], sizes = [1, 256], strides = [1, 1]} : vector<1x512xf32> to vector<1x256xf32>
    %264 = vector.broadcast %95 : f32 to vector<1x256xf32>
    %265 = arith.mulf %264, %263 : vector<1x256xf32>
    %266 = arith.addf %262, %265 : vector<1x256xf32>
    %cst_28 = arith.constant 0.000000e+00 : f32
    %267 = vector.broadcast %cst_28 : f32 to vector<1x256xf32>
    %268 = arith.select %111, %266, %267 : vector<1x256xi1>, vector<1x256xf32>
    %269 = arith.addf %209, %268 : vector<1x256xf32>
    %cst_29 = arith.constant 0.000000e+00 : f32
    %270 = vector.broadcast %cst_29 : f32 to vector<1x256xf32>
    %271 = vector.extract_strided_slice %207 {offsets = [0, 78], sizes = [1, 256], strides = [1, 1]} : vector<1x512xf32> to vector<1x256xf32>
    %272 = vector.broadcast %5 : f32 to vector<1x256xf32>
    %273 = arith.mulf %272, %271 : vector<1x256xf32>
    %274 = arith.addf %270, %273 : vector<1x256xf32>
    %275 = vector.extract_strided_slice %208 {offsets = [0, 78], sizes = [1, 256], strides = [1, 1]} : vector<1x512xf32> to vector<1x256xf32>
    %276 = vector.broadcast %54 : f32 to vector<1x256xf32>
    %277 = arith.mulf %276, %275 : vector<1x256xf32>
    %278 = arith.addf %274, %277 : vector<1x256xf32>
    %279 = vector.extract_strided_slice %207 {offsets = [0, 94], sizes = [1, 256], strides = [1, 1]} : vector<1x512xf32> to vector<1x256xf32>
    %280 = vector.broadcast %12 : f32 to vector<1x256xf32>
    %281 = arith.mulf %280, %279 : vector<1x256xf32>
    %282 = arith.addf %278, %281 : vector<1x256xf32>
    %283 = vector.extract_strided_slice %208 {offsets = [0, 94], sizes = [1, 256], strides = [1, 1]} : vector<1x512xf32> to vector<1x256xf32>
    %284 = vector.broadcast %61 : f32 to vector<1x256xf32>
    %285 = arith.mulf %284, %283 : vector<1x256xf32>
    %286 = arith.addf %282, %285 : vector<1x256xf32>
    %287 = vector.extract_strided_slice %207 {offsets = [0, 110], sizes = [1, 256], strides = [1, 1]} : vector<1x512xf32> to vector<1x256xf32>
    %288 = vector.broadcast %19 : f32 to vector<1x256xf32>
    %289 = arith.mulf %288, %287 : vector<1x256xf32>
    %290 = arith.addf %286, %289 : vector<1x256xf32>
    %291 = vector.extract_strided_slice %208 {offsets = [0, 110], sizes = [1, 256], strides = [1, 1]} : vector<1x512xf32> to vector<1x256xf32>
    %292 = vector.broadcast %68 : f32 to vector<1x256xf32>
    %293 = arith.mulf %292, %291 : vector<1x256xf32>
    %294 = arith.addf %290, %293 : vector<1x256xf32>
    %295 = vector.extract_strided_slice %207 {offsets = [0, 126], sizes = [1, 256], strides = [1, 1]} : vector<1x512xf32> to vector<1x256xf32>
    %296 = vector.broadcast %26 : f32 to vector<1x256xf32>
    %297 = arith.mulf %296, %295 : vector<1x256xf32>
    %298 = arith.addf %294, %297 : vector<1x256xf32>
    %299 = vector.extract_strided_slice %208 {offsets = [0, 126], sizes = [1, 256], strides = [1, 1]} : vector<1x512xf32> to vector<1x256xf32>
    %300 = vector.broadcast %75 : f32 to vector<1x256xf32>
    %301 = arith.mulf %300, %299 : vector<1x256xf32>
    %302 = arith.addf %298, %301 : vector<1x256xf32>
    %303 = vector.extract_strided_slice %207 {offsets = [0, 142], sizes = [1, 256], strides = [1, 1]} : vector<1x512xf32> to vector<1x256xf32>
    %304 = vector.broadcast %33 : f32 to vector<1x256xf32>
    %305 = arith.mulf %304, %303 : vector<1x256xf32>
    %306 = arith.addf %302, %305 : vector<1x256xf32>
    %307 = vector.extract_strided_slice %208 {offsets = [0, 142], sizes = [1, 256], strides = [1, 1]} : vector<1x512xf32> to vector<1x256xf32>
    %308 = vector.broadcast %82 : f32 to vector<1x256xf32>
    %309 = arith.mulf %308, %307 : vector<1x256xf32>
    %310 = arith.addf %306, %309 : vector<1x256xf32>
    %311 = vector.extract_strided_slice %207 {offsets = [0, 158], sizes = [1, 256], strides = [1, 1]} : vector<1x512xf32> to vector<1x256xf32>
    %312 = vector.broadcast %40 : f32 to vector<1x256xf32>
    %313 = arith.mulf %312, %311 : vector<1x256xf32>
    %314 = arith.addf %310, %313 : vector<1x256xf32>
    %315 = vector.extract_strided_slice %208 {offsets = [0, 158], sizes = [1, 256], strides = [1, 1]} : vector<1x512xf32> to vector<1x256xf32>
    %316 = vector.broadcast %89 : f32 to vector<1x256xf32>
    %317 = arith.mulf %316, %315 : vector<1x256xf32>
    %318 = arith.addf %314, %317 : vector<1x256xf32>
    %319 = vector.extract_strided_slice %207 {offsets = [0, 174], sizes = [1, 256], strides = [1, 1]} : vector<1x512xf32> to vector<1x256xf32>
    %320 = vector.broadcast %47 : f32 to vector<1x256xf32>
    %321 = arith.mulf %320, %319 : vector<1x256xf32>
    %322 = arith.addf %318, %321 : vector<1x256xf32>
    %323 = vector.extract_strided_slice %208 {offsets = [0, 174], sizes = [1, 256], strides = [1, 1]} : vector<1x512xf32> to vector<1x256xf32>
    %324 = vector.broadcast %96 : f32 to vector<1x256xf32>
    %325 = arith.mulf %324, %323 : vector<1x256xf32>
    %326 = arith.addf %322, %325 : vector<1x256xf32>
    %cst_30 = arith.constant 0.000000e+00 : f32
    %327 = vector.broadcast %cst_30 : f32 to vector<1x256xf32>
    %328 = arith.select %116, %326, %327 : vector<1x256xi1>, vector<1x256xf32>
    %329 = arith.addf %269, %328 : vector<1x256xf32>
    %cst_31 = arith.constant 0.000000e+00 : f32
    %330 = vector.broadcast %cst_31 : f32 to vector<1x256xf32>
    %331 = vector.extract_strided_slice %207 {offsets = [0, 79], sizes = [1, 256], strides = [1, 1]} : vector<1x512xf32> to vector<1x256xf32>
    %332 = vector.broadcast %6 : f32 to vector<1x256xf32>
    %333 = arith.mulf %332, %331 : vector<1x256xf32>
    %334 = arith.addf %330, %333 : vector<1x256xf32>
    %335 = vector.extract_strided_slice %208 {offsets = [0, 79], sizes = [1, 256], strides = [1, 1]} : vector<1x512xf32> to vector<1x256xf32>
    %336 = vector.broadcast %55 : f32 to vector<1x256xf32>
    %337 = arith.mulf %336, %335 : vector<1x256xf32>
    %338 = arith.addf %334, %337 : vector<1x256xf32>
    %339 = vector.extract_strided_slice %207 {offsets = [0, 95], sizes = [1, 256], strides = [1, 1]} : vector<1x512xf32> to vector<1x256xf32>
    %340 = vector.broadcast %13 : f32 to vector<1x256xf32>
    %341 = arith.mulf %340, %339 : vector<1x256xf32>
    %342 = arith.addf %338, %341 : vector<1x256xf32>
    %343 = vector.extract_strided_slice %208 {offsets = [0, 95], sizes = [1, 256], strides = [1, 1]} : vector<1x512xf32> to vector<1x256xf32>
    %344 = vector.broadcast %62 : f32 to vector<1x256xf32>
    %345 = arith.mulf %344, %343 : vector<1x256xf32>
    %346 = arith.addf %342, %345 : vector<1x256xf32>
    %347 = vector.extract_strided_slice %207 {offsets = [0, 111], sizes = [1, 256], strides = [1, 1]} : vector<1x512xf32> to vector<1x256xf32>
    %348 = vector.broadcast %20 : f32 to vector<1x256xf32>
    %349 = arith.mulf %348, %347 : vector<1x256xf32>
    %350 = arith.addf %346, %349 : vector<1x256xf32>
    %351 = vector.extract_strided_slice %208 {offsets = [0, 111], sizes = [1, 256], strides = [1, 1]} : vector<1x512xf32> to vector<1x256xf32>
    %352 = vector.broadcast %69 : f32 to vector<1x256xf32>
    %353 = arith.mulf %352, %351 : vector<1x256xf32>
    %354 = arith.addf %350, %353 : vector<1x256xf32>
    %355 = vector.extract_strided_slice %207 {offsets = [0, 127], sizes = [1, 256], strides = [1, 1]} : vector<1x512xf32> to vector<1x256xf32>
    %356 = vector.broadcast %27 : f32 to vector<1x256xf32>
    %357 = arith.mulf %356, %355 : vector<1x256xf32>
    %358 = arith.addf %354, %357 : vector<1x256xf32>
    %359 = vector.extract_strided_slice %208 {offsets = [0, 127], sizes = [1, 256], strides = [1, 1]} : vector<1x512xf32> to vector<1x256xf32>
    %360 = vector.broadcast %76 : f32 to vector<1x256xf32>
    %361 = arith.mulf %360, %359 : vector<1x256xf32>
    %362 = arith.addf %358, %361 : vector<1x256xf32>
    %363 = vector.extract_strided_slice %207 {offsets = [0, 143], sizes = [1, 256], strides = [1, 1]} : vector<1x512xf32> to vector<1x256xf32>
    %364 = vector.broadcast %34 : f32 to vector<1x256xf32>
    %365 = arith.mulf %364, %363 : vector<1x256xf32>
    %366 = arith.addf %362, %365 : vector<1x256xf32>
    %367 = vector.extract_strided_slice %208 {offsets = [0, 143], sizes = [1, 256], strides = [1, 1]} : vector<1x512xf32> to vector<1x256xf32>
    %368 = vector.broadcast %83 : f32 to vector<1x256xf32>
    %369 = arith.mulf %368, %367 : vector<1x256xf32>
    %370 = arith.addf %366, %369 : vector<1x256xf32>
    %371 = vector.extract_strided_slice %207 {offsets = [0, 159], sizes = [1, 256], strides = [1, 1]} : vector<1x512xf32> to vector<1x256xf32>
    %372 = vector.broadcast %41 : f32 to vector<1x256xf32>
    %373 = arith.mulf %372, %371 : vector<1x256xf32>
    %374 = arith.addf %370, %373 : vector<1x256xf32>
    %375 = vector.extract_strided_slice %208 {offsets = [0, 159], sizes = [1, 256], strides = [1, 1]} : vector<1x512xf32> to vector<1x256xf32>
    %376 = vector.broadcast %90 : f32 to vector<1x256xf32>
    %377 = arith.mulf %376, %375 : vector<1x256xf32>
    %378 = arith.addf %374, %377 : vector<1x256xf32>
    %379 = vector.extract_strided_slice %207 {offsets = [0, 175], sizes = [1, 256], strides = [1, 1]} : vector<1x512xf32> to vector<1x256xf32>
    %380 = vector.broadcast %48 : f32 to vector<1x256xf32>
    %381 = arith.mulf %380, %379 : vector<1x256xf32>
    %382 = arith.addf %378, %381 : vector<1x256xf32>
    %383 = vector.extract_strided_slice %208 {offsets = [0, 175], sizes = [1, 256], strides = [1, 1]} : vector<1x512xf32> to vector<1x256xf32>
    %384 = vector.broadcast %97 : f32 to vector<1x256xf32>
    %385 = arith.mulf %384, %383 : vector<1x256xf32>
    %386 = arith.addf %382, %385 : vector<1x256xf32>
    %cst_32 = arith.constant 0.000000e+00 : f32
    %387 = vector.broadcast %cst_32 : f32 to vector<1x256xf32>
    %388 = arith.select %121, %386, %387 : vector<1x256xi1>, vector<1x256xf32>
    %389 = arith.addf %329, %388 : vector<1x256xf32>
    %cst_33 = arith.constant 0.000000e+00 : f32
    %390 = vector.broadcast %cst_33 : f32 to vector<1x256xf32>
    %391 = vector.extract_strided_slice %207 {offsets = [0, 80], sizes = [1, 256], strides = [1, 1]} : vector<1x512xf32> to vector<1x256xf32>
    %392 = vector.broadcast %7 : f32 to vector<1x256xf32>
    %393 = arith.mulf %392, %391 : vector<1x256xf32>
    %394 = arith.addf %390, %393 : vector<1x256xf32>
    %395 = vector.extract_strided_slice %208 {offsets = [0, 80], sizes = [1, 256], strides = [1, 1]} : vector<1x512xf32> to vector<1x256xf32>
    %396 = vector.broadcast %56 : f32 to vector<1x256xf32>
    %397 = arith.mulf %396, %395 : vector<1x256xf32>
    %398 = arith.addf %394, %397 : vector<1x256xf32>
    %399 = vector.extract_strided_slice %207 {offsets = [0, 96], sizes = [1, 256], strides = [1, 1]} : vector<1x512xf32> to vector<1x256xf32>
    %400 = vector.broadcast %14 : f32 to vector<1x256xf32>
    %401 = arith.mulf %400, %399 : vector<1x256xf32>
    %402 = arith.addf %398, %401 : vector<1x256xf32>
    %403 = vector.extract_strided_slice %208 {offsets = [0, 96], sizes = [1, 256], strides = [1, 1]} : vector<1x512xf32> to vector<1x256xf32>
    %404 = vector.broadcast %63 : f32 to vector<1x256xf32>
    %405 = arith.mulf %404, %403 : vector<1x256xf32>
    %406 = arith.addf %402, %405 : vector<1x256xf32>
    %407 = vector.extract_strided_slice %207 {offsets = [0, 112], sizes = [1, 256], strides = [1, 1]} : vector<1x512xf32> to vector<1x256xf32>
    %408 = vector.broadcast %21 : f32 to vector<1x256xf32>
    %409 = arith.mulf %408, %407 : vector<1x256xf32>
    %410 = arith.addf %406, %409 : vector<1x256xf32>
    %411 = vector.extract_strided_slice %208 {offsets = [0, 112], sizes = [1, 256], strides = [1, 1]} : vector<1x512xf32> to vector<1x256xf32>
    %412 = vector.broadcast %70 : f32 to vector<1x256xf32>
    %413 = arith.mulf %412, %411 : vector<1x256xf32>
    %414 = arith.addf %410, %413 : vector<1x256xf32>
    %415 = vector.extract_strided_slice %207 {offsets = [0, 128], sizes = [1, 256], strides = [1, 1]} : vector<1x512xf32> to vector<1x256xf32>
    %416 = vector.broadcast %28 : f32 to vector<1x256xf32>
    %417 = arith.mulf %416, %415 : vector<1x256xf32>
    %418 = arith.addf %414, %417 : vector<1x256xf32>
    %419 = vector.extract_strided_slice %208 {offsets = [0, 128], sizes = [1, 256], strides = [1, 1]} : vector<1x512xf32> to vector<1x256xf32>
    %420 = vector.broadcast %77 : f32 to vector<1x256xf32>
    %421 = arith.mulf %420, %419 : vector<1x256xf32>
    %422 = arith.addf %418, %421 : vector<1x256xf32>
    %423 = vector.extract_strided_slice %207 {offsets = [0, 144], sizes = [1, 256], strides = [1, 1]} : vector<1x512xf32> to vector<1x256xf32>
    %424 = vector.broadcast %35 : f32 to vector<1x256xf32>
    %425 = arith.mulf %424, %423 : vector<1x256xf32>
    %426 = arith.addf %422, %425 : vector<1x256xf32>
    %427 = vector.extract_strided_slice %208 {offsets = [0, 144], sizes = [1, 256], strides = [1, 1]} : vector<1x512xf32> to vector<1x256xf32>
    %428 = vector.broadcast %84 : f32 to vector<1x256xf32>
    %429 = arith.mulf %428, %427 : vector<1x256xf32>
    %430 = arith.addf %426, %429 : vector<1x256xf32>
    %431 = vector.extract_strided_slice %207 {offsets = [0, 160], sizes = [1, 256], strides = [1, 1]} : vector<1x512xf32> to vector<1x256xf32>
    %432 = vector.broadcast %42 : f32 to vector<1x256xf32>
    %433 = arith.mulf %432, %431 : vector<1x256xf32>
    %434 = arith.addf %430, %433 : vector<1x256xf32>
    %435 = vector.extract_strided_slice %208 {offsets = [0, 160], sizes = [1, 256], strides = [1, 1]} : vector<1x512xf32> to vector<1x256xf32>
    %436 = vector.broadcast %91 : f32 to vector<1x256xf32>
    %437 = arith.mulf %436, %435 : vector<1x256xf32>
    %438 = arith.addf %434, %437 : vector<1x256xf32>
    %439 = vector.extract_strided_slice %207 {offsets = [0, 176], sizes = [1, 256], strides = [1, 1]} : vector<1x512xf32> to vector<1x256xf32>
    %440 = vector.broadcast %49 : f32 to vector<1x256xf32>
    %441 = arith.mulf %440, %439 : vector<1x256xf32>
    %442 = arith.addf %438, %441 : vector<1x256xf32>
    %443 = vector.extract_strided_slice %208 {offsets = [0, 176], sizes = [1, 256], strides = [1, 1]} : vector<1x512xf32> to vector<1x256xf32>
    %444 = vector.broadcast %98 : f32 to vector<1x256xf32>
    %445 = arith.mulf %444, %443 : vector<1x256xf32>
    %446 = arith.addf %442, %445 : vector<1x256xf32>
    %cst_34 = arith.constant 0.000000e+00 : f32
    %447 = vector.broadcast %cst_34 : f32 to vector<1x256xf32>
    %448 = arith.select %126, %446, %447 : vector<1x256xi1>, vector<1x256xf32>
    %449 = arith.addf %389, %448 : vector<1x256xf32>
    %cst_35 = arith.constant 0.000000e+00 : f32
    %450 = vector.broadcast %cst_35 : f32 to vector<1x256xf32>
    %451 = vector.extract_strided_slice %207 {offsets = [0, 81], sizes = [1, 256], strides = [1, 1]} : vector<1x512xf32> to vector<1x256xf32>
    %452 = vector.broadcast %8 : f32 to vector<1x256xf32>
    %453 = arith.mulf %452, %451 : vector<1x256xf32>
    %454 = arith.addf %450, %453 : vector<1x256xf32>
    %455 = vector.extract_strided_slice %208 {offsets = [0, 81], sizes = [1, 256], strides = [1, 1]} : vector<1x512xf32> to vector<1x256xf32>
    %456 = vector.broadcast %57 : f32 to vector<1x256xf32>
    %457 = arith.mulf %456, %455 : vector<1x256xf32>
    %458 = arith.addf %454, %457 : vector<1x256xf32>
    %459 = vector.extract_strided_slice %207 {offsets = [0, 97], sizes = [1, 256], strides = [1, 1]} : vector<1x512xf32> to vector<1x256xf32>
    %460 = vector.broadcast %15 : f32 to vector<1x256xf32>
    %461 = arith.mulf %460, %459 : vector<1x256xf32>
    %462 = arith.addf %458, %461 : vector<1x256xf32>
    %463 = vector.extract_strided_slice %208 {offsets = [0, 97], sizes = [1, 256], strides = [1, 1]} : vector<1x512xf32> to vector<1x256xf32>
    %464 = vector.broadcast %64 : f32 to vector<1x256xf32>
    %465 = arith.mulf %464, %463 : vector<1x256xf32>
    %466 = arith.addf %462, %465 : vector<1x256xf32>
    %467 = vector.extract_strided_slice %207 {offsets = [0, 113], sizes = [1, 256], strides = [1, 1]} : vector<1x512xf32> to vector<1x256xf32>
    %468 = vector.broadcast %22 : f32 to vector<1x256xf32>
    %469 = arith.mulf %468, %467 : vector<1x256xf32>
    %470 = arith.addf %466, %469 : vector<1x256xf32>
    %471 = vector.extract_strided_slice %208 {offsets = [0, 113], sizes = [1, 256], strides = [1, 1]} : vector<1x512xf32> to vector<1x256xf32>
    %472 = vector.broadcast %71 : f32 to vector<1x256xf32>
    %473 = arith.mulf %472, %471 : vector<1x256xf32>
    %474 = arith.addf %470, %473 : vector<1x256xf32>
    %475 = vector.extract_strided_slice %207 {offsets = [0, 129], sizes = [1, 256], strides = [1, 1]} : vector<1x512xf32> to vector<1x256xf32>
    %476 = vector.broadcast %29 : f32 to vector<1x256xf32>
    %477 = arith.mulf %476, %475 : vector<1x256xf32>
    %478 = arith.addf %474, %477 : vector<1x256xf32>
    %479 = vector.extract_strided_slice %208 {offsets = [0, 129], sizes = [1, 256], strides = [1, 1]} : vector<1x512xf32> to vector<1x256xf32>
    %480 = vector.broadcast %78 : f32 to vector<1x256xf32>
    %481 = arith.mulf %480, %479 : vector<1x256xf32>
    %482 = arith.addf %478, %481 : vector<1x256xf32>
    %483 = vector.extract_strided_slice %207 {offsets = [0, 145], sizes = [1, 256], strides = [1, 1]} : vector<1x512xf32> to vector<1x256xf32>
    %484 = vector.broadcast %36 : f32 to vector<1x256xf32>
    %485 = arith.mulf %484, %483 : vector<1x256xf32>
    %486 = arith.addf %482, %485 : vector<1x256xf32>
    %487 = vector.extract_strided_slice %208 {offsets = [0, 145], sizes = [1, 256], strides = [1, 1]} : vector<1x512xf32> to vector<1x256xf32>
    %488 = vector.broadcast %85 : f32 to vector<1x256xf32>
    %489 = arith.mulf %488, %487 : vector<1x256xf32>
    %490 = arith.addf %486, %489 : vector<1x256xf32>
    %491 = vector.extract_strided_slice %207 {offsets = [0, 161], sizes = [1, 256], strides = [1, 1]} : vector<1x512xf32> to vector<1x256xf32>
    %492 = vector.broadcast %43 : f32 to vector<1x256xf32>
    %493 = arith.mulf %492, %491 : vector<1x256xf32>
    %494 = arith.addf %490, %493 : vector<1x256xf32>
    %495 = vector.extract_strided_slice %208 {offsets = [0, 161], sizes = [1, 256], strides = [1, 1]} : vector<1x512xf32> to vector<1x256xf32>
    %496 = vector.broadcast %92 : f32 to vector<1x256xf32>
    %497 = arith.mulf %496, %495 : vector<1x256xf32>
    %498 = arith.addf %494, %497 : vector<1x256xf32>
    %499 = vector.extract_strided_slice %207 {offsets = [0, 177], sizes = [1, 256], strides = [1, 1]} : vector<1x512xf32> to vector<1x256xf32>
    %500 = vector.broadcast %50 : f32 to vector<1x256xf32>
    %501 = arith.mulf %500, %499 : vector<1x256xf32>
    %502 = arith.addf %498, %501 : vector<1x256xf32>
    %503 = vector.extract_strided_slice %208 {offsets = [0, 177], sizes = [1, 256], strides = [1, 1]} : vector<1x512xf32> to vector<1x256xf32>
    %504 = vector.broadcast %99 : f32 to vector<1x256xf32>
    %505 = arith.mulf %504, %503 : vector<1x256xf32>
    %506 = arith.addf %502, %505 : vector<1x256xf32>
    %cst_36 = arith.constant 0.000000e+00 : f32
    %507 = vector.broadcast %cst_36 : f32 to vector<1x256xf32>
    %508 = arith.select %131, %506, %507 : vector<1x256xi1>, vector<1x256xf32>
    %509 = arith.addf %449, %508 : vector<1x256xf32>
    %cst_37 = arith.constant 0.000000e+00 : f32
    %510 = vector.broadcast %cst_37 : f32 to vector<1x256xf32>
    %511 = vector.extract_strided_slice %207 {offsets = [0, 82], sizes = [1, 256], strides = [1, 1]} : vector<1x512xf32> to vector<1x256xf32>
    %512 = vector.broadcast %9 : f32 to vector<1x256xf32>
    %513 = arith.mulf %512, %511 : vector<1x256xf32>
    %514 = arith.addf %510, %513 : vector<1x256xf32>
    %515 = vector.extract_strided_slice %208 {offsets = [0, 82], sizes = [1, 256], strides = [1, 1]} : vector<1x512xf32> to vector<1x256xf32>
    %516 = vector.broadcast %58 : f32 to vector<1x256xf32>
    %517 = arith.mulf %516, %515 : vector<1x256xf32>
    %518 = arith.addf %514, %517 : vector<1x256xf32>
    %519 = vector.extract_strided_slice %207 {offsets = [0, 98], sizes = [1, 256], strides = [1, 1]} : vector<1x512xf32> to vector<1x256xf32>
    %520 = vector.broadcast %16 : f32 to vector<1x256xf32>
    %521 = arith.mulf %520, %519 : vector<1x256xf32>
    %522 = arith.addf %518, %521 : vector<1x256xf32>
    %523 = vector.extract_strided_slice %208 {offsets = [0, 98], sizes = [1, 256], strides = [1, 1]} : vector<1x512xf32> to vector<1x256xf32>
    %524 = vector.broadcast %65 : f32 to vector<1x256xf32>
    %525 = arith.mulf %524, %523 : vector<1x256xf32>
    %526 = arith.addf %522, %525 : vector<1x256xf32>
    %527 = vector.extract_strided_slice %207 {offsets = [0, 114], sizes = [1, 256], strides = [1, 1]} : vector<1x512xf32> to vector<1x256xf32>
    %528 = vector.broadcast %23 : f32 to vector<1x256xf32>
    %529 = arith.mulf %528, %527 : vector<1x256xf32>
    %530 = arith.addf %526, %529 : vector<1x256xf32>
    %531 = vector.extract_strided_slice %208 {offsets = [0, 114], sizes = [1, 256], strides = [1, 1]} : vector<1x512xf32> to vector<1x256xf32>
    %532 = vector.broadcast %72 : f32 to vector<1x256xf32>
    %533 = arith.mulf %532, %531 : vector<1x256xf32>
    %534 = arith.addf %530, %533 : vector<1x256xf32>
    %535 = vector.extract_strided_slice %207 {offsets = [0, 130], sizes = [1, 256], strides = [1, 1]} : vector<1x512xf32> to vector<1x256xf32>
    %536 = vector.broadcast %30 : f32 to vector<1x256xf32>
    %537 = arith.mulf %536, %535 : vector<1x256xf32>
    %538 = arith.addf %534, %537 : vector<1x256xf32>
    %539 = vector.extract_strided_slice %208 {offsets = [0, 130], sizes = [1, 256], strides = [1, 1]} : vector<1x512xf32> to vector<1x256xf32>
    %540 = vector.broadcast %79 : f32 to vector<1x256xf32>
    %541 = arith.mulf %540, %539 : vector<1x256xf32>
    %542 = arith.addf %538, %541 : vector<1x256xf32>
    %543 = vector.extract_strided_slice %207 {offsets = [0, 146], sizes = [1, 256], strides = [1, 1]} : vector<1x512xf32> to vector<1x256xf32>
    %544 = vector.broadcast %37 : f32 to vector<1x256xf32>
    %545 = arith.mulf %544, %543 : vector<1x256xf32>
    %546 = arith.addf %542, %545 : vector<1x256xf32>
    %547 = vector.extract_strided_slice %208 {offsets = [0, 146], sizes = [1, 256], strides = [1, 1]} : vector<1x512xf32> to vector<1x256xf32>
    %548 = vector.broadcast %86 : f32 to vector<1x256xf32>
    %549 = arith.mulf %548, %547 : vector<1x256xf32>
    %550 = arith.addf %546, %549 : vector<1x256xf32>
    %551 = vector.extract_strided_slice %207 {offsets = [0, 162], sizes = [1, 256], strides = [1, 1]} : vector<1x512xf32> to vector<1x256xf32>
    %552 = vector.broadcast %44 : f32 to vector<1x256xf32>
    %553 = arith.mulf %552, %551 : vector<1x256xf32>
    %554 = arith.addf %550, %553 : vector<1x256xf32>
    %555 = vector.extract_strided_slice %208 {offsets = [0, 162], sizes = [1, 256], strides = [1, 1]} : vector<1x512xf32> to vector<1x256xf32>
    %556 = vector.broadcast %93 : f32 to vector<1x256xf32>
    %557 = arith.mulf %556, %555 : vector<1x256xf32>
    %558 = arith.addf %554, %557 : vector<1x256xf32>
    %559 = vector.extract_strided_slice %207 {offsets = [0, 178], sizes = [1, 256], strides = [1, 1]} : vector<1x512xf32> to vector<1x256xf32>
    %560 = vector.broadcast %51 : f32 to vector<1x256xf32>
    %561 = arith.mulf %560, %559 : vector<1x256xf32>
    %562 = arith.addf %558, %561 : vector<1x256xf32>
    %563 = vector.extract_strided_slice %208 {offsets = [0, 178], sizes = [1, 256], strides = [1, 1]} : vector<1x512xf32> to vector<1x256xf32>
    %564 = vector.broadcast %100 : f32 to vector<1x256xf32>
    %565 = arith.mulf %564, %563 : vector<1x256xf32>
    %566 = arith.addf %562, %565 : vector<1x256xf32>
    %cst_38 = arith.constant 0.000000e+00 : f32
    %567 = vector.broadcast %cst_38 : f32 to vector<1x256xf32>
    %568 = arith.select %136, %566, %567 : vector<1x256xi1>, vector<1x256xf32>
    %569 = arith.addf %509, %568 : vector<1x256xf32>
    %cst_39 = arith.constant 0.000000e+00 : f32
    %570 = vector.broadcast %cst_39 : f32 to vector<1x256xf32>
    %571 = vector.extract_strided_slice %207 {offsets = [0, 83], sizes = [1, 256], strides = [1, 1]} : vector<1x512xf32> to vector<1x256xf32>
    %572 = vector.broadcast %10 : f32 to vector<1x256xf32>
    %573 = arith.mulf %572, %571 : vector<1x256xf32>
    %574 = arith.addf %570, %573 : vector<1x256xf32>
    %575 = vector.extract_strided_slice %208 {offsets = [0, 83], sizes = [1, 256], strides = [1, 1]} : vector<1x512xf32> to vector<1x256xf32>
    %576 = vector.broadcast %59 : f32 to vector<1x256xf32>
    %577 = arith.mulf %576, %575 : vector<1x256xf32>
    %578 = arith.addf %574, %577 : vector<1x256xf32>
    %579 = vector.extract_strided_slice %207 {offsets = [0, 99], sizes = [1, 256], strides = [1, 1]} : vector<1x512xf32> to vector<1x256xf32>
    %580 = vector.broadcast %17 : f32 to vector<1x256xf32>
    %581 = arith.mulf %580, %579 : vector<1x256xf32>
    %582 = arith.addf %578, %581 : vector<1x256xf32>
    %583 = vector.extract_strided_slice %208 {offsets = [0, 99], sizes = [1, 256], strides = [1, 1]} : vector<1x512xf32> to vector<1x256xf32>
    %584 = vector.broadcast %66 : f32 to vector<1x256xf32>
    %585 = arith.mulf %584, %583 : vector<1x256xf32>
    %586 = arith.addf %582, %585 : vector<1x256xf32>
    %587 = vector.extract_strided_slice %207 {offsets = [0, 115], sizes = [1, 256], strides = [1, 1]} : vector<1x512xf32> to vector<1x256xf32>
    %588 = vector.broadcast %24 : f32 to vector<1x256xf32>
    %589 = arith.mulf %588, %587 : vector<1x256xf32>
    %590 = arith.addf %586, %589 : vector<1x256xf32>
    %591 = vector.extract_strided_slice %208 {offsets = [0, 115], sizes = [1, 256], strides = [1, 1]} : vector<1x512xf32> to vector<1x256xf32>
    %592 = vector.broadcast %73 : f32 to vector<1x256xf32>
    %593 = arith.mulf %592, %591 : vector<1x256xf32>
    %594 = arith.addf %590, %593 : vector<1x256xf32>
    %595 = vector.extract_strided_slice %207 {offsets = [0, 131], sizes = [1, 256], strides = [1, 1]} : vector<1x512xf32> to vector<1x256xf32>
    %596 = vector.broadcast %31 : f32 to vector<1x256xf32>
    %597 = arith.mulf %596, %595 : vector<1x256xf32>
    %598 = arith.addf %594, %597 : vector<1x256xf32>
    %599 = vector.extract_strided_slice %208 {offsets = [0, 131], sizes = [1, 256], strides = [1, 1]} : vector<1x512xf32> to vector<1x256xf32>
    %600 = vector.broadcast %80 : f32 to vector<1x256xf32>
    %601 = arith.mulf %600, %599 : vector<1x256xf32>
    %602 = arith.addf %598, %601 : vector<1x256xf32>
    %603 = vector.extract_strided_slice %207 {offsets = [0, 147], sizes = [1, 256], strides = [1, 1]} : vector<1x512xf32> to vector<1x256xf32>
    %604 = vector.broadcast %38 : f32 to vector<1x256xf32>
    %605 = arith.mulf %604, %603 : vector<1x256xf32>
    %606 = arith.addf %602, %605 : vector<1x256xf32>
    %607 = vector.extract_strided_slice %208 {offsets = [0, 147], sizes = [1, 256], strides = [1, 1]} : vector<1x512xf32> to vector<1x256xf32>
    %608 = vector.broadcast %87 : f32 to vector<1x256xf32>
    %609 = arith.mulf %608, %607 : vector<1x256xf32>
    %610 = arith.addf %606, %609 : vector<1x256xf32>
    %611 = vector.extract_strided_slice %207 {offsets = [0, 163], sizes = [1, 256], strides = [1, 1]} : vector<1x512xf32> to vector<1x256xf32>
    %612 = vector.broadcast %45 : f32 to vector<1x256xf32>
    %613 = arith.mulf %612, %611 : vector<1x256xf32>
    %614 = arith.addf %610, %613 : vector<1x256xf32>
    %615 = vector.extract_strided_slice %208 {offsets = [0, 163], sizes = [1, 256], strides = [1, 1]} : vector<1x512xf32> to vector<1x256xf32>
    %616 = vector.broadcast %94 : f32 to vector<1x256xf32>
    %617 = arith.mulf %616, %615 : vector<1x256xf32>
    %618 = arith.addf %614, %617 : vector<1x256xf32>
    %619 = vector.extract_strided_slice %207 {offsets = [0, 179], sizes = [1, 256], strides = [1, 1]} : vector<1x512xf32> to vector<1x256xf32>
    %620 = vector.broadcast %52 : f32 to vector<1x256xf32>
    %621 = arith.mulf %620, %619 : vector<1x256xf32>
    %622 = arith.addf %618, %621 : vector<1x256xf32>
    %623 = vector.extract_strided_slice %208 {offsets = [0, 179], sizes = [1, 256], strides = [1, 1]} : vector<1x512xf32> to vector<1x256xf32>
    %624 = vector.broadcast %101 : f32 to vector<1x256xf32>
    %625 = arith.mulf %624, %623 : vector<1x256xf32>
    %626 = arith.addf %622, %625 : vector<1x256xf32>
    %cst_40 = arith.constant 0.000000e+00 : f32
    %627 = vector.broadcast %cst_40 : f32 to vector<1x256xf32>
    %628 = arith.select %141, %626, %627 : vector<1x256xi1>, vector<1x256xf32>
    %629 = arith.addf %569, %628 : vector<1x256xf32>
    %630 = vector.broadcast %102 : f32 to vector<1x256xf32>
    %631 = arith.mulf %629, %630 : vector<1x256xf32>
    %632 = vector.broadcast %103 : f32 to vector<1x256xf32>
    %633 = arith.addf %631, %632 : vector<1x256xf32>
    %634 = arith.negf %633 : vector<1x256xf32>
    %635 = math.exp %634 : vector<1x256xf32>
    %cst_41 = arith.constant 1.000000e+00 : f32
    %636 = vector.broadcast %cst_41 : f32 to vector<1x256xf32>
    %637 = arith.addf %636, %635 : vector<1x256xf32>
    %638 = arith.divf %636, %637 : vector<1x256xf32>
    %639 = vector.broadcast %638 : vector<1x256xf32> to vector<32x256xf32>
    %640 = arith.mulf %200, %639 : vector<32x256xf32>
    %c0_42 = arith.constant 0 : index
    %c0_43 = arith.constant 0 : index
    %c0_44 = arith.constant 0 : index
    %641 = vector.load %arg8[%c0_42, %c0_43, %c0_44] : memref<1x32x256xf32, #tpu.memory_space<vmem>>, vector<1x32x256xf32>
    %642 = vector.shape_cast %641 : vector<1x32x256xf32> to vector<32x256xf32>
    %643 = vector.shape_cast %640 : vector<32x256xf32> to vector<1x32x256xf32>
    tpu.vector_store %arg8[%c0_42, %c0_43, %c0_44], %643 {strides = array<i32>} : memref<1x32x256xf32, #tpu.memory_space<vmem>>, vector<1x32x256xf32>,
    return
  }
  func.func @transform_0(%arg0: i32) -> (i32, i32, i32) {
    %c0_i32 = arith.constant 0 : i32
    %c0_i32_0 = arith.constant 0 : i32
    %c0_i32_1 = arith.constant 0 : i32
    return %arg0, %c0_i32, %c0_i32_0 : i32, i32, i32
  }
  func.func @transform_1(%arg0: i32) -> (i32, i32) {
    %c0_i32 = arith.constant 0 : i32
    %c0_i32_0 = arith.constant 0 : i32
    %c0_i32_1 = arith.constant 0 : i32
    return %c0_i32, %c0_i32_0 : i32, i32
  }
  func.func @transform_2(%arg0: i32) -> (i32, i32) {
    %c0_i32 = arith.constant 0 : i32
    %c0_i32_0 = arith.constant 0 : i32
    %c0_i32_1 = arith.constant 0 : i32
    return %c0_i32, %c0_i32_0 : i32, i32
  }
  func.func @transform_3(%arg0: i32) -> (i32, i32) {
    %c0_i32 = arith.constant 0 : i32
    %c0_i32_0 = arith.constant 0 : i32
    %c0_i32_1 = arith.constant 0 : i32
    return %c0_i32, %c0_i32_0 : i32, i32
  }
  func.func @transform_4(%arg0: i32) -> (i32, i32) {
    %c0_i32 = arith.constant 0 : i32
    %c0_i32_0 = arith.constant 0 : i32
    %c0_i32_1 = arith.constant 0 : i32
    return %c0_i32, %c0_i32_0 : i32, i32
  }
  func.func @transform_5(%arg0: i32) -> i32 {
    %c0_i32 = arith.constant 0 : i32
    %c0_i32_0 = arith.constant 0 : i32
    return %c0_i32 : i32
  }
  func.func @transform_6(%arg0: i32) -> i32 {
    %c0_i32 = arith.constant 0 : i32
    %c0_i32_0 = arith.constant 0 : i32
    return %c0_i32 : i32
  }
  func.func @transform_7(%arg0: i32) -> (i32, i32, i32) {
    %c0_i32 = arith.constant 0 : i32
    %c0_i32_0 = arith.constant 0 : i32
    %c0_i32_1 = arith.constant 0 : i32
    return %arg0, %c0_i32, %c0_i32_0 : i32, i32, i32
  }
}

</mosaic_0001>

<llo_original>
// kernel: tpu_custom_call.1
$region0: #{tpu_custom_call.1}
  #allocation0 [shape = 'u32[]', space=smem, size = 0x4, offset = 0x4, fixed_abs, tag = 'smem constant byte address 0x4 - core index']
  #allocation1 [shape = 'u32[144,128]{1,0:T(1,128)}', space=vmem, size = 0x12000, scoped, tag = 'internal scratch']
  %s0 = inlined_call_operand.hbm [shape: f32[2,32,256], index: 0, kind: input, shape index: {}]
  %s1 = inlined_call_operand.vmem [shape: f32[32,2], index: 1, kind: input, shape index: {}]
  %s2 = inlined_call_operand.vmem [shape: f32[1,2], index: 2, kind: input, shape index: {}]
  %s3 = inlined_call_operand.vmem [shape: f32[32,2], index: 3, kind: input, shape index: {}]
  %s4 = inlined_call_operand.vmem [shape: f32[32,1], index: 4, kind: input, shape index: {}]
  %s5 = inlined_call_operand.vmem [shape: f32[98], index: 5, kind: input, shape index: {}]
  %s6 = inlined_call_operand.vmem [shape: f32[2], index: 6, kind: input, shape index: {}]
  %s7 = inlined_call_operand.hbm [shape: f32[2,32,256], index: 7, kind: output, shape index: {}]
  %s8 = sld [smem:[#allocation0]]
  $region73: #{tpu_custom_call.1} parent=0
    _
  %s10 = ssub.s32 1, %s8
  %s11 = scalar_select 0, %s10, %s8
  $region1: #{tpu_custom_call.1} parent=0
    #allocation2 [shape = 'u8[65536]{0}', space=vmem, size = 0x10000, scoped, tag = 'input window, operand 0']
    #allocation3 [shape = 's32[2]{0}', space=sflag, size = 0x8, scoped, tag = 'scoped memory for tpu_custom_call.1']
    #allocation4 [shape = 's32[2]{0}', space=sflag, size = 0x8, scoped, tag = 'scoped memory for tpu_custom_call.1']
    #allocation5 [shape = 's32[2]{0}', space=sflag, size = 0x8, scoped, tag = 'scoped memory for tpu_custom_call.1']
    #allocation6 [shape = 'u8[512]{0}', space=smem, size = 0x200, scoped, tag = 'input window, operand 5, single buffered']
    #allocation7 [shape = 'u8[512]{0}', space=smem, size = 0x200, scoped, tag = 'input window, operand 6, single buffered']
    #allocation8 [shape = 's32[1]{0}', space=sflag, size = 0x4, scoped, tag = 'scoped memory for tpu_custom_call.1']
    #allocation9 [shape = 'u8[65536]{0}', space=vmem, size = 0x10000, scoped, tag = 'output window, operand 0']
    %12 = vsyncpa [#allocation3], 0
    %s13 = scalar_lea.sflag [#allocation3], 1
    %14 = vsyncpa %s13, 0
    %15 = vsyncpa [#allocation5], 0
    %16 = vsyncpa [#allocation8], 0
    %17 = vsyncpa [#allocation4], 0
    %s18 = scalar_lea.sflag [#allocation4], 1
    %19 = vsyncpa %s18, 0
    loop: start=0, step=1, limit=4
    $region2: #{tpu_custom_call.1} parent=1 // loop_pre_header
      _
    $region3: #{tpu_custom_call.1} parent=1 // loop_header
      %s21 = sphi 0, %s25
      %p22 = scmp.ge.s32.totalorder %s21, 4
      %s31 = sphi 0, %s33
      %s34 = sphi 0, %s31
      %s35 = sphi 0, %s34
      %s51 = sphi 0, %s35
      %s55 = sphi 0, %s55
      %s57 = sphi 0, %s55
      %s58 = sphi 0, %s57
      %s72 = sphi 0, %s58
      %s76 = sphi 0, %s76
      %s78 = sphi 0, %s76
      %s79 = sphi 0, %s78
      %s93 = sphi 0, %s79
      %s97 = sphi 0, %s97
      %s99 = sphi 0, %s97
      %s100 = sphi 0, %s99
      %s114 = sphi 0, %s100
      %s118 = sphi 0, %s118
      %s120 = sphi 0, %s118
      %s121 = sphi 0, %s120
      %s135 = sphi 0, %s121
      %s139 = sphi 0, %s139
      %s141 = sphi 0, %s139
      %s142 = sphi 0, %s141
      %s156 = sphi 0, %s142
      %s160 = sphi 0, %s160
      %s162 = sphi 0, %s160
      %s163 = sphi 0, %s162
      %s177 = sphi 0, %s163
      %s183 = sphi 0, %s185
      %s186 = sphi 0, %s183
      %s187 = sphi 0, %s186
      %s203 = sphi 0, %s187
    $region4: #{tpu_custom_call.1} parent=1 // loop_header_branch
      %24 = sbr.rel (%p22) target = $region8
    $region5: #{tpu_custom_call.1} parent=1 // loop_body
      %s26 = ssub.s32 %s21, 1
      %s27 = ssub.s32 %s21, 2
      %s28 = sadd.s32 %s21, 1
      %s29 = ssub.s32 %s21, %s28
      %p30 = scmp.eq.s32.totalorder %s29, 0
      %s32 = sadd.s32 %s31, 1
      %s33 = scalar_select %p30, %s31, %s32
      %p36 = pneg %p30
      %p37 = scmp.eq.s32.totalorder %s21, 1
      %p38 = por %p36, %p37
      %p39 = scmp.ne.s32.totalorder %s31, %s34
      %p40 = scmp.eq.s32.totalorder %s21, 0
      %p41 = por %p39, %p40
      %p42 = scmp.ne.s32.totalorder %s31, %s34
      %p43 = scmp.eq.s32.totalorder %s26, 1
      %p44 = por %p42, %p43
      %p45 = scmp.ne.s32.totalorder %s34, %s35
      %p46 = scmp.eq.s32.totalorder %s26, 0
      %p47 = por %p45, %p46
      %p48 = scmp.ne.s32.totalorder %s34, %s35
      %p49 = scmp.eq.s32.totalorder %s27, 1
      %p50 = por %p48, %p49
      %p52 = scmp.ne.s32.totalorder %s35, %s51
      %p53 = scmp.eq.s32.totalorder %s27, 0
      %p54 = por %p52, %p53
      %s56 = sadd.s32 %s55, 1
      %p59 = scmp.eq.s32.totalorder %s21, 1
      %p60 = scmp.ne.s32.totalorder %s55, %s57
      %p61 = scmp.eq.s32.totalorder %s21, 0
      %p62 = por %p60, %p61
      %p63 = scmp.ne.s32.totalorder %s55, %s57
      %p64 = scmp.eq.s32.totalorder %s26, 1
      %p65 = por %p63, %p64
      %p66 = scmp.ne.s32.totalorder %s57, %s58
      %p67 = scmp.eq.s32.totalorder %s26, 0
      %p68 = por %p66, %p67
      %p69 = scmp.ne.s32.totalorder %s57, %s58
      %p70 = scmp.eq.s32.totalorder %s27, 1
      %p71 = por %p69, %p70
      %p73 = scmp.ne.s32.totalorder %s58, %s72
      %p74 = scmp.eq.s32.totalorder %s27, 0
      %p75 = por %p73, %p74
      %s77 = sadd.s32 %s76, 1
      %p80 = scmp.eq.s32.totalorder %s21, 1
      %p81 = scmp.ne.s32.totalorder %s76, %s78
      %p82 = scmp.eq.s32.totalorder %s21, 0
      %p83 = por %p81, %p82
      %p84 = scmp.ne.s32.totalorder %s76, %s78
      %p85 = scmp.eq.s32.totalorder %s26, 1
      %p86 = por %p84, %p85
      %p87 = scmp.ne.s32.totalorder %s78, %s79
      %p88 = scmp.eq.s32.totalorder %s26, 0
      %p89 = por %p87, %p88
      %p90 = scmp.ne.s32.totalorder %s78, %s79
      %p91 = scmp.eq.s32.totalorder %s27, 1
      %p92 = por %p90, %p91
      %p94 = scmp.ne.s32.totalorder %s79, %s93
      %p95 = scmp.eq.s32.totalorder %s27, 0
      %p96 = por %p94, %p95
      %s98 = sadd.s32 %s97, 1
      %p101 = scmp.eq.s32.totalorder %s21, 1
      %p102 = scmp.ne.s32.totalorder %s97, %s99
      %p103 = scmp.eq.s32.totalorder %s21, 0
      %p104 = por %p102, %p103
      %p105 = scmp.ne.s32.totalorder %s97, %s99
      %p106 = scmp.eq.s32.totalorder %s26, 1
      %p107 = por %p105, %p106
      %p108 = scmp.ne.s32.totalorder %s99, %s100
      %p109 = scmp.eq.s32.totalorder %s26, 0
      %p110 = por %p108, %p109
      %p111 = scmp.ne.s32.totalorder %s99, %s100
      %p112 = scmp.eq.s32.totalorder %s27, 1
      %p113 = por %p111, %p112
      %p115 = scmp.ne.s32.totalorder %s100, %s114
      %p116 = scmp.eq.s32.totalorder %s27, 0
      %p117 = por %p115, %p116
      %s119 = sadd.s32 %s118, 1
      %p122 = scmp.eq.s32.totalorder %s21, 1
      %p123 = scmp.ne.s32.totalorder %s118, %s120
      %p124 = scmp.eq.s32.totalorder %s21, 0
      %p125 = por %p123, %p124
      %p126 = scmp.ne.s32.totalorder %s118, %s120
      %p127 = scmp.eq.s32.totalorder %s26, 1
      %p128 = por %p126, %p127
      %p129 = scmp.ne.s32.totalorder %s120, %s121
      %p130 = scmp.eq.s32.totalorder %s26, 0
      %p131 = por %p129, %p130
      %p132 = scmp.ne.s32.totalorder %s120, %s121
      %p133 = scmp.eq.s32.totalorder %s27, 1
      %p134 = por %p132, %p133
      %p136 = scmp.ne.s32.totalorder %s121, %s135
      %p137 = scmp.eq.s32.totalorder %s27, 0
      %p138 = por %p136, %p137
      %s140 = sadd.s32 %s139, 1
      %p143 = scmp.eq.s32.totalorder %s21, 1
      %p144 = scmp.ne.s32.totalorder %s139, %s141
      %p145 = scmp.eq.s32.totalorder %s21, 0
      %p146 = por %p144, %p145
      %p147 = scmp.ne.s32.totalorder %s139, %s141
      %p148 = scmp.eq.s32.totalorder %s26, 1
      %p149 = por %p147, %p148
      %p150 = scmp.ne.s32.totalorder %s141, %s142
      %p151 = scmp.eq.s32.totalorder %s26, 0
      %p152 = por %p150, %p151
      %p153 = scmp.ne.s32.totalorder %s141, %s142
      %p154 = scmp.eq.s32.totalorder %s27, 1
      %p155 = por %p153, %p154
      %p157 = scmp.ne.s32.totalorder %s142, %s156
      %p158 = scmp.eq.s32.totalorder %s27, 0
      %p159 = por %p157, %p158
      %s161 = sadd.s32 %s160, 1
      %p164 = scmp.eq.s32.totalorder %s21, 1
      %p165 = scmp.ne.s32.totalorder %s160, %s162
      %p166 = scmp.eq.s32.totalorder %s21, 0
      %p167 = por %p165, %p166
      %p168 = scmp.ne.s32.totalorder %s160, %s162
      %p169 = scmp.eq.s32.totalorder %s26, 1
      %p170 = por %p168, %p169
      %p171 = scmp.ne.s32.totalorder %s162, %s163
      %p172 = scmp.eq.s32.totalorder %s26, 0
      %p173 = por %p171, %p172
      %p174 = scmp.ne.s32.totalorder %s162, %s163
      %p175 = scmp.eq.s32.totalorder %s27, 1
      %p176 = por %p174, %p175
      %p178 = scmp.ne.s32.totalorder %s163, %s177
      %p179 = scmp.eq.s32.totalorder %s27, 0
      %p180 = por %p178, %p179
      %s181 = ssub.s32 %s21, %s28
      %p182 = scmp.eq.s32.totalorder %s181, 0
      %s184 = sadd.s32 %s183, 1
      %s185 = scalar_select %p182, %s183, %s184
      %p188 = pneg %p182
      %p189 = scmp.eq.s32.totalorder %s21, 1
      %p190 = por %p188, %p189
      %p191 = scmp.ne.s32.totalorder %s183, %s186
      %p192 = scmp.eq.s32.totalorder %s21, 0
      %p193 = por %p191, %p192
      %p194 = scmp.ne.s32.totalorder %s183, %s186
      %p195 = scmp.eq.s32.totalorder %s26, 1
      %p196 = por %p194, %p195
      %p197 = scmp.ne.s32.totalorder %s186, %s187
      %p198 = scmp.eq.s32.totalorder %s26, 0
      %p199 = por %p197, %p198
      %p200 = scmp.ne.s32.totalorder %s186, %s187
      %p201 = scmp.eq.s32.totalorder %s27, 1
      %p202 = por %p200, %p201
      %p204 = scmp.ne.s32.totalorder %s187, %s203
      %p205 = scmp.eq.s32.totalorder %s27, 0
      %p206 = por %p204, %p205
      %p207 = scmp.le.s32.totalorder 1, %s21
      %p208 = scmp.lt.s32.totalorder %s21, 3
      %p209 = pnand %p207, %p208
      %p210 = pneg %p209
      // Predicated region
      $region9: #{tpu_custom_call.1} parent=5 // pred_check
        _
      $region10: #{tpu_custom_call.1} parent=5 // pred_check_branch
        %212 = sbr.rel (%p209) target = $region12
      $region11: #{tpu_custom_call.1} parent=5 // pred_region
        %s213 = ssub.s32 %s21, 1
        // Predicated region
        $region13: #{tpu_custom_call.1} parent=11 // pred_check
          %p214 = pneg %p68
        $region14: #{tpu_custom_call.1} parent=11 // pred_check_branch
          %216 = sbr.rel (%p214) target = $region16
        $region15: #{tpu_custom_call.1} parent=11 // pred_region
          _
        $region16: #{tpu_custom_call.1} parent=11 // pred_fallthru
          _
        // Predicated region
        $region17: #{tpu_custom_call.1} parent=11 // pred_check
          %p217 = pneg %p89
        $region18: #{tpu_custom_call.1} parent=11 // pred_check_branch
          %219 = sbr.rel (%p217) target = $region20
        $region19: #{tpu_custom_call.1} parent=11 // pred_region
          _
        $region20: #{tpu_custom_call.1} parent=11 // pred_fallthru
          _
        // Predicated region
        $region21: #{tpu_custom_call.1} parent=11 // pred_check
          %p220 = pneg %p110
        $region22: #{tpu_custom_call.1} parent=11 // pred_check_branch
          %222 = sbr.rel (%p220) target = $region24
        $region23: #{tpu_custom_call.1} parent=11 // pred_region
          _
        $region24: #{tpu_custom_call.1} parent=11 // pred_fallthru
          _
        // Predicated region
        $region25: #{tpu_custom_call.1} parent=11 // pred_check
          %p223 = pneg %p131
        $region26: #{tpu_custom_call.1} parent=11 // pred_check_branch
          %225 = sbr.rel (%p223) target = $region28
        $region27: #{tpu_custom_call.1} parent=11 // pred_region
          _
        $region28: #{tpu_custom_call.1} parent=11 // pred_fallthru
          _
        // Predicated region
        $region29: #{tpu_custom_call.1} parent=11 // pred_check
          %p226 = pneg %p152
        $region30: #{tpu_custom_call.1} parent=11 // pred_check_branch
          %228 = sbr.rel (%p226) target = $region32
        $region31: #{tpu_custom_call.1} parent=11 // pred_region
          %s230 = ssub.s32 16, 16
          %231 = vsyncadd [#allocation5], %s230
          %s233 = sshll.u32 %s5, 4
          %s234 = int_to_ptr.vmem [resolvable:$true] %s233
          %236 = dma.vmem_to_smem %s234, 16, [#allocation6], [#allocation5]
        $region32: #{tpu_custom_call.1} parent=11 // pred_fallthru
          _
        // Predicated region
        $region33: #{tpu_custom_call.1} parent=11 // pred_check
          %p237 = pneg %p173
        $region34: #{tpu_custom_call.1} parent=11 // pred_check_branch
          %239 = sbr.rel (%p237) target = $region36
        $region35: #{tpu_custom_call.1} parent=11 // pred_region
          %s241 = ssub.s32 16, 16
          %242 = vsyncadd [#allocation8], %s241
          %s244 = sshll.u32 %s6, 4
          %s245 = int_to_ptr.vmem [resolvable:$true] %s244
          %247 = dma.vmem_to_smem %s245, 16, [#allocation7], [#allocation8]
        $region36: #{tpu_custom_call.1} parent=11 // pred_fallthru
          _
      $region12: #{tpu_custom_call.1} parent=5 // pred_fallthru
        _
      %p248 = scmp.lt.s32.totalorder %s21, 2
      // Predicated region
      $region37: #{tpu_custom_call.1} parent=5 // pred_check
        %p249 = pneg %p248
      $region38: #{tpu_custom_call.1} parent=5 // pred_check_branch
        %251 = sbr.rel (%p249) target = $region40
      $region39: #{tpu_custom_call.1} parent=5 // pred_region
        // Predicated region
        $region41: #{tpu_custom_call.1} parent=39 // pred_check
          %p252 = pneg %p41
        $region42: #{tpu_custom_call.1} parent=39 // pred_check_branch
          %254 = sbr.rel (%p252) target = $region44
        $region43: #{tpu_custom_call.1} parent=39 // pred_region
          %s255 = sand.u32 %s31, 1
          %s256 = scalar_lea.sflag [#allocation3], %s255
          %s257 = sand.u32 %s31, 1
          %s258 = smul.addr %s257, 64
          %s259 = scalar_lea.vmem [#allocation2], %s258
          %s261 = ssub.s32 1024, 1024
          %262 = vsyncadd %s256, %s261
          %s263 = smul.addr %s21, 8
          %s264 = smul.addr %s263, 128
          %s265 = scalar_lea.hbm %s0, %s264
          %s266 = sshll.u32 %s259, 4
          %s267 = int_to_ptr.vmem [resolvable:$true] %s266
          %272 = dma.hbm_to_vmem [thread:$0]  %s265, 1024, %s267, %s256, 256, 256, 16
        $region44: #{tpu_custom_call.1} parent=39 // pred_fallthru
          _
      $region40: #{tpu_custom_call.1} parent=5 // pred_fallthru
        _
      %p273 = scmp.le.s32.totalorder 1, %s21
      %p274 = scmp.lt.s32.totalorder %s21, 3
      %p275 = pnand %p273, %p274
      %p276 = pneg %p275
      // Predicated region
      $region45: #{tpu_custom_call.1} parent=5 // pred_check
        _
      $region46: #{tpu_custom_call.1} parent=5 // pred_check_branch
        %278 = sbr.rel (%p275) target = $region48
      $region47: #{tpu_custom_call.1} parent=5 // pred_region
        %s279 = ssub.s32 %s21, 1
        %s280 = sand.u32 %s34, 1
        %s281 = scalar_lea.sflag [#allocation3], %s280
        %s282 = sand.u32 %s34, 1
        %s283 = smul.addr %s282, 64
        %s284 = scalar_lea.vmem [#allocation2], %s283
        // Predicated region
        $region49: #{tpu_custom_call.1} parent=47 // pred_check
          %p285 = pneg %p47
        $region50: #{tpu_custom_call.1} parent=47 // pred_check_branch
          %287 = sbr.rel (%p285) target = $region52
        $region51: #{tpu_custom_call.1} parent=47 // pred_region
          %288 = dma.done %s281, 1024
        $region52: #{tpu_custom_call.1} parent=47 // pred_fallthru
          _
        // Predicated region
        $region53: #{tpu_custom_call.1} parent=47 // pred_check
          %p289 = pneg %p152
        $region54: #{tpu_custom_call.1} parent=47 // pred_check_branch
          %291 = sbr.rel (%p289) target = $region56
        $region55: #{tpu_custom_call.1} parent=47 // pred_region
          %292 = dma.done [#allocation5], 16
        $region56: #{tpu_custom_call.1} parent=47 // pred_fallthru
          _
        // Predicated region
        $region57: #{tpu_custom_call.1} parent=47 // pred_check
          %p293 = pneg %p173
        $region58: #{tpu_custom_call.1} parent=47 // pred_check_branch
          %295 = sbr.rel (%p293) target = $region60
        $region59: #{tpu_custom_call.1} parent=47 // pred_region
          %296 = dma.done [#allocation8], 16
        $region60: #{tpu_custom_call.1} parent=47 // pred_fallthru
          _
        %297 = sfence
        %s298 = sand.u32 %s34, 1
        %s299 = scalar_lea.sflag [#allocation3], %s298
        %s300 = sand.u32 %s34, 1
        %s301 = smul.addr %s300, 64
        %s302 = scalar_lea.vmem [#allocation2], %s301
        %p303 = pneg %p47
        %p304 = pneg %p44
        %p305 = pneg %p68
        %p306 = pneg %p65
        %p307 = pneg %p89
        %p308 = pneg %p86
        %p309 = pneg %p110
        %p310 = pneg %p107
        %p311 = pneg %p131
        %p312 = pneg %p128
        %p313 = pneg %p152
        %p314 = pneg %p149
        %p315 = pneg %p173
        %p316 = pneg %p170
        %p317 = pneg %p199
        %p318 = pneg %p196
        %s319 = sand.u32 %s186, 1
        %s320 = scalar_lea.sflag [#allocation4], %s319
        %s321 = sand.u32 %s186, 1
        %s322 = smul.addr %s321, 64
        %s323 = scalar_lea.vmem [#allocation9], %s322
        %v324 = vld [vmem:[%s1] sm:$0xff]
        %v325 = vld [vmem:[%s1 + $0x8] sm:$0xff]
        %v326 = vld [vmem:[%s1 + $0x10] sm:$0xff]
        %v327 = vld [vmem:[%s1 + $0x18] sm:$0xff]
        %v328 = vld [vmem:[%s2] sm:$0x1]
        %v329 = vld [vmem:[%s3] sm:$0xff]
        %v330 = vld [vmem:[%s3 + $0x8] sm:$0xff]
        %v331 = vld [vmem:[%s3 + $0x10] sm:$0xff]
        %v332 = vld [vmem:[%s3 + $0x18] sm:$0xff]
        %v333 = vld [vmem:[%s4] sm:$0xff]
        %v334 = vld [vmem:[%s4 + $0x8] sm:$0xff]
        %v335 = vld [vmem:[%s4 + $0x10] sm:$0xff]
        %v336 = vld [vmem:[%s4 + $0x18] sm:$0xff]
        %s337 = sld [smem:[#allocation6]]
        %s338 = sld [smem:[#allocation6 + $0x1]]
        %s339 = sld [smem:[#allocation6 + $0x2]]
        %s340 = sld [smem:[#allocation6 + $0x3]]
        %s341 = sld [smem:[#allocation6 + $0x4]]
        %s342 = sld [smem:[#allocation6 + $0x5]]
        %s343 = sld [smem:[#allocation6 + $0x6]]
        %s344 = sld [smem:[#allocation6 + $0x7]]
        %s345 = sld [smem:[#allocation6 + $0x8]]
        %s346 = sld [smem:[#allocation6 + $0x9]]
        %s347 = sld [smem:[#allocation6 + $0xa]]
        %s348 = sld [smem:[#allocation6 + $0xb]]
        %s349 = sld [smem:[#allocation6 + $0xc]]
        %s350 = sld [smem:[#allocation6 + $0xd]]
        %s351 = sld [smem:[#allocation6 + $0xe]]
        %s352 = sld [smem:[#allocation6 + $0xf]]
        %s353 = sld [smem:[#allocation6 + $0x10]]
        %s354 = sld [smem:[#allocation6 + $0x11]]
        %s355 = sld [smem:[#allocation6 + $0x12]]
        %s356 = sld [smem:[#allocation6 + $0x13]]
        %s357 = sld [smem:[#allocation6 + $0x14]]
        %s358 = sld [smem:[#allocation6 + $0x15]]
        %s359 = sld [smem:[#allocation6 + $0x16]]
        %s360 = sld [smem:[#allocation6 + $0x17]]
        %s361 = sld [smem:[#allocation6 + $0x18]]
        %s362 = sld [smem:[#allocation6 + $0x19]]
        %s363 = sld [smem:[#allocation6 + $0x1a]]
        %s364 = sld [smem:[#allocation6 + $0x1b]]
        %s365 = sld [smem:[#allocation6 + $0x1c]]
        %s366 = sld [smem:[#allocation6 + $0x1d]]
        %s367 = sld [smem:[#allocation6 + $0x1e]]
        %s368 = sld [smem:[#allocation6 + $0x1f]]
        %s369 = sld [smem:[#allocation6 + $0x20]]
        %s370 = sld [smem:[#allocation6 + $0x21]]
        %s371 = sld [smem:[#allocation6 + $0x22]]
        %s372 = sld [smem:[#allocation6 + $0x23]]
        %s373 = sld [smem:[#allocation6 + $0x24]]
        %s374 = sld [smem:[#allocation6 + $0x25]]
        %s375 = sld [smem:[#allocation6 + $0x26]]
        %s376 = sld [smem:[#allocation6 + $0x27]]
        %s377 = sld [smem:[#allocation6 + $0x28]]
        %s378 = sld [smem:[#allocation6 + $0x29]]
        %s379 = sld [smem:[#allocation6 + $0x2a]]
        %s380 = sld [smem:[#allocation6 + $0x2b]]
        %s381 = sld [smem:[#allocation6 + $0x2c]]
        %s382 = sld [smem:[#allocation6 + $0x2d]]
        %s383 = sld [smem:[#allocation6 + $0x2e]]
        %s384 = sld [smem:[#allocation6 + $0x2f]]
        %s385 = sld [smem:[#allocation6 + $0x30]]
        %s386 = sld [smem:[#allocation6 + $0x31]]
        %s387 = sld [smem:[#allocation6 + $0x32]]
        %s388 = sld [smem:[#allocation6 + $0x33]]
        %s389 = sld [smem:[#allocation6 + $0x34]]
        %s390 = sld [smem:[#allocation6 + $0x35]]
        %s391 = sld [smem:[#allocation6 + $0x36]]
        %s392 = sld [smem:[#allocation6 + $0x37]]
        %s393 = sld [smem:[#allocation6 + $0x38]]
        %s394 = sld [smem:[#allocation6 + $0x39]]
        %s395 = sld [smem:[#allocation6 + $0x3a]]
        %s396 = sld [smem:[#allocation6 + $0x3b]]
        %s397 = sld [smem:[#allocation6 + $0x3c]]
        %s398 = sld [smem:[#allocation6 + $0x3d]]
        %s399 = sld [smem:[#allocation6 + $0x3e]]
        %s400 = sld [smem:[#allocation6 + $0x3f]]
        %s401 = sld [smem:[#allocation6 + $0x40]]
        %s402 = sld [smem:[#allocation6 + $0x41]]
        %s403 = sld [smem:[#allocation6 + $0x42]]
        %s404 = sld [smem:[#allocation6 + $0x43]]
        %s405 = sld [smem:[#allocation6 + $0x44]]
        %s406 = sld [smem:[#allocation6 + $0x45]]
        %s407 = sld [smem:[#allocation6 + $0x46]]
        %s408 = sld [smem:[#allocation6 + $0x47]]
        %s409 = sld [smem:[#allocation6 + $0x48]]
        %s410 = sld [smem:[#allocation6 + $0x49]]
        %s411 = sld [smem:[#allocation6 + $0x4a]]
        %s412 = sld [smem:[#allocation6 + $0x4b]]
        %s413 = sld [smem:[#allocation6 + $0x4c]]
        %s414 = sld [smem:[#allocation6 + $0x4d]]
        %s415 = sld [smem:[#allocation6 + $0x4e]]
        %s416 = sld [smem:[#allocation6 + $0x4f]]
        %s417 = sld [smem:[#allocation6 + $0x50]]
        %s418 = sld [smem:[#allocation6 + $0x51]]
        %s419 = sld [smem:[#allocation6 + $0x52]]
        %s420 = sld [smem:[#allocation6 + $0x53]]
        %s421 = sld [smem:[#allocation6 + $0x54]]
        %s422 = sld [smem:[#allocation6 + $0x55]]
        %s423 = sld [smem:[#allocation6 + $0x56]]
        %s424 = sld [smem:[#allocation6 + $0x57]]
        %s425 = sld [smem:[#allocation6 + $0x58]]
        %s426 = sld [smem:[#allocation6 + $0x59]]
        %s427 = sld [smem:[#allocation6 + $0x5a]]
        %s428 = sld [smem:[#allocation6 + $0x5b]]
        %s429 = sld [smem:[#allocation6 + $0x5c]]
        %s430 = sld [smem:[#allocation6 + $0x5d]]
        %s431 = sld [smem:[#allocation6 + $0x5e]]
        %s432 = sld [smem:[#allocation6 + $0x5f]]
        %s433 = sld [smem:[#allocation6 + $0x60]]
        %s434 = sld [smem:[#allocation6 + $0x61]]
        %s435 = sld [smem:[#allocation7]]
        %s436 = sld [smem:[#allocation7 + $0x1]]
        %v437 = vlaneseq
        %v438 = vand.u32 %v437, 127
        %v439 = vadd.s32 %v438, 128
        %v440 = vand.u32 %v438, 15
        %v441 = vand.u32 %v439, 15
        %vm442 = vcmp.ge.s32.totalorder %v440, 3
        %vm443 = vcmp.ge.s32.totalorder %v441, 3
        %vm444 = vcmp.le.s32.totalorder %v440, 18
        %vm445 = vcmp.le.s32.totalorder %v441, 18
        %vm446 = vmand %vm442, %vm444
        %vm447 = vmand %vm443, %vm445
        %vm448 = vcmp.ge.s32.totalorder %v440, 2
        %vm449 = vcmp.ge.s32.totalorder %v441, 2
        %vm450 = vcmp.le.s32.totalorder %v440, 17
        %vm451 = vcmp.le.s32.totalorder %v441, 17
        %vm452 = vmand %vm448, %vm450
        %vm453 = vmand %vm449, %vm451
        %vm454 = vcmp.ge.s32.totalorder %v440, 1
        %vm455 = vcmp.ge.s32.totalorder %v441, 1
        %vm456 = vcmp.le.s32.totalorder %v440, 16
        %vm457 = vcmp.le.s32.totalorder %v441, 16
        %vm458 = vmand %vm454, %vm456
        %vm459 = vmand %vm455, %vm457
        %vm460 = vcmp.ge.s32.totalorder %v440, 0
        %vm461 = vcmp.ge.s32.totalorder %v441, 0
        %vm462 = vcmp.le.s32.totalorder %v440, 15
        %vm463 = vcmp.le.s32.totalorder %v441, 15
        %vm464 = vmand %vm460, %vm462
        %vm465 = vmand %vm461, %vm463
        %vm466 = vcmp.ge.s32.totalorder %v440, 4294967295
        %vm467 = vcmp.ge.s32.totalorder %v441, 4294967295
        %vm468 = vcmp.le.s32.totalorder %v440, 14
        %vm469 = vcmp.le.s32.totalorder %v441, 14
        %vm470 = vmand %vm466, %vm468
        %vm471 = vmand %vm467, %vm469
        %vm472 = vcmp.ge.s32.totalorder %v440, 4294967294
        %vm473 = vcmp.ge.s32.totalorder %v441, 4294967294
        %vm474 = vcmp.le.s32.totalorder %v440, 13
        %vm475 = vcmp.le.s32.totalorder %v441, 13
        %vm476 = vmand %vm472, %vm474
        %vm477 = vmand %vm473, %vm475
        %vm478 = vcmp.ge.s32.totalorder %v440, 4294967293
        %vm479 = vcmp.ge.s32.totalorder %v441, 4294967293
        %vm480 = vcmp.le.s32.totalorder %v440, 12
        %vm481 = vcmp.le.s32.totalorder %v441, 12
        %vm482 = vmand %vm478, %vm480
        %vm483 = vmand %vm479, %vm481
        %vm484 = vcmp.eq.s32.totalorder %v438, 0
        %v485 = vld [vmem:[%s284] sm:$0xff]
        %v486 = vld [vmem:[%s284 + $0x8] sm:$0xff]
        %v487 = vld [vmem:[%s284 + $0x10] sm:$0xff]
        %v488 = vld [vmem:[%s284 + $0x18] sm:$0xff]
        %v489 = vld [vmem:[%s284 + $0x20] sm:$0xff]
        %v490 = vld [vmem:[%s284 + $0x28] sm:$0xff]
        %v491 = vld [vmem:[%s284 + $0x30] sm:$0xff]
        %v492 = vld [vmem:[%s284 + $0x38] sm:$0xff]
        %v493 = vadd.f32 %v485, %v486
        %494 = vadd.xlane.f32.xlu0 %v493
        %v495 = vpop.xlane.xlu0 %494
        %v496 = vadd.f32 %v487, %v488
        %497 = vadd.xlane.f32.xlu0 %v496
        %v498 = vpop.xlane.xlu0 %497
        %v499 = vadd.f32 %v489, %v490
        %500 = vadd.xlane.f32.xlu0 %v499
        %v501 = vpop.xlane.xlu0 %500
        %v502 = vadd.f32 %v491, %v492
        %503 = vadd.xlane.f32.xlu0 %v502
        %v504 = vpop.xlane.xlu0 %503
        %v505 = vmul.f32 %v495, 0.00390625
        %v506 = vmul.f32 %v498, 0.00390625
        %v507 = vmul.f32 %v501, 0.00390625
        %v508 = vmul.f32 %v504, 0.00390625
        %v509 = vmax.f32 %v485, %v486
        %510 = vmax.xlane.f32.xlu0 %v509
        %v511 = vpop.xlane.xlu0 %510
        %v512 = vmax.f32 %v487, %v488
        %513 = vmax.xlane.f32.xlu0 %v512
        %v514 = vpop.xlane.xlu0 %513
        %v515 = vmax.f32 %v489, %v490
        %516 = vmax.xlane.f32.xlu0 %v515
        %v517 = vpop.xlane.xlu0 %516
        %v518 = vmax.f32 %v491, %v492
        %519 = vmax.xlane.f32.xlu0 %v518
        %v520 = vpop.xlane.xlu0 %519
        %v521 = vsel %vm484, %v505, %v511
        %v522 = vsel %vm484, %v506, %v514
        %v523 = vsel %vm484, %v507, %v517
        %v524 = vsel %vm484, %v508, %v520
        %v525 = vadd.f32 %v333, %v333
        %v526 = vadd.f32 %v334, %v334
        %v527 = vadd.f32 %v335, %v335
        %v528 = vadd.f32 %v336, %v336
        %530 = vset.pattern.permute.xlu0 0
        %531 = vperm.xlu0 %530, %v324
        %v532 = vpop.permute.xlu0 %531
        %535 = vset.pattern.permute.xlu0 0
        %536 = vperm.xlu0 %535, %v325
        %v537 = vpop.permute.xlu0 %536
        %540 = vset.pattern.permute.xlu0 0
        %541 = vperm.xlu0 %540, %v326
        %v542 = vpop.permute.xlu0 %541
        %545 = vset.pattern.permute.xlu0 0
        %546 = vperm.xlu0 %545, %v327
        %v547 = vpop.permute.xlu0 %546
        %v549 = vmul.f32 %v532, %v521
        %v550 = vmul.f32 %v537, %v522
        %v551 = vmul.f32 %v542, %v523
        %v552 = vmul.f32 %v547, %v524
        %vm553 = vcmask 15360
        %v554 = vsel %vm553, %v549, 0.0
        %v555 = vsel %vm553, %v550, 0.0
        %v556 = vadd.f32 %v554, %v555
        %v557 = vsel %vm553, %v551, 0.0
        %v558 = vadd.f32 %v556, %v557
        %v559 = vsel %vm553, %v552, 0.0
        %v560 = vadd.f32 %v558, %v559
        %v561 = vrot.slane %v560, 4
        %v562 = vadd.f32 %v560, %v561
        %v563 = vrot.slane %v562, 2
        %v564 = vadd.f32 %v562, %v563
        %v565 = vrot.slane %v564, 1
        %v566 = vadd.f32 %v564, %v565
        %568 = vset.pattern.permute.xlu0 0
        %569 = vperm.xlu0 %568, %v328
        %v570 = vpop.permute.xlu0 %569
        %v572 = vlaneseq
        %v573 = vshrl.u32 %v572, 7
        %v574 = vsub.s32 0, %v573
        %v575 = vrot.slane %v570, %v574
        %v576 = vadd.f32 %v566, %v575
        %v577 = vmax.f32 %v576, 0.0
        %579 = vrot.lane.b32.xlu0 %v577, 127
        %v580 = vpop.permute.xlu0 %579
        %v582 = vadd.f32 %v577, %v580
        %v583 = vlaneseq
        %v584 = vshrl.u32 %v583, 7
        %v585 = vsub.s32 0, %v584
        %v586 = vrot.slane %v582, %v585
        %v587 = vmul.f32 %v329, %v586
        %v588 = vmul.f32 %v330, %v586
        %v589 = vmul.f32 %v331, %v586
        %v590 = vmul.f32 %v332, %v586
        %v591 = vadd.f32 %v525, %v587
        %v592 = vadd.f32 %v526, %v588
        %v593 = vadd.f32 %v527, %v589
        %v594 = vadd.f32 %v528, %v590
        %595 = vset.pattern.permute.xlu0 1
        %596 = vperm.xlu0 %595, %v324
        %v597 = vpop.permute.xlu0 %596
        %599 = vset.pattern.permute.xlu0 1
        %600 = vperm.xlu0 %599, %v325
        %v601 = vpop.permute.xlu0 %600
        %603 = vset.pattern.permute.xlu0 1
        %604 = vperm.xlu0 %603, %v326
        %v605 = vpop.permute.xlu0 %604
        %607 = vset.pattern.permute.xlu0 1
        %608 = vperm.xlu0 %607, %v327
        %v609 = vpop.permute.xlu0 %608
        %v611 = vmul.f32 %v597, %v521
        %v612 = vmul.f32 %v601, %v522
        %v613 = vmul.f32 %v605, %v523
        %v614 = vmul.f32 %v609, %v524
        %v615 = vsel %vm553, %v611, 0.0
        %v616 = vsel %vm553, %v612, 0.0
        %v617 = vadd.f32 %v615, %v616
        %v618 = vsel %vm553, %v613, 0.0
        %v619 = vadd.f32 %v617, %v618
        %v620 = vsel %vm553, %v614, 0.0
        %v621 = vadd.f32 %v619, %v620
        %v622 = vrot.slane %v621, 4
        %v623 = vadd.f32 %v621, %v622
        %v624 = vrot.slane %v623, 2
        %v625 = vadd.f32 %v623, %v624
        %v626 = vrot.slane %v625, 1
        %v627 = vadd.f32 %v625, %v626
        %628 = vset.pattern.permute.xlu0 1
        %629 = vperm.xlu0 %628, %v328
        %v630 = vpop.permute.xlu0 %629
        %v632 = vlaneseq
        %v633 = vshrl.u32 %v632, 7
        %v634 = vsub.s32 0, %v633
        %v635 = vrot.slane %v630, %v634
        %v636 = vadd.f32 %v627, %v635
        %v637 = vmax.f32 %v636, 0.0
        %639 = vrot.lane.b32.xlu0 %v637, 127
        %v640 = vpop.permute.xlu0 %639
        %v642 = vadd.f32 %v637, %v640
        %v643 = vlaneseq
        %v644 = vshrl.u32 %v643, 7
        %v645 = vsub.s32 0, %v644
        %v646 = vrot.slane %v642, %v645
        %648 = vrot.lane.b32.xlu0 %v646, 1
        %v649 = vpop.permute.xlu0 %648
        %v651 = vmul.f32 %v329, %v649
        %v652 = vmul.f32 %v330, %v649
        %v653 = vmul.f32 %v331, %v649
        %v654 = vmul.f32 %v332, %v649
        %659 = vrot.lane.b32.xlu0 %v651, 127
        %v660 = vpop.permute.xlu0 %659
        %661 = vrot.lane.b32.xlu0 %v652, 127
        %v662 = vpop.permute.xlu0 %661
        %663 = vrot.lane.b32.xlu0 %v653, 127
        %v664 = vpop.permute.xlu0 %663
        %665 = vrot.lane.b32.xlu0 %v654, 127
        %v666 = vpop.permute.xlu0 %665
        %v671 = vadd.f32 %v591, %v660
        %v672 = vadd.f32 %v592, %v662
        %v673 = vadd.f32 %v593, %v664
        %v674 = vadd.f32 %v594, %v666
        %v675 = vxor.u32 %v671, 2147483648
        %v676 = vxor.u32 %v672, 2147483648
        %v677 = vxor.u32 %v673, 2147483648
        %v678 = vxor.u32 %v674, 2147483648
        %v679 = vmul.f32 %v675, 1.442695
        %v680 = vpow.pop %v679
        %v681 = vmul.f32 %v676, 1.442695
        %v682 = vpow.pop %v681
        %v683 = vmul.f32 %v677, 1.442695
        %v684 = vpow.pop %v683
        %v685 = vmul.f32 %v678, 1.442695
        %v686 = vpow.pop %v685
        %v687 = vadd.f32 %v680, 1.0
        %v688 = vadd.f32 %v682, 1.0
        %v689 = vadd.f32 %v684, 1.0
        %v690 = vadd.f32 %v686, 1.0
        %v691 = vrcp.pop %v687
        %v692 = vmul.f32 1.0, %v691
        %v693 = vrcp.pop %v688
        %v694 = vmul.f32 1.0, %v693
        %v695 = vrcp.pop %v689
        %v696 = vmul.f32 1.0, %v695
        %v697 = vrcp.pop %v690
        %v698 = vmul.f32 1.0, %v697
        %700 = vset.pattern.permute.xlu0 0
        %701 = vperm.xlu0 %700, %v692
        %v702 = vpop.permute.xlu0 %701
        %705 = vset.pattern.permute.xlu0 0
        %706 = vperm.xlu0 %705, %v694
        %v707 = vpop.permute.xlu0 %706
        %710 = vset.pattern.permute.xlu0 0
        %711 = vperm.xlu0 %710, %v696
        %v712 = vpop.permute.xlu0 %711
        %715 = vset.pattern.permute.xlu0 0
        %716 = vperm.xlu0 %715, %v698
        %v717 = vpop.permute.xlu0 %716
        %v719 = vmul.f32 %v485, %v702
        %v720 = vmul.f32 %v486, %v702
        %v721 = vmul.f32 %v487, %v707
        %v722 = vmul.f32 %v488, %v707
        %v723 = vmul.f32 %v489, %v712
        %v724 = vmul.f32 %v490, %v712
        %v725 = vmul.f32 %v491, %v717
        %v726 = vmul.f32 %v492, %v717
        %v727 = vmax.f32 %v719, %v723
        %v728 = vmax.f32 %v721, %v725
        %v729 = vmax.f32 %v727, %v728
        %v730 = vrot.slane %v729, 4
        %v731 = vmax.f32 %v729, %v730
        %v732 = vrot.slane %v731, 2
        %v733 = vmax.f32 %v731, %v732
        %v734 = vrot.slane %v733, 1
        %v735 = vmax.f32 %v733, %v734
        %v736 = vmax.f32 %v720, %v724
        %v737 = vmax.f32 %v722, %v726
        %v738 = vmax.f32 %v736, %v737
        %v739 = vrot.slane %v738, 4
        %v740 = vmax.f32 %v738, %v739
        %v741 = vrot.slane %v740, 2
        %v742 = vmax.f32 %v740, %v741
        %v743 = vrot.slane %v742, 1
        %v744 = vmax.f32 %v742, %v743
        %v745 = vadd.f32 %v719, %v721
        %v746 = vadd.f32 %v745, %v723
        %v747 = vadd.f32 %v746, %v725
        %v748 = vrot.slane %v747, 4
        %v749 = vadd.f32 %v747, %v748
        %v750 = vrot.slane %v749, 2
        %v751 = vadd.f32 %v749, %v750
        %v752 = vrot.slane %v751, 1
        %v753 = vadd.f32 %v751, %v752
        %v754 = vadd.f32 %v720, %v722
        %v755 = vadd.f32 %v754, %v724
        %v756 = vadd.f32 %v755, %v726
        %v757 = vrot.slane %v756, 4
        %v758 = vadd.f32 %v756, %v757
        %v759 = vrot.slane %v758, 2
        %v760 = vadd.f32 %v758, %v759
        %v761 = vrot.slane %v760, 1
        %v762 = vadd.f32 %v760, %v761
        %v763 = vmul.f32 %v753, 0.03125
        %v764 = vmul.f32 %v762, 0.03125
        %v765 = vstv %s337
        %v766 = vmul.f32 %v765, 0.0
        %v767 = vmul.f32 %v765, %v735
        %v768 = vmul.f32 %v765, %v744
        %v769 = vadd.f32 %v766, 0.0
        %v770 = vadd.f32 %v767, 0.0
        %v771 = vadd.f32 %v768, 0.0
        %v772 = vstv %s386
        %v773 = vmul.f32 %v772, 0.0
        %v774 = vmul.f32 %v772, %v763
        %v775 = vmul.f32 %v772, %v764
        %v776 = vadd.f32 %v769, %v773
        %v777 = vadd.f32 %v770, %v774
        %v778 = vadd.f32 %v771, %v775
        %v779 = vstv %s344
        %v780 = vmul.f32 %v779, 0.0
        %v781 = vmul.f32 %v779, %v735
        %v782 = vmul.f32 %v779, %v744
        %786 = vrot.lane.b32.xlu0 %v780, 112
        %v787 = vpop.permute.xlu0 %786
        %788 = vrot.lane.b32.xlu0 %v781, 112
        %v789 = vpop.permute.xlu0 %788
        %790 = vrot.lane.b32.xlu0 %v782, 112
        %v791 = vpop.permute.xlu0 %790
        %vm792 = vcmask 916480
        %v793 = vsel %vm792, %v787, %v789
        %v794 = vsel %vm792, %v789, %v791
        %v798 = vadd.f32 %v776, %v793
        %v799 = vadd.f32 %v777, %v794
        %v800 = vadd.f32 %v778, %v791
        %v801 = vstv %s393
        %v802 = vmul.f32 %v801, 0.0
        %v803 = vmul.f32 %v801, %v763
        %v804 = vmul.f32 %v801, %v764
        %808 = vrot.lane.b32.xlu0 %v802, 112
        %v809 = vpop.permute.xlu0 %808
        %810 = vrot.lane.b32.xlu0 %v803, 112
        %v811 = vpop.permute.xlu0 %810
        %812 = vrot.lane.b32.xlu0 %v804, 112
        %v813 = vpop.permute.xlu0 %812
        %v814 = vsel %vm792, %v809, %v811
        %v815 = vsel %vm792, %v811, %v813
        %v819 = vadd.f32 %v798, %v814
        %v820 = vadd.f32 %v799, %v815
        %v821 = vadd.f32 %v800, %v813
        %v822 = vstv %s351
        %v823 = vmul.f32 %v822, 0.0
        %v824 = vmul.f32 %v822, %v735
        %v825 = vmul.f32 %v822, %v744
        %829 = vrot.lane.b32.xlu0 %v823, 96
        %v830 = vpop.permute.xlu0 %829
        %831 = vrot.lane.b32.xlu0 %v824, 96
        %v832 = vpop.permute.xlu0 %831
        %833 = vrot.lane.b32.xlu0 %v825, 96
        %v834 = vpop.permute.xlu0 %833
        %vm835 = vcmask 785408
        %v836 = vsel %vm835, %v830, %v832
        %v837 = vsel %vm835, %v832, %v834
        %v841 = vadd.f32 %v819, %v836
        %v842 = vadd.f32 %v820, %v837
        %v843 = vadd.f32 %v821, %v834
        %v844 = vstv %s400
        %v845 = vmul.f32 %v844, 0.0
        %v846 = vmul.f32 %v844, %v763
        %v847 = vmul.f32 %v844, %v764
        %851 = vrot.lane.b32.xlu0 %v845, 96
        %v852 = vpop.permute.xlu0 %851
        %853 = vrot.lane.b32.xlu0 %v846, 96
        %v854 = vpop.permute.xlu0 %853
        %855 = vrot.lane.b32.xlu0 %v847, 96
        %v856 = vpop.permute.xlu0 %855
        %v857 = vsel %vm835, %v852, %v854
        %v858 = vsel %vm835, %v854, %v856
        %v862 = vadd.f32 %v841, %v857
        %v863 = vadd.f32 %v842, %v858
        %v864 = vadd.f32 %v843, %v856
        %v865 = vstv %s358
        %v866 = vmul.f32 %v865, 0.0
        %v867 = vmul.f32 %v865, %v735
        %v868 = vmul.f32 %v865, %v744
        %872 = vrot.lane.b32.xlu0 %v866, 80
        %v873 = vpop.permute.xlu0 %872
        %874 = vrot.lane.b32.xlu0 %v867, 80
        %v875 = vpop.permute.xlu0 %874
        %876 = vrot.lane.b32.xlu0 %v868, 80
        %v877 = vpop.permute.xlu0 %876
        %vm878 = vcmask 654336
        %v879 = vsel %vm878, %v873, %v875
        %v880 = vsel %vm878, %v875, %v877
        %v884 = vadd.f32 %v862, %v879
        %v885 = vadd.f32 %v863, %v880
        %v886 = vadd.f32 %v864, %v877
        %v887 = vstv %s407
        %v888 = vmul.f32 %v887, 0.0
        %v889 = vmul.f32 %v887, %v763
        %v890 = vmul.f32 %v887, %v764
        %894 = vrot.lane.b32.xlu0 %v888, 80
        %v895 = vpop.permute.xlu0 %894
        %896 = vrot.lane.b32.xlu0 %v889, 80
        %v897 = vpop.permute.xlu0 %896
        %898 = vrot.lane.b32.xlu0 %v890, 80
        %v899 = vpop.permute.xlu0 %898
        %v900 = vsel %vm878, %v895, %v897
        %v901 = vsel %vm878, %v897, %v899
        %v905 = vadd.f32 %v884, %v900
        %v906 = vadd.f32 %v885, %v901
        %v907 = vadd.f32 %v886, %v899
        %v908 = vstv %s365
        %v909 = vmul.f32 %v908, %v735
        %v910 = vmul.f32 %v908, %v744
        %v911 = vmul.f32 %v908, 0.0
        %915 = vrot.lane.b32.xlu0 %v909, 64
        %v916 = vpop.permute.xlu0 %915
        %917 = vrot.lane.b32.xlu0 %v910, 64
        %v918 = vpop.permute.xlu0 %917
        %919 = vrot.lane.b32.xlu0 %v911, 64
        %v920 = vpop.permute.xlu0 %919
        %vm921 = vcmask 523264
        %v922 = vsel %vm921, %v916, %v918
        %v923 = vsel %vm921, %v918, %v920
        %v927 = vadd.f32 %v905, %v916
        %v928 = vadd.f32 %v906, %v922
        %v929 = vadd.f32 %v907, %v923
        %v930 = vstv %s414
        %v931 = vmul.f32 %v930, %v763
        %v932 = vmul.f32 %v930, %v764
        %v933 = vmul.f32 %v930, 0.0
        %937 = vrot.lane.b32.xlu0 %v931, 64
        %v938 = vpop.permute.xlu0 %937
        %939 = vrot.lane.b32.xlu0 %v932, 64
        %v940 = vpop.permute.xlu0 %939
        %941 = vrot.lane.b32.xlu0 %v933, 64
        %v942 = vpop.permute.xlu0 %941
        %v943 = vsel %vm921, %v938, %v940
        %v944 = vsel %vm921, %v940, %v942
        %v948 = vadd.f32 %v927, %v938
        %v949 = vadd.f32 %v928, %v943
        %v950 = vadd.f32 %v929, %v944
        %v951 = vstv %s372
        %v952 = vmul.f32 %v951, %v735
        %v953 = vmul.f32 %v951, %v744
        %v954 = vmul.f32 %v951, 0.0
        %958 = vrot.lane.b32.xlu0 %v952, 48
        %v959 = vpop.permute.xlu0 %958
        %960 = vrot.lane.b32.xlu0 %v953, 48
        %v961 = vpop.permute.xlu0 %960
        %962 = vrot.lane.b32.xlu0 %v954, 48
        %v963 = vpop.permute.xlu0 %962
        %vm964 = vcmask 392192
        %v965 = vsel %vm964, %v959, %v961
        %v966 = vsel %vm964, %v961, %v963
        %v970 = vadd.f32 %v948, %v959
        %v971 = vadd.f32 %v949, %v965
        %v972 = vadd.f32 %v950, %v966
        %v973 = vstv %s421
        %v974 = vmul.f32 %v973, %v763
        %v975 = vmul.f32 %v973, %v764
        %v976 = vmul.f32 %v973, 0.0
        %980 = vrot.lane.b32.xlu0 %v974, 48
        %v981 = vpop.permute.xlu0 %980
        %982 = vrot.lane.b32.xlu0 %v975, 48
        %v983 = vpop.permute.xlu0 %982
        %984 = vrot.lane.b32.xlu0 %v976, 48
        %v985 = vpop.permute.xlu0 %984
        %v986 = vsel %vm964, %v981, %v983
        %v987 = vsel %vm964, %v983, %v985
        %v991 = vadd.f32 %v970, %v981
        %v992 = vadd.f32 %v971, %v986
        %v993 = vadd.f32 %v972, %v987
        %v994 = vstv %s379
        %v995 = vmul.f32 %v994, %v735
        %v996 = vmul.f32 %v994, %v744
        %v997 = vmul.f32 %v994, 0.0
        %1001 = vrot.lane.b32.xlu0 %v995, 32
        %v1002 = vpop.permute.xlu0 %1001
        %1003 = vrot.lane.b32.xlu0 %v996, 32
        %v1004 = vpop.permute.xlu0 %1003
        %1005 = vrot.lane.b32.xlu0 %v997, 32
        %v1006 = vpop.permute.xlu0 %1005
        %vm1007 = vcmask 261120
        %v1008 = vsel %vm1007, %v1002, %v1004
        %v1009 = vsel %vm1007, %v1004, %v1006
        %v1013 = vadd.f32 %v991, %v1002
        %v1014 = vadd.f32 %v992, %v1008
        %v1015 = vadd.f32 %v993, %v1009
        %v1016 = vstv %s428
        %v1017 = vmul.f32 %v1016, %v763
        %v1018 = vmul.f32 %v1016, %v764
        %v1019 = vmul.f32 %v1016, 0.0
        %1023 = vrot.lane.b32.xlu0 %v1017, 32
        %v1024 = vpop.permute.xlu0 %1023
        %1025 = vrot.lane.b32.xlu0 %v1018, 32
        %v1026 = vpop.permute.xlu0 %1025
        %1027 = vrot.lane.b32.xlu0 %v1019, 32
        %v1028 = vpop.permute.xlu0 %1027
        %v1029 = vsel %vm1007, %v1024, %v1026
        %v1030 = vsel %vm1007, %v1026, %v1028
        %v1034 = vadd.f32 %v1013, %v1024
        %v1035 = vadd.f32 %v1014, %v1029
        %v1036 = vadd.f32 %v1015, %v1030
        %1040 = vrot.lane.b32.xlu0 %v1034, 51
        %v1041 = vpop.permute.xlu0 %1040
        %1042 = vrot.lane.b32.xlu0 %v1035, 51
        %v1043 = vpop.permute.xlu0 %1042
        %1044 = vrot.lane.b32.xlu0 %v1036, 51
        %v1045 = vpop.permute.xlu0 %1044
        %vm1046 = vcmask 416768
        %v1047 = vsel %vm1046, %v1041, %v1043
        %v1048 = vsel %vm1046, %v1043, %v1045
        %v1051 = vsel %vm446, %v1047, 0.0
        %v1052 = vsel %vm447, %v1048, 0.0
        %v1053 = vadd.f32 %v1051, 0.0
        %v1054 = vadd.f32 %v1052, 0.0
        %v1055 = vstv %s338
        %v1056 = vmul.f32 %v1055, 0.0
        %v1057 = vmul.f32 %v1055, %v735
        %v1058 = vmul.f32 %v1055, %v744
        %v1059 = vadd.f32 %v1056, 0.0
        %v1060 = vadd.f32 %v1057, 0.0
        %v1061 = vadd.f32 %v1058, 0.0
        %v1062 = vstv %s387
        %v1063 = vmul.f32 %v1062, 0.0
        %v1064 = vmul.f32 %v1062, %v763
        %v1065 = vmul.f32 %v1062, %v764
        %v1066 = vadd.f32 %v1059, %v1063
        %v1067 = vadd.f32 %v1060, %v1064
        %v1068 = vadd.f32 %v1061, %v1065
        %v1069 = vstv %s345
        %v1070 = vmul.f32 %v1069, 0.0
        %v1071 = vmul.f32 %v1069, %v735
        %v1072 = vmul.f32 %v1069, %v744
        %1076 = vrot.lane.b32.xlu0 %v1070, 112
        %v1077 = vpop.permute.xlu0 %1076
        %1078 = vrot.lane.b32.xlu0 %v1071, 112
        %v1079 = vpop.permute.xlu0 %1078
        %1080 = vrot.lane.b32.xlu0 %v1072, 112
        %v1081 = vpop.permute.xlu0 %1080
        %v1082 = vsel %vm792, %v1077, %v1079
        %v1083 = vsel %vm792, %v1079, %v1081
        %v1087 = vadd.f32 %v1066, %v1082
        %v1088 = vadd.f32 %v1067, %v1083
        %v1089 = vadd.f32 %v1068, %v1081
        %v1090 = vstv %s394
        %v1091 = vmul.f32 %v1090, 0.0
        %v1092 = vmul.f32 %v1090, %v763
        %v1093 = vmul.f32 %v1090, %v764
        %1097 = vrot.lane.b32.xlu0 %v1091, 112
        %v1098 = vpop.permute.xlu0 %1097
        %1099 = vrot.lane.b32.xlu0 %v1092, 112
        %v1100 = vpop.permute.xlu0 %1099
        %1101 = vrot.lane.b32.xlu0 %v1093, 112
        %v1102 = vpop.permute.xlu0 %1101
        %v1103 = vsel %vm792, %v1098, %v1100
        %v1104 = vsel %vm792, %v1100, %v1102
        %v1108 = vadd.f32 %v1087, %v1103
        %v1109 = vadd.f32 %v1088, %v1104
        %v1110 = vadd.f32 %v1089, %v1102
        %v1111 = vstv %s352
        %v1112 = vmul.f32 %v1111, 0.0
        %v1113 = vmul.f32 %v1111, %v735
        %v1114 = vmul.f32 %v1111, %v744
        %1118 = vrot.lane.b32.xlu0 %v1112, 96
        %v1119 = vpop.permute.xlu0 %1118
        %1120 = vrot.lane.b32.xlu0 %v1113, 96
        %v1121 = vpop.permute.xlu0 %1120
        %1122 = vrot.lane.b32.xlu0 %v1114, 96
        %v1123 = vpop.permute.xlu0 %1122
        %v1124 = vsel %vm835, %v1119, %v1121
        %v1125 = vsel %vm835, %v1121, %v1123
        %v1129 = vadd.f32 %v1108, %v1124
        %v1130 = vadd.f32 %v1109, %v1125
        %v1131 = vadd.f32 %v1110, %v1123
        %v1132 = vstv %s401
        %v1133 = vmul.f32 %v1132, 0.0
        %v1134 = vmul.f32 %v1132, %v763
        %v1135 = vmul.f32 %v1132, %v764
        %1139 = vrot.lane.b32.xlu0 %v1133, 96
        %v1140 = vpop.permute.xlu0 %1139
        %1141 = vrot.lane.b32.xlu0 %v1134, 96
        %v1142 = vpop.permute.xlu0 %1141
        %1143 = vrot.lane.b32.xlu0 %v1135, 96
        %v1144 = vpop.permute.xlu0 %1143
        %v1145 = vsel %vm835, %v1140, %v1142
        %v1146 = vsel %vm835, %v1142, %v1144
        %v1150 = vadd.f32 %v1129, %v1145
        %v1151 = vadd.f32 %v1130, %v1146
        %v1152 = vadd.f32 %v1131, %v1144
        %v1153 = vstv %s359
        %v1154 = vmul.f32 %v1153, 0.0
        %v1155 = vmul.f32 %v1153, %v735
        %v1156 = vmul.f32 %v1153, %v744
        %1160 = vrot.lane.b32.xlu0 %v1154, 80
        %v1161 = vpop.permute.xlu0 %1160
        %1162 = vrot.lane.b32.xlu0 %v1155, 80
        %v1163 = vpop.permute.xlu0 %1162
        %1164 = vrot.lane.b32.xlu0 %v1156, 80
        %v1165 = vpop.permute.xlu0 %1164
        %v1166 = vsel %vm878, %v1161, %v1163
        %v1167 = vsel %vm878, %v1163, %v1165
        %v1171 = vadd.f32 %v1150, %v1166
        %v1172 = vadd.f32 %v1151, %v1167
        %v1173 = vadd.f32 %v1152, %v1165
        %v1174 = vstv %s408
        %v1175 = vmul.f32 %v1174, 0.0
        %v1176 = vmul.f32 %v1174, %v763
        %v1177 = vmul.f32 %v1174, %v764
        %1181 = vrot.lane.b32.xlu0 %v1175, 80
        %v1182 = vpop.permute.xlu0 %1181
        %1183 = vrot.lane.b32.xlu0 %v1176, 80
        %v1184 = vpop.permute.xlu0 %1183
        %1185 = vrot.lane.b32.xlu0 %v1177, 80
        %v1186 = vpop.permute.xlu0 %1185
        %v1187 = vsel %vm878, %v1182, %v1184
        %v1188 = vsel %vm878, %v1184, %v1186
        %v1192 = vadd.f32 %v1171, %v1187
        %v1193 = vadd.f32 %v1172, %v1188
        %v1194 = vadd.f32 %v1173, %v1186
        %v1195 = vstv %s366
        %v1196 = vmul.f32 %v1195, %v735
        %v1197 = vmul.f32 %v1195, %v744
        %v1198 = vmul.f32 %v1195, 0.0
        %1202 = vrot.lane.b32.xlu0 %v1196, 64
        %v1203 = vpop.permute.xlu0 %1202
        %1204 = vrot.lane.b32.xlu0 %v1197, 64
        %v1205 = vpop.permute.xlu0 %1204
        %1206 = vrot.lane.b32.xlu0 %v1198, 64
        %v1207 = vpop.permute.xlu0 %1206
        %v1208 = vsel %vm921, %v1203, %v1205
        %v1209 = vsel %vm921, %v1205, %v1207
        %v1213 = vadd.f32 %v1192, %v1203
        %v1214 = vadd.f32 %v1193, %v1208
        %v1215 = vadd.f32 %v1194, %v1209
        %v1216 = vstv %s415
        %v1217 = vmul.f32 %v1216, %v763
        %v1218 = vmul.f32 %v1216, %v764
        %v1219 = vmul.f32 %v1216, 0.0
        %1223 = vrot.lane.b32.xlu0 %v1217, 64
        %v1224 = vpop.permute.xlu0 %1223
        %1225 = vrot.lane.b32.xlu0 %v1218, 64
        %v1226 = vpop.permute.xlu0 %1225
        %1227 = vrot.lane.b32.xlu0 %v1219, 64
        %v1228 = vpop.permute.xlu0 %1227
        %v1229 = vsel %vm921, %v1224, %v1226
        %v1230 = vsel %vm921, %v1226, %v1228
        %v1234 = vadd.f32 %v1213, %v1224
        %v1235 = vadd.f32 %v1214, %v1229
        %v1236 = vadd.f32 %v1215, %v1230
        %v1237 = vstv %s373
        %v1238 = vmul.f32 %v1237, %v735
        %v1239 = vmul.f32 %v1237, %v744
        %v1240 = vmul.f32 %v1237, 0.0
        %1244 = vrot.lane.b32.xlu0 %v1238, 48
        %v1245 = vpop.permute.xlu0 %1244
        %1246 = vrot.lane.b32.xlu0 %v1239, 48
        %v1247 = vpop.permute.xlu0 %1246
        %1248 = vrot.lane.b32.xlu0 %v1240, 48
        %v1249 = vpop.permute.xlu0 %1248
        %v1250 = vsel %vm964, %v1245, %v1247
        %v1251 = vsel %vm964, %v1247, %v1249
        %v1255 = vadd.f32 %v1234, %v1245
        %v1256 = vadd.f32 %v1235, %v1250
        %v1257 = vadd.f32 %v1236, %v1251
        %v1258 = vstv %s422
        %v1259 = vmul.f32 %v1258, %v763
        %v1260 = vmul.f32 %v1258, %v764
        %v1261 = vmul.f32 %v1258, 0.0
        %1265 = vrot.lane.b32.xlu0 %v1259, 48
        %v1266 = vpop.permute.xlu0 %1265
        %1267 = vrot.lane.b32.xlu0 %v1260, 48
        %v1268 = vpop.permute.xlu0 %1267
        %1269 = vrot.lane.b32.xlu0 %v1261, 48
        %v1270 = vpop.permute.xlu0 %1269
        %v1271 = vsel %vm964, %v1266, %v1268
        %v1272 = vsel %vm964, %v1268, %v1270
        %v1276 = vadd.f32 %v1255, %v1266
        %v1277 = vadd.f32 %v1256, %v1271
        %v1278 = vadd.f32 %v1257, %v1272
        %v1279 = vstv %s380
        %v1280 = vmul.f32 %v1279, %v735
        %v1281 = vmul.f32 %v1279, %v744
        %v1282 = vmul.f32 %v1279, 0.0
        %1286 = vrot.lane.b32.xlu0 %v1280, 32
        %v1287 = vpop.permute.xlu0 %1286
        %1288 = vrot.lane.b32.xlu0 %v1281, 32
        %v1289 = vpop.permute.xlu0 %1288
        %1290 = vrot.lane.b32.xlu0 %v1282, 32
        %v1291 = vpop.permute.xlu0 %1290
        %v1292 = vsel %vm1007, %v1287, %v1289
        %v1293 = vsel %vm1007, %v1289, %v1291
        %v1297 = vadd.f32 %v1276, %v1287
        %v1298 = vadd.f32 %v1277, %v1292
        %v1299 = vadd.f32 %v1278, %v1293
        %v1300 = vstv %s429
        %v1301 = vmul.f32 %v1300, %v763
        %v1302 = vmul.f32 %v1300, %v764
        %v1303 = vmul.f32 %v1300, 0.0
        %1307 = vrot.lane.b32.xlu0 %v1301, 32
        %v1308 = vpop.permute.xlu0 %1307
        %1309 = vrot.lane.b32.xlu0 %v1302, 32
        %v1310 = vpop.permute.xlu0 %1309
        %1311 = vrot.lane.b32.xlu0 %v1303, 32
        %v1312 = vpop.permute.xlu0 %1311
        %v1313 = vsel %vm1007, %v1308, %v1310
        %v1314 = vsel %vm1007, %v1310, %v1312
        %v1318 = vadd.f32 %v1297, %v1308
        %v1319 = vadd.f32 %v1298, %v1313
        %v1320 = vadd.f32 %v1299, %v1314
        %1324 = vrot.lane.b32.xlu0 %v1318, 50
        %v1325 = vpop.permute.xlu0 %1324
        %1326 = vrot.lane.b32.xlu0 %v1319, 50
        %v1327 = vpop.permute.xlu0 %1326
        %1328 = vrot.lane.b32.xlu0 %v1320, 50
        %v1329 = vpop.permute.xlu0 %1328
        %vm1330 = vcmask 408576
        %v1331 = vsel %vm1330, %v1325, %v1327
        %v1332 = vsel %vm1330, %v1327, %v1329
        %v1335 = vsel %vm452, %v1331, 0.0
        %v1336 = vsel %vm453, %v1332, 0.0
        %v1337 = vadd.f32 %v1053, %v1335
        %v1338 = vadd.f32 %v1054, %v1336
        %v1339 = vstv %s339
        %v1340 = vmul.f32 %v1339, 0.0
        %v1341 = vmul.f32 %v1339, %v735
        %v1342 = vmul.f32 %v1339, %v744
        %v1343 = vadd.f32 %v1340, 0.0
        %v1344 = vadd.f32 %v1341, 0.0
        %v1345 = vadd.f32 %v1342, 0.0
        %v1346 = vstv %s388
        %v1347 = vmul.f32 %v1346, 0.0
        %v1348 = vmul.f32 %v1346, %v763
        %v1349 = vmul.f32 %v1346, %v764
        %v1350 = vadd.f32 %v1343, %v1347
        %v1351 = vadd.f32 %v1344, %v1348
        %v1352 = vadd.f32 %v1345, %v1349
        %v1353 = vstv %s346
        %v1354 = vmul.f32 %v1353, 0.0
        %v1355 = vmul.f32 %v1353, %v735
        %v1356 = vmul.f32 %v1353, %v744
        %1360 = vrot.lane.b32.xlu0 %v1354, 112
        %v1361 = vpop.permute.xlu0 %1360
        %1362 = vrot.lane.b32.xlu0 %v1355, 112
        %v1363 = vpop.permute.xlu0 %1362
        %1364 = vrot.lane.b32.xlu0 %v1356, 112
        %v1365 = vpop.permute.xlu0 %1364
        %v1366 = vsel %vm792, %v1361, %v1363
        %v1367 = vsel %vm792, %v1363, %v1365
        %v1371 = vadd.f32 %v1350, %v1366
        %v1372 = vadd.f32 %v1351, %v1367
        %v1373 = vadd.f32 %v1352, %v1365
        %v1374 = vstv %s395
        %v1375 = vmul.f32 %v1374, 0.0
        %v1376 = vmul.f32 %v1374, %v763
        %v1377 = vmul.f32 %v1374, %v764
        %1381 = vrot.lane.b32.xlu0 %v1375, 112
        %v1382 = vpop.permute.xlu0 %1381
        %1383 = vrot.lane.b32.xlu0 %v1376, 112
        %v1384 = vpop.permute.xlu0 %1383
        %1385 = vrot.lane.b32.xlu0 %v1377, 112
        %v1386 = vpop.permute.xlu0 %1385
        %v1387 = vsel %vm792, %v1382, %v1384
        %v1388 = vsel %vm792, %v1384, %v1386
        %v1392 = vadd.f32 %v1371, %v1387
        %v1393 = vadd.f32 %v1372, %v1388
        %v1394 = vadd.f32 %v1373, %v1386
        %v1395 = vstv %s353
        %v1396 = vmul.f32 %v1395, 0.0
        %v1397 = vmul.f32 %v1395, %v735
        %v1398 = vmul.f32 %v1395, %v744
        %1402 = vrot.lane.b32.xlu0 %v1396, 96
        %v1403 = vpop.permute.xlu0 %1402
        %1404 = vrot.lane.b32.xlu0 %v1397, 96
        %v1405 = vpop.permute.xlu0 %1404
        %1406 = vrot.lane.b32.xlu0 %v1398, 96
        %v1407 = vpop.permute.xlu0 %1406
        %v1408 = vsel %vm835, %v1403, %v1405
        %v1409 = vsel %vm835, %v1405, %v1407
        %v1413 = vadd.f32 %v1392, %v1408
        %v1414 = vadd.f32 %v1393, %v1409
        %v1415 = vadd.f32 %v1394, %v1407
        %v1416 = vstv %s402
        %v1417 = vmul.f32 %v1416, 0.0
        %v1418 = vmul.f32 %v1416, %v763
        %v1419 = vmul.f32 %v1416, %v764
        %1423 = vrot.lane.b32.xlu0 %v1417, 96
        %v1424 = vpop.permute.xlu0 %1423
        %1425 = vrot.lane.b32.xlu0 %v1418, 96
        %v1426 = vpop.permute.xlu0 %1425
        %1427 = vrot.lane.b32.xlu0 %v1419, 96
        %v1428 = vpop.permute.xlu0 %1427
        %v1429 = vsel %vm835, %v1424, %v1426
        %v1430 = vsel %vm835, %v1426, %v1428
        %v1434 = vadd.f32 %v1413, %v1429
        %v1435 = vadd.f32 %v1414, %v1430
        %v1436 = vadd.f32 %v1415, %v1428
        %v1437 = vstv %s360
        %v1438 = vmul.f32 %v1437, 0.0
        %v1439 = vmul.f32 %v1437, %v735
        %v1440 = vmul.f32 %v1437, %v744
        %1444 = vrot.lane.b32.xlu0 %v1438, 80
        %v1445 = vpop.permute.xlu0 %1444
        %1446 = vrot.lane.b32.xlu0 %v1439, 80
        %v1447 = vpop.permute.xlu0 %1446
        %1448 = vrot.lane.b32.xlu0 %v1440, 80
        %v1449 = vpop.permute.xlu0 %1448
        %v1450 = vsel %vm878, %v1445, %v1447
        %v1451 = vsel %vm878, %v1447, %v1449
        %v1455 = vadd.f32 %v1434, %v1450
        %v1456 = vadd.f32 %v1435, %v1451
        %v1457 = vadd.f32 %v1436, %v1449
        %v1458 = vstv %s409
        %v1459 = vmul.f32 %v1458, 0.0
        %v1460 = vmul.f32 %v1458, %v763
        %v1461 = vmul.f32 %v1458, %v764
        %1465 = vrot.lane.b32.xlu0 %v1459, 80
        %v1466 = vpop.permute.xlu0 %1465
        %1467 = vrot.lane.b32.xlu0 %v1460, 80
        %v1468 = vpop.permute.xlu0 %1467
        %1469 = vrot.lane.b32.xlu0 %v1461, 80
        %v1470 = vpop.permute.xlu0 %1469
        %v1471 = vsel %vm878, %v1466, %v1468
        %v1472 = vsel %vm878, %v1468, %v1470
        %v1476 = vadd.f32 %v1455, %v1471
        %v1477 = vadd.f32 %v1456, %v1472
        %v1478 = vadd.f32 %v1457, %v1470
        %v1479 = vstv %s367
        %v1480 = vmul.f32 %v1479, %v735
        %v1481 = vmul.f32 %v1479, %v744
        %v1482 = vmul.f32 %v1479, 0.0
        %1486 = vrot.lane.b32.xlu0 %v1480, 64
        %v1487 = vpop.permute.xlu0 %1486
        %1488 = vrot.lane.b32.xlu0 %v1481, 64
        %v1489 = vpop.permute.xlu0 %1488
        %1490 = vrot.lane.b32.xlu0 %v1482, 64
        %v1491 = vpop.permute.xlu0 %1490
        %v1492 = vsel %vm921, %v1487, %v1489
        %v1493 = vsel %vm921, %v1489, %v1491
        %v1497 = vadd.f32 %v1476, %v1487
        %v1498 = vadd.f32 %v1477, %v1492
        %v1499 = vadd.f32 %v1478, %v1493
        %v1500 = vstv %s416
        %v1501 = vmul.f32 %v1500, %v763
        %v1502 = vmul.f32 %v1500, %v764
        %v1503 = vmul.f32 %v1500, 0.0
        %1507 = vrot.lane.b32.xlu0 %v1501, 64
        %v1508 = vpop.permute.xlu0 %1507
        %1509 = vrot.lane.b32.xlu0 %v1502, 64
        %v1510 = vpop.permute.xlu0 %1509
        %1511 = vrot.lane.b32.xlu0 %v1503, 64
        %v1512 = vpop.permute.xlu0 %1511
        %v1513 = vsel %vm921, %v1508, %v1510
        %v1514 = vsel %vm921, %v1510, %v1512
        %v1518 = vadd.f32 %v1497, %v1508
        %v1519 = vadd.f32 %v1498, %v1513
        %v1520 = vadd.f32 %v1499, %v1514
        %v1521 = vstv %s374
        %v1522 = vmul.f32 %v1521, %v735
        %v1523 = vmul.f32 %v1521, %v744
        %v1524 = vmul.f32 %v1521, 0.0
        %1528 = vrot.lane.b32.xlu0 %v1522, 48
        %v1529 = vpop.permute.xlu0 %1528
        %1530 = vrot.lane.b32.xlu0 %v1523, 48
        %v1531 = vpop.permute.xlu0 %1530
        %1532 = vrot.lane.b32.xlu0 %v1524, 48
        %v1533 = vpop.permute.xlu0 %1532
        %v1534 = vsel %vm964, %v1529, %v1531
        %v1535 = vsel %vm964, %v1531, %v1533
        %v1539 = vadd.f32 %v1518, %v1529
        %v1540 = vadd.f32 %v1519, %v1534
        %v1541 = vadd.f32 %v1520, %v1535
        %v1542 = vstv %s423
        %v1543 = vmul.f32 %v1542, %v763
        %v1544 = vmul.f32 %v1542, %v764
        %v1545 = vmul.f32 %v1542, 0.0
        %1549 = vrot.lane.b32.xlu0 %v1543, 48
        %v1550 = vpop.permute.xlu0 %1549
        %1551 = vrot.lane.b32.xlu0 %v1544, 48
        %v1552 = vpop.permute.xlu0 %1551
        %1553 = vrot.lane.b32.xlu0 %v1545, 48
        %v1554 = vpop.permute.xlu0 %1553
        %v1555 = vsel %vm964, %v1550, %v1552
        %v1556 = vsel %vm964, %v1552, %v1554
        %v1560 = vadd.f32 %v1539, %v1550
        %v1561 = vadd.f32 %v1540, %v1555
        %v1562 = vadd.f32 %v1541, %v1556
        %v1563 = vstv %s381
        %v1564 = vmul.f32 %v1563, %v735
        %v1565 = vmul.f32 %v1563, %v744
        %v1566 = vmul.f32 %v1563, 0.0
        %1570 = vrot.lane.b32.xlu0 %v1564, 32
        %v1571 = vpop.permute.xlu0 %1570
        %1572 = vrot.lane.b32.xlu0 %v1565, 32
        %v1573 = vpop.permute.xlu0 %1572
        %1574 = vrot.lane.b32.xlu0 %v1566, 32
        %v1575 = vpop.permute.xlu0 %1574
        %v1576 = vsel %vm1007, %v1571, %v1573
        %v1577 = vsel %vm1007, %v1573, %v1575
        %v1581 = vadd.f32 %v1560, %v1571
        %v1582 = vadd.f32 %v1561, %v1576
        %v1583 = vadd.f32 %v1562, %v1577
        %v1584 = vstv %s430
        %v1585 = vmul.f32 %v1584, %v763
        %v1586 = vmul.f32 %v1584, %v764
        %v1587 = vmul.f32 %v1584, 0.0
        %1591 = vrot.lane.b32.xlu0 %v1585, 32
        %v1592 = vpop.permute.xlu0 %1591
        %1593 = vrot.lane.b32.xlu0 %v1586, 32
        %v1594 = vpop.permute.xlu0 %1593
        %1595 = vrot.lane.b32.xlu0 %v1587, 32
        %v1596 = vpop.permute.xlu0 %1595
        %v1597 = vsel %vm1007, %v1592, %v1594
        %v1598 = vsel %vm1007, %v1594, %v1596
        %v1602 = vadd.f32 %v1581, %v1592
        %v1603 = vadd.f32 %v1582, %v1597
        %v1604 = vadd.f32 %v1583, %v1598
        %1608 = vrot.lane.b32.xlu0 %v1602, 49
        %v1609 = vpop.permute.xlu0 %1608
        %1610 = vrot.lane.b32.xlu0 %v1603, 49
        %v1611 = vpop.permute.xlu0 %1610
        %1612 = vrot.lane.b32.xlu0 %v1604, 49
        %v1613 = vpop.permute.xlu0 %1612
        %vm1614 = vcmask 400384
        %v1615 = vsel %vm1614, %v1609, %v1611
        %v1616 = vsel %vm1614, %v1611, %v1613
        %v1619 = vsel %vm458, %v1615, 0.0
        %v1620 = vsel %vm459, %v1616, 0.0
        %v1621 = vadd.f32 %v1337, %v1619
        %v1622 = vadd.f32 %v1338, %v1620
        %v1623 = vstv %s340
        %v1624 = vmul.f32 %v1623, 0.0
        %v1625 = vmul.f32 %v1623, %v735
        %v1626 = vmul.f32 %v1623, %v744
        %v1627 = vadd.f32 %v1624, 0.0
        %v1628 = vadd.f32 %v1625, 0.0
        %v1629 = vadd.f32 %v1626, 0.0
        %v1630 = vstv %s389
        %v1631 = vmul.f32 %v1630, 0.0
        %v1632 = vmul.f32 %v1630, %v763
        %v1633 = vmul.f32 %v1630, %v764
        %v1634 = vadd.f32 %v1627, %v1631
        %v1635 = vadd.f32 %v1628, %v1632
        %v1636 = vadd.f32 %v1629, %v1633
        %v1637 = vstv %s347
        %v1638 = vmul.f32 %v1637, 0.0
        %v1639 = vmul.f32 %v1637, %v735
        %v1640 = vmul.f32 %v1637, %v744
        %1644 = vrot.lane.b32.xlu0 %v1638, 112
        %v1645 = vpop.permute.xlu0 %1644
        %1646 = vrot.lane.b32.xlu0 %v1639, 112
        %v1647 = vpop.permute.xlu0 %1646
        %1648 = vrot.lane.b32.xlu0 %v1640, 112
        %v1649 = vpop.permute.xlu0 %1648
        %v1650 = vsel %vm792, %v1645, %v1647
        %v1651 = vsel %vm792, %v1647, %v1649
        %v1655 = vadd.f32 %v1634, %v1650
        %v1656 = vadd.f32 %v1635, %v1651
        %v1657 = vadd.f32 %v1636, %v1649
        %v1658 = vstv %s396
        %v1659 = vmul.f32 %v1658, 0.0
        %v1660 = vmul.f32 %v1658, %v763
        %v1661 = vmul.f32 %v1658, %v764
        %1665 = vrot.lane.b32.xlu0 %v1659, 112
        %v1666 = vpop.permute.xlu0 %1665
        %1667 = vrot.lane.b32.xlu0 %v1660, 112
        %v1668 = vpop.permute.xlu0 %1667
        %1669 = vrot.lane.b32.xlu0 %v1661, 112
        %v1670 = vpop.permute.xlu0 %1669
        %v1671 = vsel %vm792, %v1666, %v1668
        %v1672 = vsel %vm792, %v1668, %v1670
        %v1676 = vadd.f32 %v1655, %v1671
        %v1677 = vadd.f32 %v1656, %v1672
        %v1678 = vadd.f32 %v1657, %v1670
        %v1679 = vstv %s354
        %v1680 = vmul.f32 %v1679, 0.0
        %v1681 = vmul.f32 %v1679, %v735
        %v1682 = vmul.f32 %v1679, %v744
        %1686 = vrot.lane.b32.xlu0 %v1680, 96
        %v1687 = vpop.permute.xlu0 %1686
        %1688 = vrot.lane.b32.xlu0 %v1681, 96
        %v1689 = vpop.permute.xlu0 %1688
        %1690 = vrot.lane.b32.xlu0 %v1682, 96
        %v1691 = vpop.permute.xlu0 %1690
        %v1692 = vsel %vm835, %v1687, %v1689
        %v1693 = vsel %vm835, %v1689, %v1691
        %v1697 = vadd.f32 %v1676, %v1692
        %v1698 = vadd.f32 %v1677, %v1693
        %v1699 = vadd.f32 %v1678, %v1691
        %v1700 = vstv %s403
        %v1701 = vmul.f32 %v1700, 0.0
        %v1702 = vmul.f32 %v1700, %v763
        %v1703 = vmul.f32 %v1700, %v764
        %1707 = vrot.lane.b32.xlu0 %v1701, 96
        %v1708 = vpop.permute.xlu0 %1707
        %1709 = vrot.lane.b32.xlu0 %v1702, 96
        %v1710 = vpop.permute.xlu0 %1709
        %1711 = vrot.lane.b32.xlu0 %v1703, 96
        %v1712 = vpop.permute.xlu0 %1711
        %v1713 = vsel %vm835, %v1708, %v1710
        %v1714 = vsel %vm835, %v1710, %v1712
        %v1718 = vadd.f32 %v1697, %v1713
        %v1719 = vadd.f32 %v1698, %v1714
        %v1720 = vadd.f32 %v1699, %v1712
        %v1721 = vstv %s361
        %v1722 = vmul.f32 %v1721, %v735
        %v1723 = vmul.f32 %v1721, %v744
        %1726 = vrot.lane.b32.xlu0 %v1722, 80
        %v1727 = vpop.permute.xlu0 %1726
        %1728 = vrot.lane.b32.xlu0 %v1723, 80
        %v1729 = vpop.permute.xlu0 %1728
        %v1730 = vsel %vm878, %v1727, %v1729
        %v1734 = vadd.f32 %v1718, %v1727
        %v1735 = vadd.f32 %v1719, %v1730
        %v1736 = vadd.f32 %v1720, %v1729
        %v1737 = vstv %s410
        %v1738 = vmul.f32 %v1737, %v763
        %v1739 = vmul.f32 %v1737, %v764
        %1742 = vrot.lane.b32.xlu0 %v1738, 80
        %v1743 = vpop.permute.xlu0 %1742
        %1744 = vrot.lane.b32.xlu0 %v1739, 80
        %v1745 = vpop.permute.xlu0 %1744
        %v1746 = vsel %vm878, %v1743, %v1745
        %v1750 = vadd.f32 %v1734, %v1743
        %v1751 = vadd.f32 %v1735, %v1746
        %v1752 = vadd.f32 %v1736, %v1745
        %v1753 = vstv %s368
        %v1754 = vmul.f32 %v1753, %v735
        %v1755 = vmul.f32 %v1753, %v744
        %v1756 = vmul.f32 %v1753, 0.0
        %1760 = vrot.lane.b32.xlu0 %v1754, 64
        %v1761 = vpop.permute.xlu0 %1760
        %1762 = vrot.lane.b32.xlu0 %v1755, 64
        %v1763 = vpop.permute.xlu0 %1762
        %1764 = vrot.lane.b32.xlu0 %v1756, 64
        %v1765 = vpop.permute.xlu0 %1764
        %v1766 = vsel %vm921, %v1761, %v1763
        %v1767 = vsel %vm921, %v1763, %v1765
        %v1771 = vadd.f32 %v1750, %v1761
        %v1772 = vadd.f32 %v1751, %v1766
        %v1773 = vadd.f32 %v1752, %v1767
        %v1774 = vstv %s417
        %v1775 = vmul.f32 %v1774, %v763
        %v1776 = vmul.f32 %v1774, %v764
        %v1777 = vmul.f32 %v1774, 0.0
        %1781 = vrot.lane.b32.xlu0 %v1775, 64
        %v1782 = vpop.permute.xlu0 %1781
        %1783 = vrot.lane.b32.xlu0 %v1776, 64
        %v1784 = vpop.permute.xlu0 %1783
        %1785 = vrot.lane.b32.xlu0 %v1777, 64
        %v1786 = vpop.permute.xlu0 %1785
        %v1787 = vsel %vm921, %v1782, %v1784
        %v1788 = vsel %vm921, %v1784, %v1786
        %v1792 = vadd.f32 %v1771, %v1782
        %v1793 = vadd.f32 %v1772, %v1787
        %v1794 = vadd.f32 %v1773, %v1788
        %v1795 = vstv %s375
        %v1796 = vmul.f32 %v1795, %v735
        %v1797 = vmul.f32 %v1795, %v744
        %v1798 = vmul.f32 %v1795, 0.0
        %1802 = vrot.lane.b32.xlu0 %v1796, 48
        %v1803 = vpop.permute.xlu0 %1802
        %1804 = vrot.lane.b32.xlu0 %v1797, 48
        %v1805 = vpop.permute.xlu0 %1804
        %1806 = vrot.lane.b32.xlu0 %v1798, 48
        %v1807 = vpop.permute.xlu0 %1806
        %v1808 = vsel %vm964, %v1803, %v1805
        %v1809 = vsel %vm964, %v1805, %v1807
        %v1813 = vadd.f32 %v1792, %v1803
        %v1814 = vadd.f32 %v1793, %v1808
        %v1815 = vadd.f32 %v1794, %v1809
        %v1816 = vstv %s424
        %v1817 = vmul.f32 %v1816, %v763
        %v1818 = vmul.f32 %v1816, %v764
        %v1819 = vmul.f32 %v1816, 0.0
        %1823 = vrot.lane.b32.xlu0 %v1817, 48
        %v1824 = vpop.permute.xlu0 %1823
        %1825 = vrot.lane.b32.xlu0 %v1818, 48
        %v1826 = vpop.permute.xlu0 %1825
        %1827 = vrot.lane.b32.xlu0 %v1819, 48
        %v1828 = vpop.permute.xlu0 %1827
        %v1829 = vsel %vm964, %v1824, %v1826
        %v1830 = vsel %vm964, %v1826, %v1828
        %v1834 = vadd.f32 %v1813, %v1824
        %v1835 = vadd.f32 %v1814, %v1829
        %v1836 = vadd.f32 %v1815, %v1830
        %v1837 = vstv %s382
        %v1838 = vmul.f32 %v1837, %v735
        %v1839 = vmul.f32 %v1837, %v744
        %v1840 = vmul.f32 %v1837, 0.0
        %1844 = vrot.lane.b32.xlu0 %v1838, 32
        %v1845 = vpop.permute.xlu0 %1844
        %1846 = vrot.lane.b32.xlu0 %v1839, 32
        %v1847 = vpop.permute.xlu0 %1846
        %1848 = vrot.lane.b32.xlu0 %v1840, 32
        %v1849 = vpop.permute.xlu0 %1848
        %v1850 = vsel %vm1007, %v1845, %v1847
        %v1851 = vsel %vm1007, %v1847, %v1849
        %v1855 = vadd.f32 %v1834, %v1845
        %v1856 = vadd.f32 %v1835, %v1850
        %v1857 = vadd.f32 %v1836, %v1851
        %v1858 = vstv %s431
        %v1859 = vmul.f32 %v1858, %v763
        %v1860 = vmul.f32 %v1858, %v764
        %v1861 = vmul.f32 %v1858, 0.0
        %1865 = vrot.lane.b32.xlu0 %v1859, 32
        %v1866 = vpop.permute.xlu0 %1865
        %1867 = vrot.lane.b32.xlu0 %v1860, 32
        %v1868 = vpop.permute.xlu0 %1867
        %1869 = vrot.lane.b32.xlu0 %v1861, 32
        %v1870 = vpop.permute.xlu0 %1869
        %v1871 = vsel %vm1007, %v1866, %v1868
        %v1872 = vsel %vm1007, %v1868, %v1870
        %v1876 = vadd.f32 %v1855, %v1866
        %v1877 = vadd.f32 %v1856, %v1871
        %v1878 = vadd.f32 %v1857, %v1872
        %1882 = vrot.lane.b32.xlu0 %v1876, 48
        %v1883 = vpop.permute.xlu0 %1882
        %1884 = vrot.lane.b32.xlu0 %v1877, 48
        %v1885 = vpop.permute.xlu0 %1884
        %1886 = vrot.lane.b32.xlu0 %v1878, 48
        %v1887 = vpop.permute.xlu0 %1886
        %v1888 = vsel %vm964, %v1883, %v1885
        %v1889 = vsel %vm964, %v1885, %v1887
        %v1892 = vsel %vm464, %v1888, 0.0
        %v1893 = vsel %vm465, %v1889, 0.0
        %v1894 = vadd.f32 %v1621, %v1892
        %v1895 = vadd.f32 %v1622, %v1893
        %v1896 = vstv %s341
        %v1897 = vmul.f32 %v1896, 0.0
        %v1898 = vmul.f32 %v1896, %v735
        %v1899 = vmul.f32 %v1896, %v744
        %v1900 = vadd.f32 %v1897, 0.0
        %v1901 = vadd.f32 %v1898, 0.0
        %v1902 = vadd.f32 %v1899, 0.0
        %v1903 = vstv %s390
        %v1904 = vmul.f32 %v1903, 0.0
        %v1905 = vmul.f32 %v1903, %v763
        %v1906 = vmul.f32 %v1903, %v764
        %v1907 = vadd.f32 %v1900, %v1904
        %v1908 = vadd.f32 %v1901, %v1905
        %v1909 = vadd.f32 %v1902, %v1906
        %v1910 = vstv %s348
        %v1911 = vmul.f32 %v1910, 0.0
        %v1912 = vmul.f32 %v1910, %v735
        %v1913 = vmul.f32 %v1910, %v744
        %1917 = vrot.lane.b32.xlu0 %v1911, 112
        %v1918 = vpop.permute.xlu0 %1917
        %1919 = vrot.lane.b32.xlu0 %v1912, 112
        %v1920 = vpop.permute.xlu0 %1919
        %1921 = vrot.lane.b32.xlu0 %v1913, 112
        %v1922 = vpop.permute.xlu0 %1921
        %v1923 = vsel %vm792, %v1918, %v1920
        %v1924 = vsel %vm792, %v1920, %v1922
        %v1928 = vadd.f32 %v1907, %v1923
        %v1929 = vadd.f32 %v1908, %v1924
        %v1930 = vadd.f32 %v1909, %v1922
        %v1931 = vstv %s397
        %v1932 = vmul.f32 %v1931, 0.0
        %v1933 = vmul.f32 %v1931, %v763
        %v1934 = vmul.f32 %v1931, %v764
        %1938 = vrot.lane.b32.xlu0 %v1932, 112
        %v1939 = vpop.permute.xlu0 %1938
        %1940 = vrot.lane.b32.xlu0 %v1933, 112
        %v1941 = vpop.permute.xlu0 %1940
        %1942 = vrot.lane.b32.xlu0 %v1934, 112
        %v1943 = vpop.permute.xlu0 %1942
        %v1944 = vsel %vm792, %v1939, %v1941
        %v1945 = vsel %vm792, %v1941, %v1943
        %v1949 = vadd.f32 %v1928, %v1944
        %v1950 = vadd.f32 %v1929, %v1945
        %v1951 = vadd.f32 %v1930, %v1943
        %v1952 = vstv %s355
        %v1953 = vmul.f32 %v1952, 0.0
        %v1954 = vmul.f32 %v1952, %v735
        %v1955 = vmul.f32 %v1952, %v744
        %1959 = vrot.lane.b32.xlu0 %v1953, 96
        %v1960 = vpop.permute.xlu0 %1959
        %1961 = vrot.lane.b32.xlu0 %v1954, 96
        %v1962 = vpop.permute.xlu0 %1961
        %1963 = vrot.lane.b32.xlu0 %v1955, 96
        %v1964 = vpop.permute.xlu0 %1963
        %v1965 = vsel %vm835, %v1960, %v1962
        %v1966 = vsel %vm835, %v1962, %v1964
        %v1970 = vadd.f32 %v1949, %v1965
        %v1971 = vadd.f32 %v1950, %v1966
        %v1972 = vadd.f32 %v1951, %v1964
        %v1973 = vstv %s404
        %v1974 = vmul.f32 %v1973, 0.0
        %v1975 = vmul.f32 %v1973, %v763
        %v1976 = vmul.f32 %v1973, %v764
        %1980 = vrot.lane.b32.xlu0 %v1974, 96
        %v1981 = vpop.permute.xlu0 %1980
        %1982 = vrot.lane.b32.xlu0 %v1975, 96
        %v1983 = vpop.permute.xlu0 %1982
        %1984 = vrot.lane.b32.xlu0 %v1976, 96
        %v1985 = vpop.permute.xlu0 %1984
        %v1986 = vsel %vm835, %v1981, %v1983
        %v1987 = vsel %vm835, %v1983, %v1985
        %v1991 = vadd.f32 %v1970, %v1986
        %v1992 = vadd.f32 %v1971, %v1987
        %v1993 = vadd.f32 %v1972, %v1985
        %v1994 = vstv %s362
        %v1995 = vmul.f32 %v1994, %v735
        %v1996 = vmul.f32 %v1994, %v744
        %v1997 = vmul.f32 %v1994, 0.0
        %2001 = vrot.lane.b32.xlu0 %v1995, 80
        %v2002 = vpop.permute.xlu0 %2001
        %2003 = vrot.lane.b32.xlu0 %v1996, 80
        %v2004 = vpop.permute.xlu0 %2003
        %2005 = vrot.lane.b32.xlu0 %v1997, 80
        %v2006 = vpop.permute.xlu0 %2005
        %v2007 = vsel %vm878, %v2002, %v2004
        %v2008 = vsel %vm878, %v2004, %v2006
        %v2012 = vadd.f32 %v1991, %v2002
        %v2013 = vadd.f32 %v1992, %v2007
        %v2014 = vadd.f32 %v1993, %v2008
        %v2015 = vstv %s411
        %v2016 = vmul.f32 %v2015, %v763
        %v2017 = vmul.f32 %v2015, %v764
        %v2018 = vmul.f32 %v2015, 0.0
        %2022 = vrot.lane.b32.xlu0 %v2016, 80
        %v2023 = vpop.permute.xlu0 %2022
        %2024 = vrot.lane.b32.xlu0 %v2017, 80
        %v2025 = vpop.permute.xlu0 %2024
        %2026 = vrot.lane.b32.xlu0 %v2018, 80
        %v2027 = vpop.permute.xlu0 %2026
        %v2028 = vsel %vm878, %v2023, %v2025
        %v2029 = vsel %vm878, %v2025, %v2027
        %v2033 = vadd.f32 %v2012, %v2023
        %v2034 = vadd.f32 %v2013, %v2028
        %v2035 = vadd.f32 %v2014, %v2029
        %v2036 = vstv %s369
        %v2037 = vmul.f32 %v2036, %v735
        %v2038 = vmul.f32 %v2036, %v744
        %v2039 = vmul.f32 %v2036, 0.0
        %2043 = vrot.lane.b32.xlu0 %v2037, 64
        %v2044 = vpop.permute.xlu0 %2043
        %2045 = vrot.lane.b32.xlu0 %v2038, 64
        %v2046 = vpop.permute.xlu0 %2045
        %2047 = vrot.lane.b32.xlu0 %v2039, 64
        %v2048 = vpop.permute.xlu0 %2047
        %v2049 = vsel %vm921, %v2044, %v2046
        %v2050 = vsel %vm921, %v2046, %v2048
        %v2054 = vadd.f32 %v2033, %v2044
        %v2055 = vadd.f32 %v2034, %v2049
        %v2056 = vadd.f32 %v2035, %v2050
        %v2057 = vstv %s418
        %v2058 = vmul.f32 %v2057, %v763
        %v2059 = vmul.f32 %v2057, %v764
        %v2060 = vmul.f32 %v2057, 0.0
        %2064 = vrot.lane.b32.xlu0 %v2058, 64
        %v2065 = vpop.permute.xlu0 %2064
        %2066 = vrot.lane.b32.xlu0 %v2059, 64
        %v2067 = vpop.permute.xlu0 %2066
        %2068 = vrot.lane.b32.xlu0 %v2060, 64
        %v2069 = vpop.permute.xlu0 %2068
        %v2070 = vsel %vm921, %v2065, %v2067
        %v2071 = vsel %vm921, %v2067, %v2069
        %v2075 = vadd.f32 %v2054, %v2065
        %v2076 = vadd.f32 %v2055, %v2070
        %v2077 = vadd.f32 %v2056, %v2071
        %v2078 = vstv %s376
        %v2079 = vmul.f32 %v2078, %v735
        %v2080 = vmul.f32 %v2078, %v744
        %v2081 = vmul.f32 %v2078, 0.0
        %2085 = vrot.lane.b32.xlu0 %v2079, 48
        %v2086 = vpop.permute.xlu0 %2085
        %2087 = vrot.lane.b32.xlu0 %v2080, 48
        %v2088 = vpop.permute.xlu0 %2087
        %2089 = vrot.lane.b32.xlu0 %v2081, 48
        %v2090 = vpop.permute.xlu0 %2089
        %v2091 = vsel %vm964, %v2086, %v2088
        %v2092 = vsel %vm964, %v2088, %v2090
        %v2096 = vadd.f32 %v2075, %v2086
        %v2097 = vadd.f32 %v2076, %v2091
        %v2098 = vadd.f32 %v2077, %v2092
        %v2099 = vstv %s425
        %v2100 = vmul.f32 %v2099, %v763
        %v2101 = vmul.f32 %v2099, %v764
        %v2102 = vmul.f32 %v2099, 0.0
        %2106 = vrot.lane.b32.xlu0 %v2100, 48
        %v2107 = vpop.permute.xlu0 %2106
        %2108 = vrot.lane.b32.xlu0 %v2101, 48
        %v2109 = vpop.permute.xlu0 %2108
        %2110 = vrot.lane.b32.xlu0 %v2102, 48
        %v2111 = vpop.permute.xlu0 %2110
        %v2112 = vsel %vm964, %v2107, %v2109
        %v2113 = vsel %vm964, %v2109, %v2111
        %v2117 = vadd.f32 %v2096, %v2107
        %v2118 = vadd.f32 %v2097, %v2112
        %v2119 = vadd.f32 %v2098, %v2113
        %v2120 = vstv %s383
        %v2121 = vmul.f32 %v2120, %v735
        %v2122 = vmul.f32 %v2120, %v744
        %v2123 = vmul.f32 %v2120, 0.0
        %2127 = vrot.lane.b32.xlu0 %v2121, 32
        %v2128 = vpop.permute.xlu0 %2127
        %2129 = vrot.lane.b32.xlu0 %v2122, 32
        %v2130 = vpop.permute.xlu0 %2129
        %2131 = vrot.lane.b32.xlu0 %v2123, 32
        %v2132 = vpop.permute.xlu0 %2131
        %v2133 = vsel %vm1007, %v2128, %v2130
        %v2134 = vsel %vm1007, %v2130, %v2132
        %v2138 = vadd.f32 %v2117, %v2128
        %v2139 = vadd.f32 %v2118, %v2133
        %v2140 = vadd.f32 %v2119, %v2134
        %v2141 = vstv %s432
        %v2142 = vmul.f32 %v2141, %v763
        %v2143 = vmul.f32 %v2141, %v764
        %v2144 = vmul.f32 %v2141, 0.0
        %2148 = vrot.lane.b32.xlu0 %v2142, 32
        %v2149 = vpop.permute.xlu0 %2148
        %2150 = vrot.lane.b32.xlu0 %v2143, 32
        %v2151 = vpop.permute.xlu0 %2150
        %2152 = vrot.lane.b32.xlu0 %v2144, 32
        %v2153 = vpop.permute.xlu0 %2152
        %v2154 = vsel %vm1007, %v2149, %v2151
        %v2155 = vsel %vm1007, %v2151, %v2153
        %v2159 = vadd.f32 %v2138, %v2149
        %v2160 = vadd.f32 %v2139, %v2154
        %v2161 = vadd.f32 %v2140, %v2155
        %2165 = vrot.lane.b32.xlu0 %v2159, 47
        %v2166 = vpop.permute.xlu0 %2165
        %2167 = vrot.lane.b32.xlu0 %v2160, 47
        %v2168 = vpop.permute.xlu0 %2167
        %2169 = vrot.lane.b32.xlu0 %v2161, 47
        %v2170 = vpop.permute.xlu0 %2169
        %vm2171 = vcmask 384000
        %v2172 = vsel %vm2171, %v2166, %v2168
        %v2173 = vsel %vm2171, %v2168, %v2170
        %v2176 = vsel %vm470, %v2172, 0.0
        %v2177 = vsel %vm471, %v2173, 0.0
        %v2178 = vadd.f32 %v1894, %v2176
        %v2179 = vadd.f32 %v1895, %v2177
        %v2180 = vstv %s342
        %v2181 = vmul.f32 %v2180, 0.0
        %v2182 = vmul.f32 %v2180, %v735
        %v2183 = vmul.f32 %v2180, %v744
        %v2184 = vadd.f32 %v2181, 0.0
        %v2185 = vadd.f32 %v2182, 0.0
        %v2186 = vadd.f32 %v2183, 0.0
        %v2187 = vstv %s391
        %v2188 = vmul.f32 %v2187, 0.0
        %v2189 = vmul.f32 %v2187, %v763
        %v2190 = vmul.f32 %v2187, %v764
        %v2191 = vadd.f32 %v2184, %v2188
        %v2192 = vadd.f32 %v2185, %v2189
        %v2193 = vadd.f32 %v2186, %v2190
        %v2194 = vstv %s349
        %v2195 = vmul.f32 %v2194, 0.0
        %v2196 = vmul.f32 %v2194, %v735
        %v2197 = vmul.f32 %v2194, %v744
        %2201 = vrot.lane.b32.xlu0 %v2195, 112
        %v2202 = vpop.permute.xlu0 %2201
        %2203 = vrot.lane.b32.xlu0 %v2196, 112
        %v2204 = vpop.permute.xlu0 %2203
        %2205 = vrot.lane.b32.xlu0 %v2197, 112
        %v2206 = vpop.permute.xlu0 %2205
        %v2207 = vsel %vm792, %v2202, %v2204
        %v2208 = vsel %vm792, %v2204, %v2206
        %v2212 = vadd.f32 %v2191, %v2207
        %v2213 = vadd.f32 %v2192, %v2208
        %v2214 = vadd.f32 %v2193, %v2206
        %v2215 = vstv %s398
        %v2216 = vmul.f32 %v2215, 0.0
        %v2217 = vmul.f32 %v2215, %v763
        %v2218 = vmul.f32 %v2215, %v764
        %2222 = vrot.lane.b32.xlu0 %v2216, 112
        %v2223 = vpop.permute.xlu0 %2222
        %2224 = vrot.lane.b32.xlu0 %v2217, 112
        %v2225 = vpop.permute.xlu0 %2224
        %2226 = vrot.lane.b32.xlu0 %v2218, 112
        %v2227 = vpop.permute.xlu0 %2226
        %v2228 = vsel %vm792, %v2223, %v2225
        %v2229 = vsel %vm792, %v2225, %v2227
        %v2233 = vadd.f32 %v2212, %v2228
        %v2234 = vadd.f32 %v2213, %v2229
        %v2235 = vadd.f32 %v2214, %v2227
        %v2236 = vstv %s356
        %v2237 = vmul.f32 %v2236, 0.0
        %v2238 = vmul.f32 %v2236, %v735
        %v2239 = vmul.f32 %v2236, %v744
        %2243 = vrot.lane.b32.xlu0 %v2237, 96
        %v2244 = vpop.permute.xlu0 %2243
        %2245 = vrot.lane.b32.xlu0 %v2238, 96
        %v2246 = vpop.permute.xlu0 %2245
        %2247 = vrot.lane.b32.xlu0 %v2239, 96
        %v2248 = vpop.permute.xlu0 %2247
        %v2249 = vsel %vm835, %v2244, %v2246
        %v2250 = vsel %vm835, %v2246, %v2248
        %v2254 = vadd.f32 %v2233, %v2249
        %v2255 = vadd.f32 %v2234, %v2250
        %v2256 = vadd.f32 %v2235, %v2248
        %v2257 = vstv %s405
        %v2258 = vmul.f32 %v2257, 0.0
        %v2259 = vmul.f32 %v2257, %v763
        %v2260 = vmul.f32 %v2257, %v764
        %2264 = vrot.lane.b32.xlu0 %v2258, 96
        %v2265 = vpop.permute.xlu0 %2264
        %2266 = vrot.lane.b32.xlu0 %v2259, 96
        %v2267 = vpop.permute.xlu0 %2266
        %2268 = vrot.lane.b32.xlu0 %v2260, 96
        %v2269 = vpop.permute.xlu0 %2268
        %v2270 = vsel %vm835, %v2265, %v2267
        %v2271 = vsel %vm835, %v2267, %v2269
        %v2275 = vadd.f32 %v2254, %v2270
        %v2276 = vadd.f32 %v2255, %v2271
        %v2277 = vadd.f32 %v2256, %v2269
        %v2278 = vstv %s363
        %v2279 = vmul.f32 %v2278, %v735
        %v2280 = vmul.f32 %v2278, %v744
        %v2281 = vmul.f32 %v2278, 0.0
        %2285 = vrot.lane.b32.xlu0 %v2279, 80
        %v2286 = vpop.permute.xlu0 %2285
        %2287 = vrot.lane.b32.xlu0 %v2280, 80
        %v2288 = vpop.permute.xlu0 %2287
        %2289 = vrot.lane.b32.xlu0 %v2281, 80
        %v2290 = vpop.permute.xlu0 %2289
        %v2291 = vsel %vm878, %v2286, %v2288
        %v2292 = vsel %vm878, %v2288, %v2290
        %v2296 = vadd.f32 %v2275, %v2286
        %v2297 = vadd.f32 %v2276, %v2291
        %v2298 = vadd.f32 %v2277, %v2292
        %v2299 = vstv %s412
        %v2300 = vmul.f32 %v2299, %v763
        %v2301 = vmul.f32 %v2299, %v764
        %v2302 = vmul.f32 %v2299, 0.0
        %2306 = vrot.lane.b32.xlu0 %v2300, 80
        %v2307 = vpop.permute.xlu0 %2306
        %2308 = vrot.lane.b32.xlu0 %v2301, 80
        %v2309 = vpop.permute.xlu0 %2308
        %2310 = vrot.lane.b32.xlu0 %v2302, 80
        %v2311 = vpop.permute.xlu0 %2310
        %v2312 = vsel %vm878, %v2307, %v2309
        %v2313 = vsel %vm878, %v2309, %v2311
        %v2317 = vadd.f32 %v2296, %v2307
        %v2318 = vadd.f32 %v2297, %v2312
        %v2319 = vadd.f32 %v2298, %v2313
        %v2320 = vstv %s370
        %v2321 = vmul.f32 %v2320, %v735
        %v2322 = vmul.f32 %v2320, %v744
        %v2323 = vmul.f32 %v2320, 0.0
        %2327 = vrot.lane.b32.xlu0 %v2321, 64
        %v2328 = vpop.permute.xlu0 %2327
        %2329 = vrot.lane.b32.xlu0 %v2322, 64
        %v2330 = vpop.permute.xlu0 %2329
        %2331 = vrot.lane.b32.xlu0 %v2323, 64
        %v2332 = vpop.permute.xlu0 %2331
        %v2333 = vsel %vm921, %v2328, %v2330
        %v2334 = vsel %vm921, %v2330, %v2332
        %v2338 = vadd.f32 %v2317, %v2328
        %v2339 = vadd.f32 %v2318, %v2333
        %v2340 = vadd.f32 %v2319, %v2334
        %v2341 = vstv %s419
        %v2342 = vmul.f32 %v2341, %v763
        %v2343 = vmul.f32 %v2341, %v764
        %v2344 = vmul.f32 %v2341, 0.0
        %2348 = vrot.lane.b32.xlu0 %v2342, 64
        %v2349 = vpop.permute.xlu0 %2348
        %2350 = vrot.lane.b32.xlu0 %v2343, 64
        %v2351 = vpop.permute.xlu0 %2350
        %2352 = vrot.lane.b32.xlu0 %v2344, 64
        %v2353 = vpop.permute.xlu0 %2352
        %v2354 = vsel %vm921, %v2349, %v2351
        %v2355 = vsel %vm921, %v2351, %v2353
        %v2359 = vadd.f32 %v2338, %v2349
        %v2360 = vadd.f32 %v2339, %v2354
        %v2361 = vadd.f32 %v2340, %v2355
        %v2362 = vstv %s377
        %v2363 = vmul.f32 %v2362, %v735
        %v2364 = vmul.f32 %v2362, %v744
        %v2365 = vmul.f32 %v2362, 0.0
        %2369 = vrot.lane.b32.xlu0 %v2363, 48
        %v2370 = vpop.permute.xlu0 %2369
        %2371 = vrot.lane.b32.xlu0 %v2364, 48
        %v2372 = vpop.permute.xlu0 %2371
        %2373 = vrot.lane.b32.xlu0 %v2365, 48
        %v2374 = vpop.permute.xlu0 %2373
        %v2375 = vsel %vm964, %v2370, %v2372
        %v2376 = vsel %vm964, %v2372, %v2374
        %v2380 = vadd.f32 %v2359, %v2370
        %v2381 = vadd.f32 %v2360, %v2375
        %v2382 = vadd.f32 %v2361, %v2376
        %v2383 = vstv %s426
        %v2384 = vmul.f32 %v2383, %v763
        %v2385 = vmul.f32 %v2383, %v764
        %v2386 = vmul.f32 %v2383, 0.0
        %2390 = vrot.lane.b32.xlu0 %v2384, 48
        %v2391 = vpop.permute.xlu0 %2390
        %2392 = vrot.lane.b32.xlu0 %v2385, 48
        %v2393 = vpop.permute.xlu0 %2392
        %2394 = vrot.lane.b32.xlu0 %v2386, 48
        %v2395 = vpop.permute.xlu0 %2394
        %v2396 = vsel %vm964, %v2391, %v2393
        %v2397 = vsel %vm964, %v2393, %v2395
        %v2401 = vadd.f32 %v2380, %v2391
        %v2402 = vadd.f32 %v2381, %v2396
        %v2403 = vadd.f32 %v2382, %v2397
        %v2404 = vstv %s384
        %v2405 = vmul.f32 %v2404, %v735
        %v2406 = vmul.f32 %v2404, %v744
        %v2407 = vmul.f32 %v2404, 0.0
        %2411 = vrot.lane.b32.xlu0 %v2405, 32
        %v2412 = vpop.permute.xlu0 %2411
        %2413 = vrot.lane.b32.xlu0 %v2406, 32
        %v2414 = vpop.permute.xlu0 %2413
        %2415 = vrot.lane.b32.xlu0 %v2407, 32
        %v2416 = vpop.permute.xlu0 %2415
        %v2417 = vsel %vm1007, %v2412, %v2414
        %v2418 = vsel %vm1007, %v2414, %v2416
        %v2422 = vadd.f32 %v2401, %v2412
        %v2423 = vadd.f32 %v2402, %v2417
        %v2424 = vadd.f32 %v2403, %v2418
        %v2425 = vstv %s433
        %v2426 = vmul.f32 %v2425, %v763
        %v2427 = vmul.f32 %v2425, %v764
        %v2428 = vmul.f32 %v2425, 0.0
        %2432 = vrot.lane.b32.xlu0 %v2426, 32
        %v2433 = vpop.permute.xlu0 %2432
        %2434 = vrot.lane.b32.xlu0 %v2427, 32
        %v2435 = vpop.permute.xlu0 %2434
        %2436 = vrot.lane.b32.xlu0 %v2428, 32
        %v2437 = vpop.permute.xlu0 %2436
        %v2438 = vsel %vm1007, %v2433, %v2435
        %v2439 = vsel %vm1007, %v2435, %v2437
        %v2443 = vadd.f32 %v2422, %v2433
        %v2444 = vadd.f32 %v2423, %v2438
        %v2445 = vadd.f32 %v2424, %v2439
        %2449 = vrot.lane.b32.xlu0 %v2443, 46
        %v2450 = vpop.permute.xlu0 %2449
        %2451 = vrot.lane.b32.xlu0 %v2444, 46
        %v2452 = vpop.permute.xlu0 %2451
        %2453 = vrot.lane.b32.xlu0 %v2445, 46
        %v2454 = vpop.permute.xlu0 %2453
        %vm2455 = vcmask 375808
        %v2456 = vsel %vm2455, %v2450, %v2452
        %v2457 = vsel %vm2455, %v2452, %v2454
        %v2460 = vsel %vm476, %v2456, 0.0
        %v2461 = vsel %vm477, %v2457, 0.0
        %v2462 = vadd.f32 %v2178, %v2460
        %v2463 = vadd.f32 %v2179, %v2461
        %v2464 = vstv %s343
        %v2465 = vmul.f32 %v2464, 0.0
        %v2466 = vmul.f32 %v2464, %v735
        %v2467 = vmul.f32 %v2464, %v744
        %v2468 = vadd.f32 %v2465, 0.0
        %v2469 = vadd.f32 %v2466, 0.0
        %v2470 = vadd.f32 %v2467, 0.0
        %v2471 = vstv %s392
        %v2472 = vmul.f32 %v2471, 0.0
        %v2473 = vmul.f32 %v2471, %v763
        %v2474 = vmul.f32 %v2471, %v764
        %v2475 = vadd.f32 %v2468, %v2472
        %v2476 = vadd.f32 %v2469, %v2473
        %v2477 = vadd.f32 %v2470, %v2474
        %v2478 = vstv %s350
        %v2479 = vmul.f32 %v2478, 0.0
        %v2480 = vmul.f32 %v2478, %v735
        %v2481 = vmul.f32 %v2478, %v744
        %2485 = vrot.lane.b32.xlu0 %v2479, 112
        %v2486 = vpop.permute.xlu0 %2485
        %2487 = vrot.lane.b32.xlu0 %v2480, 112
        %v2488 = vpop.permute.xlu0 %2487
        %2489 = vrot.lane.b32.xlu0 %v2481, 112
        %v2490 = vpop.permute.xlu0 %2489
        %v2491 = vsel %vm792, %v2486, %v2488
        %v2492 = vsel %vm792, %v2488, %v2490
        %v2496 = vadd.f32 %v2475, %v2491
        %v2497 = vadd.f32 %v2476, %v2492
        %v2498 = vadd.f32 %v2477, %v2490
        %v2499 = vstv %s399
        %v2500 = vmul.f32 %v2499, 0.0
        %v2501 = vmul.f32 %v2499, %v763
        %v2502 = vmul.f32 %v2499, %v764
        %2506 = vrot.lane.b32.xlu0 %v2500, 112
        %v2507 = vpop.permute.xlu0 %2506
        %2508 = vrot.lane.b32.xlu0 %v2501, 112
        %v2509 = vpop.permute.xlu0 %2508
        %2510 = vrot.lane.b32.xlu0 %v2502, 112
        %v2511 = vpop.permute.xlu0 %2510
        %v2512 = vsel %vm792, %v2507, %v2509
        %v2513 = vsel %vm792, %v2509, %v2511
        %v2517 = vadd.f32 %v2496, %v2512
        %v2518 = vadd.f32 %v2497, %v2513
        %v2519 = vadd.f32 %v2498, %v2511
        %v2520 = vstv %s357
        %v2521 = vmul.f32 %v2520, 0.0
        %v2522 = vmul.f32 %v2520, %v735
        %v2523 = vmul.f32 %v2520, %v744
        %2527 = vrot.lane.b32.xlu0 %v2521, 96
        %v2528 = vpop.permute.xlu0 %2527
        %2529 = vrot.lane.b32.xlu0 %v2522, 96
        %v2530 = vpop.permute.xlu0 %2529
        %2531 = vrot.lane.b32.xlu0 %v2523, 96
        %v2532 = vpop.permute.xlu0 %2531
        %v2533 = vsel %vm835, %v2528, %v2530
        %v2534 = vsel %vm835, %v2530, %v2532
        %v2538 = vadd.f32 %v2517, %v2533
        %v2539 = vadd.f32 %v2518, %v2534
        %v2540 = vadd.f32 %v2519, %v2532
        %v2541 = vstv %s406
        %v2542 = vmul.f32 %v2541, 0.0
        %v2543 = vmul.f32 %v2541, %v763
        %v2544 = vmul.f32 %v2541, %v764
        %2548 = vrot.lane.b32.xlu0 %v2542, 96
        %v2549 = vpop.permute.xlu0 %2548
        %2550 = vrot.lane.b32.xlu0 %v2543, 96
        %v2551 = vpop.permute.xlu0 %2550
        %2552 = vrot.lane.b32.xlu0 %v2544, 96
        %v2553 = vpop.permute.xlu0 %2552
        %v2554 = vsel %vm835, %v2549, %v2551
        %v2555 = vsel %vm835, %v2551, %v2553
        %v2559 = vadd.f32 %v2538, %v2554
        %v2560 = vadd.f32 %v2539, %v2555
        %v2561 = vadd.f32 %v2540, %v2553
        %v2562 = vstv %s364
        %v2563 = vmul.f32 %v2562, %v735
        %v2564 = vmul.f32 %v2562, %v744
        %v2565 = vmul.f32 %v2562, 0.0
        %2569 = vrot.lane.b32.xlu0 %v2563, 80
        %v2570 = vpop.permute.xlu0 %2569
        %2571 = vrot.lane.b32.xlu0 %v2564, 80
        %v2572 = vpop.permute.xlu0 %2571
        %2573 = vrot.lane.b32.xlu0 %v2565, 80
        %v2574 = vpop.permute.xlu0 %2573
        %v2575 = vsel %vm878, %v2570, %v2572
        %v2576 = vsel %vm878, %v2572, %v2574
        %v2580 = vadd.f32 %v2559, %v2570
        %v2581 = vadd.f32 %v2560, %v2575
        %v2582 = vadd.f32 %v2561, %v2576
        %v2583 = vstv %s413
        %v2584 = vmul.f32 %v2583, %v763
        %v2585 = vmul.f32 %v2583, %v764
        %v2586 = vmul.f32 %v2583, 0.0
        %2590 = vrot.lane.b32.xlu0 %v2584, 80
        %v2591 = vpop.permute.xlu0 %2590
        %2592 = vrot.lane.b32.xlu0 %v2585, 80
        %v2593 = vpop.permute.xlu0 %2592
        %2594 = vrot.lane.b32.xlu0 %v2586, 80
        %v2595 = vpop.permute.xlu0 %2594
        %v2596 = vsel %vm878, %v2591, %v2593
        %v2597 = vsel %vm878, %v2593, %v2595
        %v2601 = vadd.f32 %v2580, %v2591
        %v2602 = vadd.f32 %v2581, %v2596
        %v2603 = vadd.f32 %v2582, %v2597
        %v2604 = vstv %s371
        %v2605 = vmul.f32 %v2604, %v735
        %v2606 = vmul.f32 %v2604, %v744
        %v2607 = vmul.f32 %v2604, 0.0
        %2611 = vrot.lane.b32.xlu0 %v2605, 64
        %v2612 = vpop.permute.xlu0 %2611
        %2613 = vrot.lane.b32.xlu0 %v2606, 64
        %v2614 = vpop.permute.xlu0 %2613
        %2615 = vrot.lane.b32.xlu0 %v2607, 64
        %v2616 = vpop.permute.xlu0 %2615
        %v2617 = vsel %vm921, %v2612, %v2614
        %v2618 = vsel %vm921, %v2614, %v2616
        %v2622 = vadd.f32 %v2601, %v2612
        %v2623 = vadd.f32 %v2602, %v2617
        %v2624 = vadd.f32 %v2603, %v2618
        %v2625 = vstv %s420
        %v2626 = vmul.f32 %v2625, %v763
        %v2627 = vmul.f32 %v2625, %v764
        %v2628 = vmul.f32 %v2625, 0.0
        %2632 = vrot.lane.b32.xlu0 %v2626, 64
        %v2633 = vpop.permute.xlu0 %2632
        %2634 = vrot.lane.b32.xlu0 %v2627, 64
        %v2635 = vpop.permute.xlu0 %2634
        %2636 = vrot.lane.b32.xlu0 %v2628, 64
        %v2637 = vpop.permute.xlu0 %2636
        %v2638 = vsel %vm921, %v2633, %v2635
        %v2639 = vsel %vm921, %v2635, %v2637
        %v2643 = vadd.f32 %v2622, %v2633
        %v2644 = vadd.f32 %v2623, %v2638
        %v2645 = vadd.f32 %v2624, %v2639
        %v2646 = vstv %s378
        %v2647 = vmul.f32 %v2646, %v735
        %v2648 = vmul.f32 %v2646, %v744
        %v2649 = vmul.f32 %v2646, 0.0
        %2653 = vrot.lane.b32.xlu0 %v2647, 48
        %v2654 = vpop.permute.xlu0 %2653
        %2655 = vrot.lane.b32.xlu0 %v2648, 48
        %v2656 = vpop.permute.xlu0 %2655
        %2657 = vrot.lane.b32.xlu0 %v2649, 48
        %v2658 = vpop.permute.xlu0 %2657
        %v2659 = vsel %vm964, %v2654, %v2656
        %v2660 = vsel %vm964, %v2656, %v2658
        %v2664 = vadd.f32 %v2643, %v2654
        %v2665 = vadd.f32 %v2644, %v2659
        %v2666 = vadd.f32 %v2645, %v2660
        %v2667 = vstv %s427
        %v2668 = vmul.f32 %v2667, %v763
        %v2669 = vmul.f32 %v2667, %v764
        %v2670 = vmul.f32 %v2667, 0.0
        %2674 = vrot.lane.b32.xlu0 %v2668, 48
        %v2675 = vpop.permute.xlu0 %2674
        %2676 = vrot.lane.b32.xlu0 %v2669, 48
        %v2677 = vpop.permute.xlu0 %2676
        %2678 = vrot.lane.b32.xlu0 %v2670, 48
        %v2679 = vpop.permute.xlu0 %2678
        %v2680 = vsel %vm964, %v2675, %v2677
        %v2681 = vsel %vm964, %v2677, %v2679
        %v2685 = vadd.f32 %v2664, %v2675
        %v2686 = vadd.f32 %v2665, %v2680
        %v2687 = vadd.f32 %v2666, %v2681
        %v2688 = vstv %s385
        %v2689 = vmul.f32 %v2688, %v735
        %v2690 = vmul.f32 %v2688, %v744
        %v2691 = vmul.f32 %v2688, 0.0
        %2695 = vrot.lane.b32.xlu0 %v2689, 32
        %v2696 = vpop.permute.xlu0 %2695
        %2697 = vrot.lane.b32.xlu0 %v2690, 32
        %v2698 = vpop.permute.xlu0 %2697
        %2699 = vrot.lane.b32.xlu0 %v2691, 32
        %v2700 = vpop.permute.xlu0 %2699
        %v2701 = vsel %vm1007, %v2696, %v2698
        %v2702 = vsel %vm1007, %v2698, %v2700
        %v2706 = vadd.f32 %v2685, %v2696
        %v2707 = vadd.f32 %v2686, %v2701
        %v2708 = vadd.f32 %v2687, %v2702
        %v2709 = vstv %s434
        %v2710 = vmul.f32 %v2709, %v763
        %v2711 = vmul.f32 %v2709, %v764
        %v2712 = vmul.f32 %v2709, 0.0
        %2716 = vrot.lane.b32.xlu0 %v2710, 32
        %v2717 = vpop.permute.xlu0 %2716
        %2718 = vrot.lane.b32.xlu0 %v2711, 32
        %v2719 = vpop.permute.xlu0 %2718
        %2720 = vrot.lane.b32.xlu0 %v2712, 32
        %v2721 = vpop.permute.xlu0 %2720
        %v2722 = vsel %vm1007, %v2717, %v2719
        %v2723 = vsel %vm1007, %v2719, %v2721
        %v2727 = vadd.f32 %v2706, %v2717
        %v2728 = vadd.f32 %v2707, %v2722
        %v2729 = vadd.f32 %v2708, %v2723
        %2733 = vrot.lane.b32.xlu0 %v2727, 45
        %v2734 = vpop.permute.xlu0 %2733
        %2735 = vrot.lane.b32.xlu0 %v2728, 45
        %v2736 = vpop.permute.xlu0 %2735
        %2737 = vrot.lane.b32.xlu0 %v2729, 45
        %v2738 = vpop.permute.xlu0 %2737
        %vm2739 = vcmask 367616
        %v2740 = vsel %vm2739, %v2734, %v2736
        %v2741 = vsel %vm2739, %v2736, %v2738
        %v2744 = vsel %vm482, %v2740, 0.0
        %v2745 = vsel %vm483, %v2741, 0.0
        %v2746 = vadd.f32 %v2462, %v2744
        %v2747 = vadd.f32 %v2463, %v2745
        %v2748 = vstv %s435
        %v2749 = vmul.f32 %v2746, %v2748
        %v2750 = vmul.f32 %v2747, %v2748
        %v2751 = vstv %s436
        %v2752 = vadd.f32 %v2749, %v2751
        %v2753 = vadd.f32 %v2750, %v2751
        %v2754 = vxor.u32 %v2752, 2147483648
        %v2755 = vxor.u32 %v2753, 2147483648
        %v2756 = vmul.f32 %v2754, 1.442695
        %v2757 = vpow.pop %v2756
        %v2758 = vmul.f32 %v2755, 1.442695
        %v2759 = vpow.pop %v2758
        %v2760 = vadd.f32 %v2757, 1.0
        %v2761 = vadd.f32 %v2759, 1.0
        %v2762 = vrcp.pop %v2760
        %v2763 = vmul.f32 1.0, %v2762
        %v2764 = vrcp.pop %v2761
        %v2765 = vmul.f32 1.0, %v2764
        %v2766 = vlaneseq
        %v2767 = vshrl.u32 %v2766, 7
        %v2768 = vsub.s32 0, %v2767
        %v2769 = vrot.slane %v2763, %v2768
        %v2770 = vlaneseq
        %v2771 = vshrl.u32 %v2770, 7
        %v2772 = vsub.s32 0, %v2771
        %v2773 = vrot.slane %v2765, %v2772
        %v2774 = vmul.f32 %v719, %v2769
        %v2775 = vmul.f32 %v720, %v2773
        %v2776 = vmul.f32 %v721, %v2769
        %v2777 = vmul.f32 %v722, %v2773
        %v2778 = vmul.f32 %v723, %v2769
        %v2779 = vmul.f32 %v724, %v2773
        %v2780 = vmul.f32 %v725, %v2769
        %v2781 = vmul.f32 %v726, %v2773
        %2782 = vst [vmem:[%s323] sm:$0xff] %v2774
        %2783 = vst [vmem:[%s323 + $0x8] sm:$0xff] %v2775
        %2784 = vst [vmem:[%s323 + $0x10] sm:$0xff] %v2776
        %2785 = vst [vmem:[%s323 + $0x18] sm:$0xff] %v2777
        %2786 = vst [vmem:[%s323 + $0x20] sm:$0xff] %v2778
        %2787 = vst [vmem:[%s323 + $0x28] sm:$0xff] %v2779
        %2788 = vst [vmem:[%s323 + $0x30] sm:$0xff] %v2780
        %2789 = vst [vmem:[%s323 + $0x38] sm:$0xff] %v2781
        %s2790 = sand.u32 %s186, 1
        %s2791 = scalar_lea.sflag [#allocation4], %s2790
        %s2792 = sand.u32 %s186, 1
        %s2793 = smul.addr %s2792, 64
        %s2794 = scalar_lea.vmem [#allocation9], %s2793
        // Predicated region
        $region61: #{tpu_custom_call.1} parent=47 // pred_check
          %p2795 = pneg %p196
        $region62: #{tpu_custom_call.1} parent=47 // pred_check_branch
          %2797 = sbr.rel (%p2795) target = $region64
        $region63: #{tpu_custom_call.1} parent=47 // pred_region
          %s2799 = ssub.s32 1024, 1024
          %2800 = vsyncadd %s2791, %s2799
          %s2801 = smul.addr %s26, 8
          %s2802 = smul.addr %s2801, 128
          %s2803 = scalar_lea.hbm %s7, %s2802
          %s2804 = sshll.u32 %s2794, 4
          %s2805 = int_to_ptr.vmem [resolvable:$true] %s2804
          %2810 = dma.vmem_to_hbm [thread:$0]  %s2805, 1024, %s2803, %s2791, 256, 256, 16
        $region64: #{tpu_custom_call.1} parent=47 // pred_fallthru
          _
      $region48: #{tpu_custom_call.1} parent=5 // pred_fallthru
        _
      %p2811 = scmp.le.s32.totalorder 2, %s21
      // Predicated region
      $region65: #{tpu_custom_call.1} parent=5 // pred_check
        %p2812 = pneg %p2811
      $region66: #{tpu_custom_call.1} parent=5 // pred_check_branch
        %2814 = sbr.rel (%p2812) target = $region68
      $region67: #{tpu_custom_call.1} parent=5 // pred_region
        %s2815 = ssub.s32 %s21, 2
        // Predicated region
        $region69: #{tpu_custom_call.1} parent=67 // pred_check
          %p2816 = pneg %p202
        $region70: #{tpu_custom_call.1} parent=67 // pred_check_branch
          %2818 = sbr.rel (%p2816) target = $region72
        $region71: #{tpu_custom_call.1} parent=67 // pred_region
          %s2819 = sand.u32 %s187, 1
          %s2820 = scalar_lea.sflag [#allocation4], %s2819
          %s2821 = sand.u32 %s187, 1
          %s2822 = smul.addr %s2821, 64
          %s2823 = scalar_lea.vmem [#allocation9], %s2822
          %2824 = dma.done %s2820, 1024
        $region72: #{tpu_custom_call.1} parent=67 // pred_fallthru
          _
      $region68: #{tpu_custom_call.1} parent=5 // pred_fallthru
        _
    $region6: #{tpu_custom_call.1} parent=1 // loop_footer
      %s25 = sadd.s32 1, %s21
    $region7: #{tpu_custom_call.1} parent=1 // loop_footer_branch
      %20 = sbr.rel target = $region3
    $region8: #{tpu_custom_call.1} parent=1 // loop_exit
      _
    %2825 = vsyncpa [#allocation3], 1
    %s2826 = scalar_lea.sflag [#allocation3], 1
    %2827 = vsyncpa %s2826, 1
    %2828 = vsyncpa [#allocation4], 1
    %s2829 = scalar_lea.sflag [#allocation4], 1
    %2830 = vsyncpa %s2829, 1
    %2831 = vsyncpa [#allocation5], 1
    %s2832 = scalar_lea.sflag [#allocation5], 1
    %2833 = vsyncpa %s2832, 1
    %2834 = vsyncpa [#allocation8], 1

</llo_original>
